<compile_context>
chip_gen: v6e
topology: v6e:2x2x1
jax: 0.10.0
libtpu: 0.0.40
codegen_flags: <defaults>
</compile_context>

<pallas_src>
import jax
import jax.numpy as jnp
from jax import lax
from jax.experimental import pallas as pl
from jax.experimental.pallas import tpu as pltpu

LANES = 128
SUBLANES_F32 = 8
MXU_DTYPE = jnp.bfloat16   # MXU operand dtype; accumulation / gate math / carries stay f32.


def _round_up(n, m=LANES):
    return ((n + m - 1) // m) * m


def _sigmoid(x):
    # One EUP op (tanh) instead of exp + divide.
    return 0.5 * (jnp.tanh(0.5 * x) + 1.0)


# ---------------------------------------------------------------------------
# Fused Pallas kernel: all LSTM layers + FC, time loop inside.
# ---------------------------------------------------------------------------
def _make_fused_kernel(num_layers, T, Bp, Hp, unroll):
    n_in = 1 + 3 * num_layers + 2   # x, (Wx, Wh, b)*L, fc_w, fc_b

    def kernel(*args):
        x_ref = args[0]                                  # (T*Bp, Dp)   bf16
        wx_refs = args[1:1 + 3 * num_layers:3]           # (Dp_l, 4Hp)  bf16
        wh_refs = args[2:2 + 3 * num_layers:3]           # (Hp, 4Hp)    bf16
        b_refs = args[3:3 + 3 * num_layers:3]            # (1, 4Hp)     f32
        fcw_ref = args[n_in - 2]                         # (Hp, Op)     bf16
        fcb_ref = args[n_in - 1]                         # (1, Op)      f32
        out_ref = args[n_in]                             # (Bp, Op)     f32
        scratch = args[n_in + 1:]
        if num_layers > 1:
            hs_sc = scratch[0]                           # (T*Bp, Hp)  f32 inter-layer hidden seq
        gx_sc = scratch[-3]                              # (T*Bp, 4Hp) f32 hoisted x-projection
        h_sc, c_sc = scratch[-2], scratch[-1]            # (Bp, Hp)    f32 carries

        for layer in range(num_layers):
            # ---- Prologue: hoisted input projection for ALL timesteps in one big MXU matmul
            #      (M = T*Bp), bias folded in (one broadcast per layer, not per step).
            if layer == 0:
                xs = x_ref[...]
            else:
                xs = hs_sc[...].astype(MXU_DTYPE)
            gx_sc[...] = (
                jnp.dot(xs, wx_refs[layer][...], preferred_element_type=jnp.float32)
                + b_refs[layer][...])

            wh = wh_refs[layer][...]                     # resident recurrent weight (Hp, 4Hp)
            h_sc[...] = jnp.zeros_like(h_sc)
            c_sc[...] = jnp.zeros_like(c_sc)
            write_seq = layer < num_layers - 1           # last layer: only final h is consumed

            def step(t, carry, wh=wh, write_seq=write_seq):
                row = pl.multiple_of(t * Bp, Bp)         # sublane-tile-aligned timestep slab
                h = h_sc[...]                            # (Bp, Hp) f32
                c = c_sc[...]
                # Per-step serial work: one small recurrent matmul (K = Hp) + gate math.
                gates = gx_sc[pl.ds(row, Bp), :] + jnp.dot(
                    h.astype(wh.dtype), wh, preferred_element_type=jnp.float32)
                # Lane-aligned gate views (Hp multiple of 128); PyTorch gate order [i, f, g, o].
                i_g = _sigmoid(gates[:, 0 * Hp:1 * Hp])
                f_g = _sigmoid(gates[:, 1 * Hp:2 * Hp])
                g_g = jnp.tanh(gates[:, 2 * Hp:3 * Hp])
                o_g = _sigmoid(gates[:, 3 * Hp:4 * Hp])
                c_new = f_g * c + i_g * g_g
                h_new = o_g * jnp.tanh(c_new)
                h_sc[...] = h_new                        # full-tile (8,128k) f32 stores
                c_sc[...] = c_new
                if write_seq:
                    hs_sc[pl.ds(row, Bp), :] = h_new
                return carry

            lax.fori_loop(0, T, step, 0, unroll=unroll)

        # Fused FC on the final hidden state; (Bp, Op) is a full f32 tile -> unmasked store.
        out_ref[...] = (
            jnp.dot(h_sc[...].astype(fcw_ref.dtype), fcw_ref[...],
                    preferred_element_type=jnp.float32) + fcb_ref[...]
        ).astype(out_ref.dtype)

    return kernel


# ---------------------------------------------------------------------------
# Wrapper: pack / pad params, build specs, call the fused kernel.
# ---------------------------------------------------------------------------
def _prep_params(params):
    """Split into W_x / W_hh per layer (transposed) and zero-pad to 128-lane multiples."""
    layers = params["layers"]
    H = layers[0][1].shape[1]                 # whh: (4H, H)
    Hp = _round_up(H)
    packed = []
    for (wih, whh, bih, bhh) in layers:
        D = wih.shape[1]
        Dp = _round_up(D)
        Wx = jnp.zeros((Dp, 4 * Hp), jnp.float32)
        Wh = jnp.zeros((Hp, 4 * Hp), jnp.float32)
        b = jnp.zeros((1, 4 * Hp), jnp.float32)
        for g in range(4):
            Wx = Wx.at[:D, g * Hp:g * Hp + H].set(wih[g * H:(g + 1) * H, :].T)
            Wh = Wh.at[:H, g * Hp:g * Hp + H].set(whh[g * H:(g + 1) * H, :].T)
            b = b.at[0, g * Hp:g * Hp + H].set(bih[g * H:(g + 1) * H] + bhh[g * H:(g + 1) * H])
        packed.append((Wx.astype(MXU_DTYPE), Wh.astype(MXU_DTYPE), b))
    O = params["fc_w"].shape[0]
    Op = _round_up(O)
    fcw = jnp.zeros((Hp, Op), jnp.float32).at[:H, :O].set(params["fc_w"].T).astype(MXU_DTYPE)
    fcb = jnp.zeros((1, Op), jnp.float32).at[0, :O].set(params["fc_b"])
    return packed, fcw, fcb, Hp, Op


@jax.jit
def lstm_forward_pallas(x, params):
    """Reproduces Lstm.forward (inference).  x: (B, T, D) or (T, D)."""
    unbatched = x.ndim == 2
    if unbatched:
        x = x[None, ...]                       # unbatched LSTM == batch of 1
    B, T, D = x.shape
    packed, fcw, fcb, Hp, Op = _prep_params(params)
    num_layers = len(packed)
    O = params["fc_b"].shape[0]
    Dp = packed[0][0].shape[0]
    Bp = _round_up(B, SUBLANES_F32)           # sublane-pad batch -> unmasked per-step stores

    # Time-major, zero-padded to lane/sublane width, flattened (T*Bp, Dp), bf16 for the MXU.
    x_tbd = jnp.transpose(x, (1, 0, 2)).astype(jnp.float32)
    x_pad = jnp.zeros((T, Bp, Dp), jnp.float32).at[:, :B, :D].set(x_tbd)
    x_flat = x_pad.reshape(T * Bp, Dp).astype(MXU_DTYPE)

    unroll = True if T <= 32 else 8
    kernel = _make_fused_kernel(num_layers, T, Bp, Hp, unroll)

    operands = [x_flat]
    in_specs = [pl.BlockSpec((T * Bp, Dp), lambda i: (0, 0))]
    for (Wx, Wh, b) in packed:
        operands += [Wx, Wh, b]
        in_specs += [pl.BlockSpec(Wx.shape, lambda i: (0, 0)),
                     pl.BlockSpec(Wh.shape, lambda i: (0, 0)),
                     pl.BlockSpec(b.shape, lambda i: (0, 0))]
    operands += [fcw, fcb]
    in_specs += [pl.BlockSpec(fcw.shape, lambda i: (0, 0)),
                 pl.BlockSpec(fcb.shape, lambda i: (0, 0))]

    scratch_shapes = []
    if num_layers > 1:
        scratch_shapes.append(pltpu.VMEM((T * Bp, Hp), jnp.float32))     # inter-layer hidden seq
    scratch_shapes += [pltpu.VMEM((T * Bp, 4 * Hp), jnp.float32),        # hoisted x-projection
                       pltpu.VMEM((Bp, Hp), jnp.float32),                # h carry
                       pltpu.VMEM((Bp, Hp), jnp.float32)]                # c carry

    out = pl.pallas_call(
        kernel,
        out_shape=jax.ShapeDtypeStruct((Bp, Op), jnp.float32),
        grid_spec=pltpu.PrefetchScalarGridSpec(
            num_scalar_prefetch=0,
            grid=(1,),
            in_specs=in_specs,
            out_specs=pl.BlockSpec((Bp, Op), lambda i: (0, 0)),
            scratch_shapes=scratch_shapes,
        ),
        compiler_params=pltpu.CompilerParams(
            dimension_semantics=("arbitrary",),
            # Explicit budget: above the 16/32 MiB scoped defaults (v5e/v6e), within v7x's
            # 64 MiB physical VMEM.  Toy sizes use well under 1 MiB.
            vmem_limit_bytes=48 * 1024 * 1024,
        ),
    )(*operands)

    out = out[:B, :O]
    # Dropout(p=0.2) in eval mode: identity.
    if unbatched:
        out = out[0]
    return out


# ---------------------------------------------------------------------------
# Params init (PyTorch-like U(-1/sqrt(H), 1/sqrt(H)))
# ---------------------------------------------------------------------------
def init_lstm_params(key, input_size, hidden_size, num_layers, output_size):
    k = 1.0 / jnp.sqrt(jnp.float32(hidden_size))
    params = {"layers": []}
    for layer in range(num_layers):
        d_in = input_size if layer == 0 else hidden_size
        key, k1, k2, k3, k4 = jax.random.split(key, 5)
        wih = jax.random.uniform(k1, (4 * hidden_size, d_in), jnp.float32, -k, k)
        whh = jax.random.uniform(k2, (4 * hidden_size, hidden_size), jnp.float32, -k, k)
        bih = jax.random.uniform(k3, (4 * hidden_size,), jnp.float32, -k, k)
        bhh = jax.random.uniform(k4, (4 * hidden_size,), jnp.float32, -k, k)
        params["layers"].append((wih, whh, bih, bhh))
    key, k5, k6 = jax.random.split(key, 3)
    params["fc_w"] = jax.random.uniform(k5, (output_size, hidden_size), jnp.float32, -k, k)
    params["fc_b"] = jax.random.uniform(k6, (output_size,), jnp.float32, -k, k)
    return params


# ---------------------------------------------------------------------------
# Pure-JAX f32 reference (for correctness check)
# ---------------------------------------------------------------------------
def lstm_forward_ref(x, params):
    unbatched = x.ndim == 2
    if unbatched:
        x = x[None, ...]
    x_tbd = jnp.transpose(x, (1, 0, 2)).astype(jnp.float32)
    for (wih, whh, bih, bhh) in params["layers"]:
        B = x_tbd.shape[1]
        H = whh.shape[1]
        b = bih + bhh

        def step(carry, x_t):
            h, c = carry
            gates = x_t @ wih.T + h @ whh.T + b
            i_g = jax.nn.sigmoid(gates[:, 0 * H:1 * H])
            f_g = jax.nn.sigmoid(gates[:, 1 * H:2 * H])
            g_g = jnp.tanh(gates[:, 2 * H:3 * H])
            o_g = jax.nn.sigmoid(gates[:, 3 * H:4 * H])
            c_new = f_g * c + i_g * g_g
            h_new = o_g * jnp.tanh(c_new)
            return (h_new, c_new), h_new

        init = (jnp.zeros((B, H), jnp.float32), jnp.zeros((B, H), jnp.float32))
        _, hs = lax.scan(step, init, x_tbd)
        x_tbd = hs
    h_last = x_tbd[-1]
    out = h_last @ params["fc_w"].T + params["fc_b"]
    if unbatched:
        out = out[0]
    return out


# ---------------------------------------------------------------------------
if __name__ == "__main__":
    input_size, hidden_size, num_layers, output_size = 10, 32, 2, 4
    B, T = 2, 8

    key = jax.random.PRNGKey(0)
    key, kx, kp = jax.random.split(key, 3)
    x = jax.random.normal(kx, (B, T, input_size), jnp.float32)
    params = init_lstm_params(kp, input_size, hidden_size, num_layers, output_size)

    out = lstm_forward_pallas(x, params)
    out = jax.block_until_ready(out)

    ref = lstm_forward_ref(x, params)
    assert out.shape == (B, output_size), out.shape
    # bf16 MXU operands (f32 accumulation / carries) vs. pure-f32 reference -> ~1e-3-level drift.
    assert jnp.allclose(out, ref, rtol=1e-2, atol=1e-2), (out, ref)

    print("KERNEL_OK")
</pallas_src>

<mosaic_0001>
module attributes {stable_mosaic.version = 11 : i64} {
  func.func @kernel(%arg0: i32, %arg1: memref<64x128xbf16, #tpu.memory_space<vmem>>, %arg2: memref<128x512xbf16, #tpu.memory_space<vmem>>, %arg3: memref<128x512xbf16, #tpu.memory_space<vmem>>, %arg4: memref<1x512xf32, #tpu.memory_space<vmem>>, %arg5: memref<128x512xbf16, #tpu.memory_space<vmem>>, %arg6: memref<128x512xbf16, #tpu.memory_space<vmem>>, %arg7: memref<1x512xf32, #tpu.memory_space<vmem>>, %arg8: memref<128x128xbf16, #tpu.memory_space<vmem>>, %arg9: memref<1x128xf32, #tpu.memory_space<vmem>>, %arg10: memref<8x128xf32, #tpu.memory_space<vmem>>, %arg11: memref<64x128xf32, #tpu.memory_space<vmem>>, %arg12: memref<64x512xf32, #tpu.memory_space<vmem>>, %arg13: memref<8x128xf32, #tpu.memory_space<vmem>>, %arg14: memref<8x128xf32, #tpu.memory_space<vmem>>) attributes {dimension_semantics = [#tpu.dimension_semantics<arbitrary>], iteration_bounds = array<i64: 1>, scalar_prefetch = 0 : i64, scratch_operands = 4 : i64, tpu.core_type = #tpu.core_type<tc>, window_params = [{pipeline_mode = #tpu.pipeline_mode<synchronous>, transform_indices = @transform_0, window_bounds = array<i64: 64, 128>}, {pipeline_mode = #tpu.pipeline_mode<synchronous>, transform_indices = @transform_1, window_bounds = array<i64: 128, 512>}, {pipeline_mode = #tpu.pipeline_mode<synchronous>, transform_indices = @transform_2, window_bounds = array<i64: 128, 512>}, {pipeline_mode = #tpu.pipeline_mode<synchronous>, transform_indices = @transform_3, window_bounds = array<i64: 1, 512>}, {pipeline_mode = #tpu.pipeline_mode<synchronous>, transform_indices = @transform_4, window_bounds = array<i64: 128, 512>}, {pipeline_mode = #tpu.pipeline_mode<synchronous>, transform_indices = @transform_5, window_bounds = array<i64: 128, 512>}, {pipeline_mode = #tpu.pipeline_mode<synchronous>, transform_indices = @transform_6, window_bounds = array<i64: 1, 512>}, {pipeline_mode = #tpu.pipeline_mode<synchronous>, transform_indices = @transform_7, window_bounds = array<i64: 128, 128>}, {pipeline_mode = #tpu.pipeline_mode<synchronous>, transform_indices = @transform_8, window_bounds = array<i64: 1, 128>}, {pipeline_mode = #tpu.pipeline_mode<synchronous>, transform_indices = @transform_9, window_bounds = array<i64: 8, 128>}]} {
    %c0 = arith.constant 0 : index
    %c0_0 = arith.constant 0 : index
    %0 = vector.load %arg1[%c0, %c0_0] : memref<64x128xbf16, #tpu.memory_space<vmem>>, vector<64x128xbf16>
    %c0_1 = arith.constant 0 : index
    %c0_2 = arith.constant 0 : index
    %1 = vector.load %arg2[%c0_1, %c0_2] : memref<128x512xbf16, #tpu.memory_space<vmem>>, vector<128x512xbf16>
    %cst = arith.constant dense<0.000000e+00> : vector<64x512xf32>
    %2 = tpu.matmul %0, %1, %cst {dimension_numbers = #tpu.dot_dimension_numbers<[1], [0], [0], [1], [0, 0, 1, 1], [], []>} : vector<64x128xbf16>, vector<128x512xbf16>, vector<64x512xf32> -> vector<64x512xf32>
    %c0_3 = arith.constant 0 : index
    %c0_4 = arith.constant 0 : index
    %3 = vector.load %arg4[%c0_3, %c0_4] : memref<1x512xf32, #tpu.memory_space<vmem>>, vector<1x512xf32>
    %4 = vector.broadcast %3 : vector<1x512xf32> to vector<64x512xf32>
    %5 = arith.addf %2, %4 : vector<64x512xf32>
    %c0_5 = arith.constant 0 : index
    %c0_6 = arith.constant 0 : index
    %6 = vector.load %arg12[%c0_5, %c0_6] : memref<64x512xf32, #tpu.memory_space<vmem>>, vector<64x512xf32>
    tpu.vector_store %arg12[%c0_5, %c0_6], %5 {strides = array<i32>} : memref<64x512xf32, #tpu.memory_space<vmem>>, vector<64x512xf32>,
    %c0_7 = arith.constant 0 : index
    %c0_8 = arith.constant 0 : index
    %7 = vector.load %arg3[%c0_7, %c0_8] : memref<128x512xbf16, #tpu.memory_space<vmem>>, vector<128x512xbf16>
    %cst_9 = arith.constant 0.000000e+00 : f32
    %8 = vector.broadcast %cst_9 : f32 to vector<8x128xf32>
    %c0_10 = arith.constant 0 : index
    %c0_11 = arith.constant 0 : index
    %9 = vector.load %arg13[%c0_10, %c0_11] : memref<8x128xf32, #tpu.memory_space<vmem>>, vector<8x128xf32>
    tpu.vector_store %arg13[%c0_10, %c0_11], %8 {strides = array<i32>} : memref<8x128xf32, #tpu.memory_space<vmem>>, vector<8x128xf32>,
    %cst_12 = arith.constant 0.000000e+00 : f32
    %10 = vector.broadcast %cst_12 : f32 to vector<8x128xf32>
    %c0_13 = arith.constant 0 : index
    %c0_14 = arith.constant 0 : index
    %11 = vector.load %arg14[%c0_13, %c0_14] : memref<8x128xf32, #tpu.memory_space<vmem>>, vector<8x128xf32>
    tpu.vector_store %arg14[%c0_13, %c0_14], %10 {strides = array<i32>} : memref<8x128xf32, #tpu.memory_space<vmem>>, vector<8x128xf32>,
    %c0_i32 = arith.constant 0 : i32
    %c8_i32 = arith.constant 8 : i32
    %12 = arith.muli %c0_i32, %c8_i32 : i32
    %13 = tpu.assume_multiple %12, 8 : i32
    %c0_15 = arith.constant 0 : index
    %c0_16 = arith.constant 0 : index
    %14 = vector.load %arg13[%c0_15, %c0_16] : memref<8x128xf32, #tpu.memory_space<vmem>>, vector<8x128xf32>
    %c0_17 = arith.constant 0 : index
    %c0_18 = arith.constant 0 : index
    %15 = vector.load %arg14[%c0_17, %c0_18] : memref<8x128xf32, #tpu.memory_space<vmem>>, vector<8x128xf32>
    %16 = arith.index_cast %13 : i32 to index
    %c0_19 = arith.constant 0 : index
    %17 = vector.load %arg12[%16, %c0_19] : memref<64x512xf32, #tpu.memory_space<vmem>>, vector<8x512xf32>
    %18 = arith.truncf %14 : vector<8x128xf32> to vector<8x128xbf16>
    %cst_20 = arith.constant dense<0.000000e+00> : vector<8x512xf32>
    %19 = tpu.matmul %18, %7, %cst_20 {dimension_numbers = #tpu.dot_dimension_numbers<[1], [0], [0], [1], [0, 0, 1, 1], [], []>} : vector<8x128xbf16>, vector<128x512xbf16>, vector<8x512xf32> -> vector<8x512xf32>
    %20 = arith.addf %17, %19 : vector<8x512xf32>
    %21 = vector.extract_strided_slice %20 {offsets = [0, 0], sizes = [8, 128], strides = [1, 1]} : vector<8x512xf32> to vector<8x128xf32>
    %cst_21 = arith.constant 5.000000e-01 : f32
    %22 = vector.broadcast %cst_21 : f32 to vector<8x128xf32>
    %23 = arith.mulf %22, %21 : vector<8x128xf32>
    %24 = math.tanh %23 : vector<8x128xf32>
    %cst_22 = arith.constant 1.000000e+00 : f32
    %25 = vector.broadcast %cst_22 : f32 to vector<8x128xf32>
    %26 = arith.addf %24, %25 : vector<8x128xf32>
    %cst_23 = arith.constant 5.000000e-01 : f32
    %27 = vector.broadcast %cst_23 : f32 to vector<8x128xf32>
    %28 = arith.mulf %27, %26 : vector<8x128xf32>
    %29 = vector.extract_strided_slice %20 {offsets = [0, 128], sizes = [8, 128], strides = [1, 1]} : vector<8x512xf32> to vector<8x128xf32>
    %cst_24 = arith.constant 5.000000e-01 : f32
    %30 = vector.broadcast %cst_24 : f32 to vector<8x128xf32>
    %31 = arith.mulf %30, %29 : vector<8x128xf32>
    %32 = math.tanh %31 : vector<8x128xf32>
    %cst_25 = arith.constant 1.000000e+00 : f32
    %33 = vector.broadcast %cst_25 : f32 to vector<8x128xf32>
    %34 = arith.addf %32, %33 : vector<8x128xf32>
    %cst_26 = arith.constant 5.000000e-01 : f32
    %35 = vector.broadcast %cst_26 : f32 to vector<8x128xf32>
    %36 = arith.mulf %35, %34 : vector<8x128xf32>
    %37 = vector.extract_strided_slice %20 {offsets = [0, 256], sizes = [8, 128], strides = [1, 1]} : vector<8x512xf32> to vector<8x128xf32>
    %38 = math.tanh %37 : vector<8x128xf32>
    %39 = vector.extract_strided_slice %20 {offsets = [0, 384], sizes = [8, 128], strides = [1, 1]} : vector<8x512xf32> to vector<8x128xf32>
    %cst_27 = arith.constant 5.000000e-01 : f32
    %40 = vector.broadcast %cst_27 : f32 to vector<8x128xf32>
    %41 = arith.mulf %40, %39 : vector<8x128xf32>
    %42 = math.tanh %41 : vector<8x128xf32>
    %cst_28 = arith.constant 1.000000e+00 : f32
    %43 = vector.broadcast %cst_28 : f32 to vector<8x128xf32>
    %44 = arith.addf %42, %43 : vector<8x128xf32>
    %cst_29 = arith.constant 5.000000e-01 : f32
    %45 = vector.broadcast %cst_29 : f32 to vector<8x128xf32>
    %46 = arith.mulf %45, %44 : vector<8x128xf32>
    %47 = arith.mulf %36, %15 : vector<8x128xf32>
    %48 = arith.mulf %28, %38 : vector<8x128xf32>
    %49 = arith.addf %47, %48 : vector<8x128xf32>
    %50 = math.tanh %49 : vector<8x128xf32>
    %51 = arith.mulf %46, %50 : vector<8x128xf32>
    %c0_30 = arith.constant 0 : index
    %c0_31 = arith.constant 0 : index
    %52 = vector.load %arg13[%c0_30, %c0_31] : memref<8x128xf32, #tpu.memory_space<vmem>>, vector<8x128xf32>
    tpu.vector_store %arg13[%c0_30, %c0_31], %51 {strides = array<i32>} : memref<8x128xf32, #tpu.memory_space<vmem>>, vector<8x128xf32>,
    %c0_32 = arith.constant 0 : index
    %c0_33 = arith.constant 0 : index
    %53 = vector.load %arg14[%c0_32, %c0_33] : memref<8x128xf32, #tpu.memory_space<vmem>>, vector<8x128xf32>
    tpu.vector_store %arg14[%c0_32, %c0_33], %49 {strides = array<i32>} : memref<8x128xf32, #tpu.memory_space<vmem>>, vector<8x128xf32>,
    %54 = arith.index_cast %13 : i32 to index
    %c0_34 = arith.constant 0 : index
    %55 = vector.load %arg11[%54, %c0_34] : memref<64x128xf32, #tpu.memory_space<vmem>>, vector<8x128xf32>
    tpu.vector_store %arg11[%54, %c0_34], %51 {strides = array<i32>} : memref<64x128xf32, #tpu.memory_space<vmem>>, vector<8x128xf32>,
    %c1_i32 = arith.constant 1 : i32
    %c8_i32_35 = arith.constant 8 : i32
    %56 = arith.muli %c1_i32, %c8_i32_35 : i32
    %57 = tpu.assume_multiple %56, 8 : i32
    %c0_36 = arith.constant 0 : index
    %c0_37 = arith.constant 0 : index
    %58 = vector.load %arg13[%c0_36, %c0_37] : memref<8x128xf32, #tpu.memory_space<vmem>>, vector<8x128xf32>
    %c0_38 = arith.constant 0 : index
    %c0_39 = arith.constant 0 : index
    %59 = vector.load %arg14[%c0_38, %c0_39] : memref<8x128xf32, #tpu.memory_space<vmem>>, vector<8x128xf32>
    %60 = arith.index_cast %57 : i32 to index
    %c0_40 = arith.constant 0 : index
    %61 = vector.load %arg12[%60, %c0_40] : memref<64x512xf32, #tpu.memory_space<vmem>>, vector<8x512xf32>
    %62 = arith.truncf %58 : vector<8x128xf32> to vector<8x128xbf16>
    %cst_41 = arith.constant dense<0.000000e+00> : vector<8x512xf32>
    %63 = tpu.matmul %62, %7, %cst_41 {dimension_numbers = #tpu.dot_dimension_numbers<[1], [0], [0], [1], [0, 0, 1, 1], [], []>} : vector<8x128xbf16>, vector<128x512xbf16>, vector<8x512xf32> -> vector<8x512xf32>
    %64 = arith.addf %61, %63 : vector<8x512xf32>
    %65 = vector.extract_strided_slice %64 {offsets = [0, 0], sizes = [8, 128], strides = [1, 1]} : vector<8x512xf32> to vector<8x128xf32>
    %cst_42 = arith.constant 5.000000e-01 : f32
    %66 = vector.broadcast %cst_42 : f32 to vector<8x128xf32>
    %67 = arith.mulf %66, %65 : vector<8x128xf32>
    %68 = math.tanh %67 : vector<8x128xf32>
    %cst_43 = arith.constant 1.000000e+00 : f32
    %69 = vector.broadcast %cst_43 : f32 to vector<8x128xf32>
    %70 = arith.addf %68, %69 : vector<8x128xf32>
    %cst_44 = arith.constant 5.000000e-01 : f32
    %71 = vector.broadcast %cst_44 : f32 to vector<8x128xf32>
    %72 = arith.mulf %71, %70 : vector<8x128xf32>
    %73 = vector.extract_strided_slice %64 {offsets = [0, 128], sizes = [8, 128], strides = [1, 1]} : vector<8x512xf32> to vector<8x128xf32>
    %cst_45 = arith.constant 5.000000e-01 : f32
    %74 = vector.broadcast %cst_45 : f32 to vector<8x128xf32>
    %75 = arith.mulf %74, %73 : vector<8x128xf32>
    %76 = math.tanh %75 : vector<8x128xf32>
    %cst_46 = arith.constant 1.000000e+00 : f32
    %77 = vector.broadcast %cst_46 : f32 to vector<8x128xf32>
    %78 = arith.addf %76, %77 : vector<8x128xf32>
    %cst_47 = arith.constant 5.000000e-01 : f32
    %79 = vector.broadcast %cst_47 : f32 to vector<8x128xf32>
    %80 = arith.mulf %79, %78 : vector<8x128xf32>
    %81 = vector.extract_strided_slice %64 {offsets = [0, 256], sizes = [8, 128], strides = [1, 1]} : vector<8x512xf32> to vector<8x128xf32>
    %82 = math.tanh %81 : vector<8x128xf32>
    %83 = vector.extract_strided_slice %64 {offsets = [0, 384], sizes = [8, 128], strides = [1, 1]} : vector<8x512xf32> to vector<8x128xf32>
    %cst_48 = arith.constant 5.000000e-01 : f32
    %84 = vector.broadcast %cst_48 : f32 to vector<8x128xf32>
    %85 = arith.mulf %84, %83 : vector<8x128xf32>
    %86 = math.tanh %85 : vector<8x128xf32>
    %cst_49 = arith.constant 1.000000e+00 : f32
    %87 = vector.broadcast %cst_49 : f32 to vector<8x128xf32>
    %88 = arith.addf %86, %87 : vector<8x128xf32>
    %cst_50 = arith.constant 5.000000e-01 : f32
    %89 = vector.broadcast %cst_50 : f32 to vector<8x128xf32>
    %90 = arith.mulf %89, %88 : vector<8x128xf32>
    %91 = arith.mulf %80, %59 : vector<8x128xf32>
    %92 = arith.mulf %72, %82 : vector<8x128xf32>
    %93 = arith.addf %91, %92 : vector<8x128xf32>
    %94 = math.tanh %93 : vector<8x128xf32>
    %95 = arith.mulf %90, %94 : vector<8x128xf32>
    %c0_51 = arith.constant 0 : index
    %c0_52 = arith.constant 0 : index
    %96 = vector.load %arg13[%c0_51, %c0_52] : memref<8x128xf32, #tpu.memory_space<vmem>>, vector<8x128xf32>
    tpu.vector_store %arg13[%c0_51, %c0_52], %95 {strides = array<i32>} : memref<8x128xf32, #tpu.memory_space<vmem>>, vector<8x128xf32>,
    %c0_53 = arith.constant 0 : index
    %c0_54 = arith.constant 0 : index
    %97 = vector.load %arg14[%c0_53, %c0_54] : memref<8x128xf32, #tpu.memory_space<vmem>>, vector<8x128xf32>
    tpu.vector_store %arg14[%c0_53, %c0_54], %93 {strides = array<i32>} : memref<8x128xf32, #tpu.memory_space<vmem>>, vector<8x128xf32>,
    %98 = arith.index_cast %57 : i32 to index
    %c0_55 = arith.constant 0 : index
    %99 = vector.load %arg11[%98, %c0_55] : memref<64x128xf32, #tpu.memory_space<vmem>>, vector<8x128xf32>
    tpu.vector_store %arg11[%98, %c0_55], %95 {strides = array<i32>} : memref<64x128xf32, #tpu.memory_space<vmem>>, vector<8x128xf32>,
    %c2_i32 = arith.constant 2 : i32
    %c8_i32_56 = arith.constant 8 : i32
    %100 = arith.muli %c2_i32, %c8_i32_56 : i32
    %101 = tpu.assume_multiple %100, 8 : i32
    %c0_57 = arith.constant 0 : index
    %c0_58 = arith.constant 0 : index
    %102 = vector.load %arg13[%c0_57, %c0_58] : memref<8x128xf32, #tpu.memory_space<vmem>>, vector<8x128xf32>
    %c0_59 = arith.constant 0 : index
    %c0_60 = arith.constant 0 : index
    %103 = vector.load %arg14[%c0_59, %c0_60] : memref<8x128xf32, #tpu.memory_space<vmem>>, vector<8x128xf32>
    %104 = arith.index_cast %101 : i32 to index
    %c0_61 = arith.constant 0 : index
    %105 = vector.load %arg12[%104, %c0_61] : memref<64x512xf32, #tpu.memory_space<vmem>>, vector<8x512xf32>
    %106 = arith.truncf %102 : vector<8x128xf32> to vector<8x128xbf16>
    %cst_62 = arith.constant dense<0.000000e+00> : vector<8x512xf32>
    %107 = tpu.matmul %106, %7, %cst_62 {dimension_numbers = #tpu.dot_dimension_numbers<[1], [0], [0], [1], [0, 0, 1, 1], [], []>} : vector<8x128xbf16>, vector<128x512xbf16>, vector<8x512xf32> -> vector<8x512xf32>
    %108 = arith.addf %105, %107 : vector<8x512xf32>
    %109 = vector.extract_strided_slice %108 {offsets = [0, 0], sizes = [8, 128], strides = [1, 1]} : vector<8x512xf32> to vector<8x128xf32>
    %cst_63 = arith.constant 5.000000e-01 : f32
    %110 = vector.broadcast %cst_63 : f32 to vector<8x128xf32>
    %111 = arith.mulf %110, %109 : vector<8x128xf32>
    %112 = math.tanh %111 : vector<8x128xf32>
    %cst_64 = arith.constant 1.000000e+00 : f32
    %113 = vector.broadcast %cst_64 : f32 to vector<8x128xf32>
    %114 = arith.addf %112, %113 : vector<8x128xf32>
    %cst_65 = arith.constant 5.000000e-01 : f32
    %115 = vector.broadcast %cst_65 : f32 to vector<8x128xf32>
    %116 = arith.mulf %115, %114 : vector<8x128xf32>
    %117 = vector.extract_strided_slice %108 {offsets = [0, 128], sizes = [8, 128], strides = [1, 1]} : vector<8x512xf32> to vector<8x128xf32>
    %cst_66 = arith.constant 5.000000e-01 : f32
    %118 = vector.broadcast %cst_66 : f32 to vector<8x128xf32>
    %119 = arith.mulf %118, %117 : vector<8x128xf32>
    %120 = math.tanh %119 : vector<8x128xf32>
    %cst_67 = arith.constant 1.000000e+00 : f32
    %121 = vector.broadcast %cst_67 : f32 to vector<8x128xf32>
    %122 = arith.addf %120, %121 : vector<8x128xf32>
    %cst_68 = arith.constant 5.000000e-01 : f32
    %123 = vector.broadcast %cst_68 : f32 to vector<8x128xf32>
    %124 = arith.mulf %123, %122 : vector<8x128xf32>
    %125 = vector.extract_strided_slice %108 {offsets = [0, 256], sizes = [8, 128], strides = [1, 1]} : vector<8x512xf32> to vector<8x128xf32>
    %126 = math.tanh %125 : vector<8x128xf32>
    %127 = vector.extract_strided_slice %108 {offsets = [0, 384], sizes = [8, 128], strides = [1, 1]} : vector<8x512xf32> to vector<8x128xf32>
    %cst_69 = arith.constant 5.000000e-01 : f32
    %128 = vector.broadcast %cst_69 : f32 to vector<8x128xf32>
    %129 = arith.mulf %128, %127 : vector<8x128xf32>
    %130 = math.tanh %129 : vector<8x128xf32>
    %cst_70 = arith.constant 1.000000e+00 : f32
    %131 = vector.broadcast %cst_70 : f32 to vector<8x128xf32>
    %132 = arith.addf %130, %131 : vector<8x128xf32>
    %cst_71 = arith.constant 5.000000e-01 : f32
    %133 = vector.broadcast %cst_71 : f32 to vector<8x128xf32>
    %134 = arith.mulf %133, %132 : vector<8x128xf32>
    %135 = arith.mulf %124, %103 : vector<8x128xf32>
    %136 = arith.mulf %116, %126 : vector<8x128xf32>
    %137 = arith.addf %135, %136 : vector<8x128xf32>
    %138 = math.tanh %137 : vector<8x128xf32>
    %139 = arith.mulf %134, %138 : vector<8x128xf32>
    %c0_72 = arith.constant 0 : index
    %c0_73 = arith.constant 0 : index
    %140 = vector.load %arg13[%c0_72, %c0_73] : memref<8x128xf32, #tpu.memory_space<vmem>>, vector<8x128xf32>
    tpu.vector_store %arg13[%c0_72, %c0_73], %139 {strides = array<i32>} : memref<8x128xf32, #tpu.memory_space<vmem>>, vector<8x128xf32>,
    %c0_74 = arith.constant 0 : index
    %c0_75 = arith.constant 0 : index
    %141 = vector.load %arg14[%c0_74, %c0_75] : memref<8x128xf32, #tpu.memory_space<vmem>>, vector<8x128xf32>
    tpu.vector_store %arg14[%c0_74, %c0_75], %137 {strides = array<i32>} : memref<8x128xf32, #tpu.memory_space<vmem>>, vector<8x128xf32>,
    %142 = arith.index_cast %101 : i32 to index
    %c0_76 = arith.constant 0 : index
    %143 = vector.load %arg11[%142, %c0_76] : memref<64x128xf32, #tpu.memory_space<vmem>>, vector<8x128xf32>
    tpu.vector_store %arg11[%142, %c0_76], %139 {strides = array<i32>} : memref<64x128xf32, #tpu.memory_space<vmem>>, vector<8x128xf32>,
    %c3_i32 = arith.constant 3 : i32
    %c8_i32_77 = arith.constant 8 : i32
    %144 = arith.muli %c3_i32, %c8_i32_77 : i32
    %145 = tpu.assume_multiple %144, 8 : i32
    %c0_78 = arith.constant 0 : index
    %c0_79 = arith.constant 0 : index
    %146 = vector.load %arg13[%c0_78, %c0_79] : memref<8x128xf32, #tpu.memory_space<vmem>>, vector<8x128xf32>
    %c0_80 = arith.constant 0 : index
    %c0_81 = arith.constant 0 : index
    %147 = vector.load %arg14[%c0_80, %c0_81] : memref<8x128xf32, #tpu.memory_space<vmem>>, vector<8x128xf32>
    %148 = arith.index_cast %145 : i32 to index
    %c0_82 = arith.constant 0 : index
    %149 = vector.load %arg12[%148, %c0_82] : memref<64x512xf32, #tpu.memory_space<vmem>>, vector<8x512xf32>
    %150 = arith.truncf %146 : vector<8x128xf32> to vector<8x128xbf16>
    %cst_83 = arith.constant dense<0.000000e+00> : vector<8x512xf32>
    %151 = tpu.matmul %150, %7, %cst_83 {dimension_numbers = #tpu.dot_dimension_numbers<[1], [0], [0], [1], [0, 0, 1, 1], [], []>} : vector<8x128xbf16>, vector<128x512xbf16>, vector<8x512xf32> -> vector<8x512xf32>
    %152 = arith.addf %149, %151 : vector<8x512xf32>
    %153 = vector.extract_strided_slice %152 {offsets = [0, 0], sizes = [8, 128], strides = [1, 1]} : vector<8x512xf32> to vector<8x128xf32>
    %cst_84 = arith.constant 5.000000e-01 : f32
    %154 = vector.broadcast %cst_84 : f32 to vector<8x128xf32>
    %155 = arith.mulf %154, %153 : vector<8x128xf32>
    %156 = math.tanh %155 : vector<8x128xf32>
    %cst_85 = arith.constant 1.000000e+00 : f32
    %157 = vector.broadcast %cst_85 : f32 to vector<8x128xf32>
    %158 = arith.addf %156, %157 : vector<8x128xf32>
    %cst_86 = arith.constant 5.000000e-01 : f32
    %159 = vector.broadcast %cst_86 : f32 to vector<8x128xf32>
    %160 = arith.mulf %159, %158 : vector<8x128xf32>
    %161 = vector.extract_strided_slice %152 {offsets = [0, 128], sizes = [8, 128], strides = [1, 1]} : vector<8x512xf32> to vector<8x128xf32>
    %cst_87 = arith.constant 5.000000e-01 : f32
    %162 = vector.broadcast %cst_87 : f32 to vector<8x128xf32>
    %163 = arith.mulf %162, %161 : vector<8x128xf32>
    %164 = math.tanh %163 : vector<8x128xf32>
    %cst_88 = arith.constant 1.000000e+00 : f32
    %165 = vector.broadcast %cst_88 : f32 to vector<8x128xf32>
    %166 = arith.addf %164, %165 : vector<8x128xf32>
    %cst_89 = arith.constant 5.000000e-01 : f32
    %167 = vector.broadcast %cst_89 : f32 to vector<8x128xf32>
    %168 = arith.mulf %167, %166 : vector<8x128xf32>
    %169 = vector.extract_strided_slice %152 {offsets = [0, 256], sizes = [8, 128], strides = [1, 1]} : vector<8x512xf32> to vector<8x128xf32>
    %170 = math.tanh %169 : vector<8x128xf32>
    %171 = vector.extract_strided_slice %152 {offsets = [0, 384], sizes = [8, 128], strides = [1, 1]} : vector<8x512xf32> to vector<8x128xf32>
    %cst_90 = arith.constant 5.000000e-01 : f32
    %172 = vector.broadcast %cst_90 : f32 to vector<8x128xf32>
    %173 = arith.mulf %172, %171 : vector<8x128xf32>
    %174 = math.tanh %173 : vector<8x128xf32>
    %cst_91 = arith.constant 1.000000e+00 : f32
    %175 = vector.broadcast %cst_91 : f32 to vector<8x128xf32>
    %176 = arith.addf %174, %175 : vector<8x128xf32>
    %cst_92 = arith.constant 5.000000e-01 : f32
    %177 = vector.broadcast %cst_92 : f32 to vector<8x128xf32>
    %178 = arith.mulf %177, %176 : vector<8x128xf32>
    %179 = arith.mulf %168, %147 : vector<8x128xf32>
    %180 = arith.mulf %160, %170 : vector<8x128xf32>
    %181 = arith.addf %179, %180 : vector<8x128xf32>
    %182 = math.tanh %181 : vector<8x128xf32>
    %183 = arith.mulf %178, %182 : vector<8x128xf32>
    %c0_93 = arith.constant 0 : index
    %c0_94 = arith.constant 0 : index
    %184 = vector.load %arg13[%c0_93, %c0_94] : memref<8x128xf32, #tpu.memory_space<vmem>>, vector<8x128xf32>
    tpu.vector_store %arg13[%c0_93, %c0_94], %183 {strides = array<i32>} : memref<8x128xf32, #tpu.memory_space<vmem>>, vector<8x128xf32>,
    %c0_95 = arith.constant 0 : index
    %c0_96 = arith.constant 0 : index
    %185 = vector.load %arg14[%c0_95, %c0_96] : memref<8x128xf32, #tpu.memory_space<vmem>>, vector<8x128xf32>
    tpu.vector_store %arg14[%c0_95, %c0_96], %181 {strides = array<i32>} : memref<8x128xf32, #tpu.memory_space<vmem>>, vector<8x128xf32>,
    %186 = arith.index_cast %145 : i32 to index
    %c0_97 = arith.constant 0 : index
    %187 = vector.load %arg11[%186, %c0_97] : memref<64x128xf32, #tpu.memory_space<vmem>>, vector<8x128xf32>
    tpu.vector_store %arg11[%186, %c0_97], %183 {strides = array<i32>} : memref<64x128xf32, #tpu.memory_space<vmem>>, vector<8x128xf32>,
    %c4_i32 = arith.constant 4 : i32
    %c8_i32_98 = arith.constant 8 : i32
    %188 = arith.muli %c4_i32, %c8_i32_98 : i32
    %189 = tpu.assume_multiple %188, 8 : i32
    %c0_99 = arith.constant 0 : index
    %c0_100 = arith.constant 0 : index
    %190 = vector.load %arg13[%c0_99, %c0_100] : memref<8x128xf32, #tpu.memory_space<vmem>>, vector<8x128xf32>
    %c0_101 = arith.constant 0 : index
    %c0_102 = arith.constant 0 : index
    %191 = vector.load %arg14[%c0_101, %c0_102] : memref<8x128xf32, #tpu.memory_space<vmem>>, vector<8x128xf32>
    %192 = arith.index_cast %189 : i32 to index
    %c0_103 = arith.constant 0 : index
    %193 = vector.load %arg12[%192, %c0_103] : memref<64x512xf32, #tpu.memory_space<vmem>>, vector<8x512xf32>
    %194 = arith.truncf %190 : vector<8x128xf32> to vector<8x128xbf16>
    %cst_104 = arith.constant dense<0.000000e+00> : vector<8x512xf32>
    %195 = tpu.matmul %194, %7, %cst_104 {dimension_numbers = #tpu.dot_dimension_numbers<[1], [0], [0], [1], [0, 0, 1, 1], [], []>} : vector<8x128xbf16>, vector<128x512xbf16>, vector<8x512xf32> -> vector<8x512xf32>
    %196 = arith.addf %193, %195 : vector<8x512xf32>
    %197 = vector.extract_strided_slice %196 {offsets = [0, 0], sizes = [8, 128], strides = [1, 1]} : vector<8x512xf32> to vector<8x128xf32>
    %cst_105 = arith.constant 5.000000e-01 : f32
    %198 = vector.broadcast %cst_105 : f32 to vector<8x128xf32>
    %199 = arith.mulf %198, %197 : vector<8x128xf32>
    %200 = math.tanh %199 : vector<8x128xf32>
    %cst_106 = arith.constant 1.000000e+00 : f32
    %201 = vector.broadcast %cst_106 : f32 to vector<8x128xf32>
    %202 = arith.addf %200, %201 : vector<8x128xf32>
    %cst_107 = arith.constant 5.000000e-01 : f32
    %203 = vector.broadcast %cst_107 : f32 to vector<8x128xf32>
    %204 = arith.mulf %203, %202 : vector<8x128xf32>
    %205 = vector.extract_strided_slice %196 {offsets = [0, 128], sizes = [8, 128], strides = [1, 1]} : vector<8x512xf32> to vector<8x128xf32>
    %cst_108 = arith.constant 5.000000e-01 : f32
    %206 = vector.broadcast %cst_108 : f32 to vector<8x128xf32>
    %207 = arith.mulf %206, %205 : vector<8x128xf32>
    %208 = math.tanh %207 : vector<8x128xf32>
    %cst_109 = arith.constant 1.000000e+00 : f32
    %209 = vector.broadcast %cst_109 : f32 to vector<8x128xf32>
    %210 = arith.addf %208, %209 : vector<8x128xf32>
    %cst_110 = arith.constant 5.000000e-01 : f32
    %211 = vector.broadcast %cst_110 : f32 to vector<8x128xf32>
    %212 = arith.mulf %211, %210 : vector<8x128xf32>
    %213 = vector.extract_strided_slice %196 {offsets = [0, 256], sizes = [8, 128], strides = [1, 1]} : vector<8x512xf32> to vector<8x128xf32>
    %214 = math.tanh %213 : vector<8x128xf32>
    %215 = vector.extract_strided_slice %196 {offsets = [0, 384], sizes = [8, 128], strides = [1, 1]} : vector<8x512xf32> to vector<8x128xf32>
    %cst_111 = arith.constant 5.000000e-01 : f32
    %216 = vector.broadcast %cst_111 : f32 to vector<8x128xf32>
    %217 = arith.mulf %216, %215 : vector<8x128xf32>
    %218 = math.tanh %217 : vector<8x128xf32>
    %cst_112 = arith.constant 1.000000e+00 : f32
    %219 = vector.broadcast %cst_112 : f32 to vector<8x128xf32>
    %220 = arith.addf %218, %219 : vector<8x128xf32>
    %cst_113 = arith.constant 5.000000e-01 : f32
    %221 = vector.broadcast %cst_113 : f32 to vector<8x128xf32>
    %222 = arith.mulf %221, %220 : vector<8x128xf32>
    %223 = arith.mulf %212, %191 : vector<8x128xf32>
    %224 = arith.mulf %204, %214 : vector<8x128xf32>
    %225 = arith.addf %223, %224 : vector<8x128xf32>
    %226 = math.tanh %225 : vector<8x128xf32>
    %227 = arith.mulf %222, %226 : vector<8x128xf32>
    %c0_114 = arith.constant 0 : index
    %c0_115 = arith.constant 0 : index
    %228 = vector.load %arg13[%c0_114, %c0_115] : memref<8x128xf32, #tpu.memory_space<vmem>>, vector<8x128xf32>
    tpu.vector_store %arg13[%c0_114, %c0_115], %227 {strides = array<i32>} : memref<8x128xf32, #tpu.memory_space<vmem>>, vector<8x128xf32>,
    %c0_116 = arith.constant 0 : index
    %c0_117 = arith.constant 0 : index
    %229 = vector.load %arg14[%c0_116, %c0_117] : memref<8x128xf32, #tpu.memory_space<vmem>>, vector<8x128xf32>
    tpu.vector_store %arg14[%c0_116, %c0_117], %225 {strides = array<i32>} : memref<8x128xf32, #tpu.memory_space<vmem>>, vector<8x128xf32>,
    %230 = arith.index_cast %189 : i32 to index
    %c0_118 = arith.constant 0 : index
    %231 = vector.load %arg11[%230, %c0_118] : memref<64x128xf32, #tpu.memory_space<vmem>>, vector<8x128xf32>
    tpu.vector_store %arg11[%230, %c0_118], %227 {strides = array<i32>} : memref<64x128xf32, #tpu.memory_space<vmem>>, vector<8x128xf32>,
    %c5_i32 = arith.constant 5 : i32
    %c8_i32_119 = arith.constant 8 : i32
    %232 = arith.muli %c5_i32, %c8_i32_119 : i32
    %233 = tpu.assume_multiple %232, 8 : i32
    %c0_120 = arith.constant 0 : index
    %c0_121 = arith.constant 0 : index
    %234 = vector.load %arg13[%c0_120, %c0_121] : memref<8x128xf32, #tpu.memory_space<vmem>>, vector<8x128xf32>
    %c0_122 = arith.constant 0 : index
    %c0_123 = arith.constant 0 : index
    %235 = vector.load %arg14[%c0_122, %c0_123] : memref<8x128xf32, #tpu.memory_space<vmem>>, vector<8x128xf32>
    %236 = arith.index_cast %233 : i32 to index
    %c0_124 = arith.constant 0 : index
    %237 = vector.load %arg12[%236, %c0_124] : memref<64x512xf32, #tpu.memory_space<vmem>>, vector<8x512xf32>
    %238 = arith.truncf %234 : vector<8x128xf32> to vector<8x128xbf16>
    %cst_125 = arith.constant dense<0.000000e+00> : vector<8x512xf32>
    %239 = tpu.matmul %238, %7, %cst_125 {dimension_numbers = #tpu.dot_dimension_numbers<[1], [0], [0], [1], [0, 0, 1, 1], [], []>} : vector<8x128xbf16>, vector<128x512xbf16>, vector<8x512xf32> -> vector<8x512xf32>
    %240 = arith.addf %237, %239 : vector<8x512xf32>
    %241 = vector.extract_strided_slice %240 {offsets = [0, 0], sizes = [8, 128], strides = [1, 1]} : vector<8x512xf32> to vector<8x128xf32>
    %cst_126 = arith.constant 5.000000e-01 : f32
    %242 = vector.broadcast %cst_126 : f32 to vector<8x128xf32>
    %243 = arith.mulf %242, %241 : vector<8x128xf32>
    %244 = math.tanh %243 : vector<8x128xf32>
    %cst_127 = arith.constant 1.000000e+00 : f32
    %245 = vector.broadcast %cst_127 : f32 to vector<8x128xf32>
    %246 = arith.addf %244, %245 : vector<8x128xf32>
    %cst_128 = arith.constant 5.000000e-01 : f32
    %247 = vector.broadcast %cst_128 : f32 to vector<8x128xf32>
    %248 = arith.mulf %247, %246 : vector<8x128xf32>
    %249 = vector.extract_strided_slice %240 {offsets = [0, 128], sizes = [8, 128], strides = [1, 1]} : vector<8x512xf32> to vector<8x128xf32>
    %cst_129 = arith.constant 5.000000e-01 : f32
    %250 = vector.broadcast %cst_129 : f32 to vector<8x128xf32>
    %251 = arith.mulf %250, %249 : vector<8x128xf32>
    %252 = math.tanh %251 : vector<8x128xf32>
    %cst_130 = arith.constant 1.000000e+00 : f32
    %253 = vector.broadcast %cst_130 : f32 to vector<8x128xf32>
    %254 = arith.addf %252, %253 : vector<8x128xf32>
    %cst_131 = arith.constant 5.000000e-01 : f32
    %255 = vector.broadcast %cst_131 : f32 to vector<8x128xf32>
    %256 = arith.mulf %255, %254 : vector<8x128xf32>
    %257 = vector.extract_strided_slice %240 {offsets = [0, 256], sizes = [8, 128], strides = [1, 1]} : vector<8x512xf32> to vector<8x128xf32>
    %258 = math.tanh %257 : vector<8x128xf32>
    %259 = vector.extract_strided_slice %240 {offsets = [0, 384], sizes = [8, 128], strides = [1, 1]} : vector<8x512xf32> to vector<8x128xf32>
    %cst_132 = arith.constant 5.000000e-01 : f32
    %260 = vector.broadcast %cst_132 : f32 to vector<8x128xf32>
    %261 = arith.mulf %260, %259 : vector<8x128xf32>
    %262 = math.tanh %261 : vector<8x128xf32>
    %cst_133 = arith.constant 1.000000e+00 : f32
    %263 = vector.broadcast %cst_133 : f32 to vector<8x128xf32>
    %264 = arith.addf %262, %263 : vector<8x128xf32>
    %cst_134 = arith.constant 5.000000e-01 : f32
    %265 = vector.broadcast %cst_134 : f32 to vector<8x128xf32>
    %266 = arith.mulf %265, %264 : vector<8x128xf32>
    %267 = arith.mulf %256, %235 : vector<8x128xf32>
    %268 = arith.mulf %248, %258 : vector<8x128xf32>
    %269 = arith.addf %267, %268 : vector<8x128xf32>
    %270 = math.tanh %269 : vector<8x128xf32>
    %271 = arith.mulf %266, %270 : vector<8x128xf32>
    %c0_135 = arith.constant 0 : index
    %c0_136 = arith.constant 0 : index
    %272 = vector.load %arg13[%c0_135, %c0_136] : memref<8x128xf32, #tpu.memory_space<vmem>>, vector<8x128xf32>
    tpu.vector_store %arg13[%c0_135, %c0_136], %271 {strides = array<i32>} : memref<8x128xf32, #tpu.memory_space<vmem>>, vector<8x128xf32>,
    %c0_137 = arith.constant 0 : index
    %c0_138 = arith.constant 0 : index
    %273 = vector.load %arg14[%c0_137, %c0_138] : memref<8x128xf32, #tpu.memory_space<vmem>>, vector<8x128xf32>
    tpu.vector_store %arg14[%c0_137, %c0_138], %269 {strides = array<i32>} : memref<8x128xf32, #tpu.memory_space<vmem>>, vector<8x128xf32>,
    %274 = arith.index_cast %233 : i32 to index
    %c0_139 = arith.constant 0 : index
    %275 = vector.load %arg11[%274, %c0_139] : memref<64x128xf32, #tpu.memory_space<vmem>>, vector<8x128xf32>
    tpu.vector_store %arg11[%274, %c0_139], %271 {strides = array<i32>} : memref<64x128xf32, #tpu.memory_space<vmem>>, vector<8x128xf32>,
    %c6_i32 = arith.constant 6 : i32
    %c8_i32_140 = arith.constant 8 : i32
    %276 = arith.muli %c6_i32, %c8_i32_140 : i32
    %277 = tpu.assume_multiple %276, 8 : i32
    %c0_141 = arith.constant 0 : index
    %c0_142 = arith.constant 0 : index
    %278 = vector.load %arg13[%c0_141, %c0_142] : memref<8x128xf32, #tpu.memory_space<vmem>>, vector<8x128xf32>
    %c0_143 = arith.constant 0 : index
    %c0_144 = arith.constant 0 : index
    %279 = vector.load %arg14[%c0_143, %c0_144] : memref<8x128xf32, #tpu.memory_space<vmem>>, vector<8x128xf32>
    %280 = arith.index_cast %277 : i32 to index
    %c0_145 = arith.constant 0 : index
    %281 = vector.load %arg12[%280, %c0_145] : memref<64x512xf32, #tpu.memory_space<vmem>>, vector<8x512xf32>
    %282 = arith.truncf %278 : vector<8x128xf32> to vector<8x128xbf16>
    %cst_146 = arith.constant dense<0.000000e+00> : vector<8x512xf32>
    %283 = tpu.matmul %282, %7, %cst_146 {dimension_numbers = #tpu.dot_dimension_numbers<[1], [0], [0], [1], [0, 0, 1, 1], [], []>} : vector<8x128xbf16>, vector<128x512xbf16>, vector<8x512xf32> -> vector<8x512xf32>
    %284 = arith.addf %281, %283 : vector<8x512xf32>
    %285 = vector.extract_strided_slice %284 {offsets = [0, 0], sizes = [8, 128], strides = [1, 1]} : vector<8x512xf32> to vector<8x128xf32>
    %cst_147 = arith.constant 5.000000e-01 : f32
    %286 = vector.broadcast %cst_147 : f32 to vector<8x128xf32>
    %287 = arith.mulf %286, %285 : vector<8x128xf32>
    %288 = math.tanh %287 : vector<8x128xf32>
    %cst_148 = arith.constant 1.000000e+00 : f32
    %289 = vector.broadcast %cst_148 : f32 to vector<8x128xf32>
    %290 = arith.addf %288, %289 : vector<8x128xf32>
    %cst_149 = arith.constant 5.000000e-01 : f32
    %291 = vector.broadcast %cst_149 : f32 to vector<8x128xf32>
    %292 = arith.mulf %291, %290 : vector<8x128xf32>
    %293 = vector.extract_strided_slice %284 {offsets = [0, 128], sizes = [8, 128], strides = [1, 1]} : vector<8x512xf32> to vector<8x128xf32>
    %cst_150 = arith.constant 5.000000e-01 : f32
    %294 = vector.broadcast %cst_150 : f32 to vector<8x128xf32>
    %295 = arith.mulf %294, %293 : vector<8x128xf32>
    %296 = math.tanh %295 : vector<8x128xf32>
    %cst_151 = arith.constant 1.000000e+00 : f32
    %297 = vector.broadcast %cst_151 : f32 to vector<8x128xf32>
    %298 = arith.addf %296, %297 : vector<8x128xf32>
    %cst_152 = arith.constant 5.000000e-01 : f32
    %299 = vector.broadcast %cst_152 : f32 to vector<8x128xf32>
    %300 = arith.mulf %299, %298 : vector<8x128xf32>
    %301 = vector.extract_strided_slice %284 {offsets = [0, 256], sizes = [8, 128], strides = [1, 1]} : vector<8x512xf32> to vector<8x128xf32>
    %302 = math.tanh %301 : vector<8x128xf32>
    %303 = vector.extract_strided_slice %284 {offsets = [0, 384], sizes = [8, 128], strides = [1, 1]} : vector<8x512xf32> to vector<8x128xf32>
    %cst_153 = arith.constant 5.000000e-01 : f32
    %304 = vector.broadcast %cst_153 : f32 to vector<8x128xf32>
    %305 = arith.mulf %304, %303 : vector<8x128xf32>
    %306 = math.tanh %305 : vector<8x128xf32>
    %cst_154 = arith.constant 1.000000e+00 : f32
    %307 = vector.broadcast %cst_154 : f32 to vector<8x128xf32>
    %308 = arith.addf %306, %307 : vector<8x128xf32>
    %cst_155 = arith.constant 5.000000e-01 : f32
    %309 = vector.broadcast %cst_155 : f32 to vector<8x128xf32>
    %310 = arith.mulf %309, %308 : vector<8x128xf32>
    %311 = arith.mulf %300, %279 : vector<8x128xf32>
    %312 = arith.mulf %292, %302 : vector<8x128xf32>
    %313 = arith.addf %311, %312 : vector<8x128xf32>
    %314 = math.tanh %313 : vector<8x128xf32>
    %315 = arith.mulf %310, %314 : vector<8x128xf32>
    %c0_156 = arith.constant 0 : index
    %c0_157 = arith.constant 0 : index
    %316 = vector.load %arg13[%c0_156, %c0_157] : memref<8x128xf32, #tpu.memory_space<vmem>>, vector<8x128xf32>
    tpu.vector_store %arg13[%c0_156, %c0_157], %315 {strides = array<i32>} : memref<8x128xf32, #tpu.memory_space<vmem>>, vector<8x128xf32>,
    %c0_158 = arith.constant 0 : index
    %c0_159 = arith.constant 0 : index
    %317 = vector.load %arg14[%c0_158, %c0_159] : memref<8x128xf32, #tpu.memory_space<vmem>>, vector<8x128xf32>
    tpu.vector_store %arg14[%c0_158, %c0_159], %313 {strides = array<i32>} : memref<8x128xf32, #tpu.memory_space<vmem>>, vector<8x128xf32>,
    %318 = arith.index_cast %277 : i32 to index
    %c0_160 = arith.constant 0 : index
    %319 = vector.load %arg11[%318, %c0_160] : memref<64x128xf32, #tpu.memory_space<vmem>>, vector<8x128xf32>
    tpu.vector_store %arg11[%318, %c0_160], %315 {strides = array<i32>} : memref<64x128xf32, #tpu.memory_space<vmem>>, vector<8x128xf32>,
    %c7_i32 = arith.constant 7 : i32
    %c8_i32_161 = arith.constant 8 : i32
    %320 = arith.muli %c7_i32, %c8_i32_161 : i32
    %321 = tpu.assume_multiple %320, 8 : i32
    %c0_162 = arith.constant 0 : index
    %c0_163 = arith.constant 0 : index
    %322 = vector.load %arg13[%c0_162, %c0_163] : memref<8x128xf32, #tpu.memory_space<vmem>>, vector<8x128xf32>
    %c0_164 = arith.constant 0 : index
    %c0_165 = arith.constant 0 : index
    %323 = vector.load %arg14[%c0_164, %c0_165] : memref<8x128xf32, #tpu.memory_space<vmem>>, vector<8x128xf32>
    %324 = arith.index_cast %321 : i32 to index
    %c0_166 = arith.constant 0 : index
    %325 = vector.load %arg12[%324, %c0_166] : memref<64x512xf32, #tpu.memory_space<vmem>>, vector<8x512xf32>
    %326 = arith.truncf %322 : vector<8x128xf32> to vector<8x128xbf16>
    %cst_167 = arith.constant dense<0.000000e+00> : vector<8x512xf32>
    %327 = tpu.matmul %326, %7, %cst_167 {dimension_numbers = #tpu.dot_dimension_numbers<[1], [0], [0], [1], [0, 0, 1, 1], [], []>} : vector<8x128xbf16>, vector<128x512xbf16>, vector<8x512xf32> -> vector<8x512xf32>
    %328 = arith.addf %325, %327 : vector<8x512xf32>
    %329 = vector.extract_strided_slice %328 {offsets = [0, 0], sizes = [8, 128], strides = [1, 1]} : vector<8x512xf32> to vector<8x128xf32>
    %cst_168 = arith.constant 5.000000e-01 : f32
    %330 = vector.broadcast %cst_168 : f32 to vector<8x128xf32>
    %331 = arith.mulf %330, %329 : vector<8x128xf32>
    %332 = math.tanh %331 : vector<8x128xf32>
    %cst_169 = arith.constant 1.000000e+00 : f32
    %333 = vector.broadcast %cst_169 : f32 to vector<8x128xf32>
    %334 = arith.addf %332, %333 : vector<8x128xf32>
    %cst_170 = arith.constant 5.000000e-01 : f32
    %335 = vector.broadcast %cst_170 : f32 to vector<8x128xf32>
    %336 = arith.mulf %335, %334 : vector<8x128xf32>
    %337 = vector.extract_strided_slice %328 {offsets = [0, 128], sizes = [8, 128], strides = [1, 1]} : vector<8x512xf32> to vector<8x128xf32>
    %cst_171 = arith.constant 5.000000e-01 : f32
    %338 = vector.broadcast %cst_171 : f32 to vector<8x128xf32>
    %339 = arith.mulf %338, %337 : vector<8x128xf32>
    %340 = math.tanh %339 : vector<8x128xf32>
    %cst_172 = arith.constant 1.000000e+00 : f32
    %341 = vector.broadcast %cst_172 : f32 to vector<8x128xf32>
    %342 = arith.addf %340, %341 : vector<8x128xf32>
    %cst_173 = arith.constant 5.000000e-01 : f32
    %343 = vector.broadcast %cst_173 : f32 to vector<8x128xf32>
    %344 = arith.mulf %343, %342 : vector<8x128xf32>
    %345 = vector.extract_strided_slice %328 {offsets = [0, 256], sizes = [8, 128], strides = [1, 1]} : vector<8x512xf32> to vector<8x128xf32>
    %346 = math.tanh %345 : vector<8x128xf32>
    %347 = vector.extract_strided_slice %328 {offsets = [0, 384], sizes = [8, 128], strides = [1, 1]} : vector<8x512xf32> to vector<8x128xf32>
    %cst_174 = arith.constant 5.000000e-01 : f32
    %348 = vector.broadcast %cst_174 : f32 to vector<8x128xf32>
    %349 = arith.mulf %348, %347 : vector<8x128xf32>
    %350 = math.tanh %349 : vector<8x128xf32>
    %cst_175 = arith.constant 1.000000e+00 : f32
    %351 = vector.broadcast %cst_175 : f32 to vector<8x128xf32>
    %352 = arith.addf %350, %351 : vector<8x128xf32>
    %cst_176 = arith.constant 5.000000e-01 : f32
    %353 = vector.broadcast %cst_176 : f32 to vector<8x128xf32>
    %354 = arith.mulf %353, %352 : vector<8x128xf32>
    %355 = arith.mulf %344, %323 : vector<8x128xf32>
    %356 = arith.mulf %336, %346 : vector<8x128xf32>
    %357 = arith.addf %355, %356 : vector<8x128xf32>
    %358 = math.tanh %357 : vector<8x128xf32>
    %359 = arith.mulf %354, %358 : vector<8x128xf32>
    %c0_177 = arith.constant 0 : index
    %c0_178 = arith.constant 0 : index
    %360 = vector.load %arg13[%c0_177, %c0_178] : memref<8x128xf32, #tpu.memory_space<vmem>>, vector<8x128xf32>
    tpu.vector_store %arg13[%c0_177, %c0_178], %359 {strides = array<i32>} : memref<8x128xf32, #tpu.memory_space<vmem>>, vector<8x128xf32>,
    %c0_179 = arith.constant 0 : index
    %c0_180 = arith.constant 0 : index
    %361 = vector.load %arg14[%c0_179, %c0_180] : memref<8x128xf32, #tpu.memory_space<vmem>>, vector<8x128xf32>
    tpu.vector_store %arg14[%c0_179, %c0_180], %357 {strides = array<i32>} : memref<8x128xf32, #tpu.memory_space<vmem>>, vector<8x128xf32>,
    %362 = arith.index_cast %321 : i32 to index
    %c0_181 = arith.constant 0 : index
    %363 = vector.load %arg11[%362, %c0_181] : memref<64x128xf32, #tpu.memory_space<vmem>>, vector<8x128xf32>
    tpu.vector_store %arg11[%362, %c0_181], %359 {strides = array<i32>} : memref<64x128xf32, #tpu.memory_space<vmem>>, vector<8x128xf32>,
    %c8_i32_182 = arith.constant 8 : i32
    %c0_183 = arith.constant 0 : index
    %c0_184 = arith.constant 0 : index
    %364 = vector.load %arg11[%c0_183, %c0_184] : memref<64x128xf32, #tpu.memory_space<vmem>>, vector<64x128xf32>
    %365 = arith.truncf %364 : vector<64x128xf32> to vector<64x128xbf16>
    %c0_185 = arith.constant 0 : index
    %c0_186 = arith.constant 0 : index
    %366 = vector.load %arg5[%c0_185, %c0_186] : memref<128x512xbf16, #tpu.memory_space<vmem>>, vector<128x512xbf16>
    %cst_187 = arith.constant dense<0.000000e+00> : vector<64x512xf32>
    %367 = tpu.matmul %365, %366, %cst_187 {dimension_numbers = #tpu.dot_dimension_numbers<[1], [0], [0], [1], [0, 0, 1, 1], [], []>} : vector<64x128xbf16>, vector<128x512xbf16>, vector<64x512xf32> -> vector<64x512xf32>
    %c0_188 = arith.constant 0 : index
    %c0_189 = arith.constant 0 : index
    %368 = vector.load %arg7[%c0_188, %c0_189] : memref<1x512xf32, #tpu.memory_space<vmem>>, vector<1x512xf32>
    %369 = vector.broadcast %368 : vector<1x512xf32> to vector<64x512xf32>
    %370 = arith.addf %367, %369 : vector<64x512xf32>
    %c0_190 = arith.constant 0 : index
    %c0_191 = arith.constant 0 : index
    %371 = vector.load %arg12[%c0_190, %c0_191] : memref<64x512xf32, #tpu.memory_space<vmem>>, vector<64x512xf32>
    tpu.vector_store %arg12[%c0_190, %c0_191], %370 {strides = array<i32>} : memref<64x512xf32, #tpu.memory_space<vmem>>, vector<64x512xf32>,
    %c0_192 = arith.constant 0 : index
    %c0_193 = arith.constant 0 : index
    %372 = vector.load %arg6[%c0_192, %c0_193] : memref<128x512xbf16, #tpu.memory_space<vmem>>, vector<128x512xbf16>
    %cst_194 = arith.constant 0.000000e+00 : f32
    %373 = vector.broadcast %cst_194 : f32 to vector<8x128xf32>
    %c0_195 = arith.constant 0 : index
    %c0_196 = arith.constant 0 : index
    %374 = vector.load %arg13[%c0_195, %c0_196] : memref<8x128xf32, #tpu.memory_space<vmem>>, vector<8x128xf32>
    tpu.vector_store %arg13[%c0_195, %c0_196], %373 {strides = array<i32>} : memref<8x128xf32, #tpu.memory_space<vmem>>, vector<8x128xf32>,
    %cst_197 = arith.constant 0.000000e+00 : f32
    %375 = vector.broadcast %cst_197 : f32 to vector<8x128xf32>
    %c0_198 = arith.constant 0 : index
    %c0_199 = arith.constant 0 : index
    %376 = vector.load %arg14[%c0_198, %c0_199] : memref<8x128xf32, #tpu.memory_space<vmem>>, vector<8x128xf32>
    tpu.vector_store %arg14[%c0_198, %c0_199], %375 {strides = array<i32>} : memref<8x128xf32, #tpu.memory_space<vmem>>, vector<8x128xf32>,
    %c0_i32_200 = arith.constant 0 : i32
    %c8_i32_201 = arith.constant 8 : i32
    %377 = arith.muli %c0_i32_200, %c8_i32_201 : i32
    %378 = tpu.assume_multiple %377, 8 : i32
    %c0_202 = arith.constant 0 : index
    %c0_203 = arith.constant 0 : index
    %379 = vector.load %arg13[%c0_202, %c0_203] : memref<8x128xf32, #tpu.memory_space<vmem>>, vector<8x128xf32>
    %c0_204 = arith.constant 0 : index
    %c0_205 = arith.constant 0 : index
    %380 = vector.load %arg14[%c0_204, %c0_205] : memref<8x128xf32, #tpu.memory_space<vmem>>, vector<8x128xf32>
    %381 = arith.index_cast %378 : i32 to index
    %c0_206 = arith.constant 0 : index
    %382 = vector.load %arg12[%381, %c0_206] : memref<64x512xf32, #tpu.memory_space<vmem>>, vector<8x512xf32>
    %383 = arith.truncf %379 : vector<8x128xf32> to vector<8x128xbf16>
    %cst_207 = arith.constant dense<0.000000e+00> : vector<8x512xf32>
    %384 = tpu.matmul %383, %372, %cst_207 {dimension_numbers = #tpu.dot_dimension_numbers<[1], [0], [0], [1], [0, 0, 1, 1], [], []>} : vector<8x128xbf16>, vector<128x512xbf16>, vector<8x512xf32> -> vector<8x512xf32>
    %385 = arith.addf %382, %384 : vector<8x512xf32>
    %386 = vector.extract_strided_slice %385 {offsets = [0, 0], sizes = [8, 128], strides = [1, 1]} : vector<8x512xf32> to vector<8x128xf32>
    %cst_208 = arith.constant 5.000000e-01 : f32
    %387 = vector.broadcast %cst_208 : f32 to vector<8x128xf32>
    %388 = arith.mulf %387, %386 : vector<8x128xf32>
    %389 = math.tanh %388 : vector<8x128xf32>
    %cst_209 = arith.constant 1.000000e+00 : f32
    %390 = vector.broadcast %cst_209 : f32 to vector<8x128xf32>
    %391 = arith.addf %389, %390 : vector<8x128xf32>
    %cst_210 = arith.constant 5.000000e-01 : f32
    %392 = vector.broadcast %cst_210 : f32 to vector<8x128xf32>
    %393 = arith.mulf %392, %391 : vector<8x128xf32>
    %394 = vector.extract_strided_slice %385 {offsets = [0, 128], sizes = [8, 128], strides = [1, 1]} : vector<8x512xf32> to vector<8x128xf32>
    %cst_211 = arith.constant 5.000000e-01 : f32
    %395 = vector.broadcast %cst_211 : f32 to vector<8x128xf32>
    %396 = arith.mulf %395, %394 : vector<8x128xf32>
    %397 = math.tanh %396 : vector<8x128xf32>
    %cst_212 = arith.constant 1.000000e+00 : f32
    %398 = vector.broadcast %cst_212 : f32 to vector<8x128xf32>
    %399 = arith.addf %397, %398 : vector<8x128xf32>
    %cst_213 = arith.constant 5.000000e-01 : f32
    %400 = vector.broadcast %cst_213 : f32 to vector<8x128xf32>
    %401 = arith.mulf %400, %399 : vector<8x128xf32>
    %402 = vector.extract_strided_slice %385 {offsets = [0, 256], sizes = [8, 128], strides = [1, 1]} : vector<8x512xf32> to vector<8x128xf32>
    %403 = math.tanh %402 : vector<8x128xf32>
    %404 = vector.extract_strided_slice %385 {offsets = [0, 384], sizes = [8, 128], strides = [1, 1]} : vector<8x512xf32> to vector<8x128xf32>
    %cst_214 = arith.constant 5.000000e-01 : f32
    %405 = vector.broadcast %cst_214 : f32 to vector<8x128xf32>
    %406 = arith.mulf %405, %404 : vector<8x128xf32>
    %407 = math.tanh %406 : vector<8x128xf32>
    %cst_215 = arith.constant 1.000000e+00 : f32
    %408 = vector.broadcast %cst_215 : f32 to vector<8x128xf32>
    %409 = arith.addf %407, %408 : vector<8x128xf32>
    %cst_216 = arith.constant 5.000000e-01 : f32
    %410 = vector.broadcast %cst_216 : f32 to vector<8x128xf32>
    %411 = arith.mulf %410, %409 : vector<8x128xf32>
    %412 = arith.mulf %401, %380 : vector<8x128xf32>
    %413 = arith.mulf %393, %403 : vector<8x128xf32>
    %414 = arith.addf %412, %413 : vector<8x128xf32>
    %415 = math.tanh %414 : vector<8x128xf32>
    %416 = arith.mulf %411, %415 : vector<8x128xf32>
    %c0_217 = arith.constant 0 : index
    %c0_218 = arith.constant 0 : index
    %417 = vector.load %arg13[%c0_217, %c0_218] : memref<8x128xf32, #tpu.memory_space<vmem>>, vector<8x128xf32>
    tpu.vector_store %arg13[%c0_217, %c0_218], %416 {strides = array<i32>} : memref<8x128xf32, #tpu.memory_space<vmem>>, vector<8x128xf32>,
    %c0_219 = arith.constant 0 : index
    %c0_220 = arith.constant 0 : index
    %418 = vector.load %arg14[%c0_219, %c0_220] : memref<8x128xf32, #tpu.memory_space<vmem>>, vector<8x128xf32>
    tpu.vector_store %arg14[%c0_219, %c0_220], %414 {strides = array<i32>} : memref<8x128xf32, #tpu.memory_space<vmem>>, vector<8x128xf32>,
    %c1_i32_221 = arith.constant 1 : i32
    %c8_i32_222 = arith.constant 8 : i32
    %419 = arith.muli %c1_i32_221, %c8_i32_222 : i32
    %420 = tpu.assume_multiple %419, 8 : i32
    %c0_223 = arith.constant 0 : index
    %c0_224 = arith.constant 0 : index
    %421 = vector.load %arg13[%c0_223, %c0_224] : memref<8x128xf32, #tpu.memory_space<vmem>>, vector<8x128xf32>
    %c0_225 = arith.constant 0 : index
    %c0_226 = arith.constant 0 : index
    %422 = vector.load %arg14[%c0_225, %c0_226] : memref<8x128xf32, #tpu.memory_space<vmem>>, vector<8x128xf32>
    %423 = arith.index_cast %420 : i32 to index
    %c0_227 = arith.constant 0 : index
    %424 = vector.load %arg12[%423, %c0_227] : memref<64x512xf32, #tpu.memory_space<vmem>>, vector<8x512xf32>
    %425 = arith.truncf %421 : vector<8x128xf32> to vector<8x128xbf16>
    %cst_228 = arith.constant dense<0.000000e+00> : vector<8x512xf32>
    %426 = tpu.matmul %425, %372, %cst_228 {dimension_numbers = #tpu.dot_dimension_numbers<[1], [0], [0], [1], [0, 0, 1, 1], [], []>} : vector<8x128xbf16>, vector<128x512xbf16>, vector<8x512xf32> -> vector<8x512xf32>
    %427 = arith.addf %424, %426 : vector<8x512xf32>
    %428 = vector.extract_strided_slice %427 {offsets = [0, 0], sizes = [8, 128], strides = [1, 1]} : vector<8x512xf32> to vector<8x128xf32>
    %cst_229 = arith.constant 5.000000e-01 : f32
    %429 = vector.broadcast %cst_229 : f32 to vector<8x128xf32>
    %430 = arith.mulf %429, %428 : vector<8x128xf32>
    %431 = math.tanh %430 : vector<8x128xf32>
    %cst_230 = arith.constant 1.000000e+00 : f32
    %432 = vector.broadcast %cst_230 : f32 to vector<8x128xf32>
    %433 = arith.addf %431, %432 : vector<8x128xf32>
    %cst_231 = arith.constant 5.000000e-01 : f32
    %434 = vector.broadcast %cst_231 : f32 to vector<8x128xf32>
    %435 = arith.mulf %434, %433 : vector<8x128xf32>
    %436 = vector.extract_strided_slice %427 {offsets = [0, 128], sizes = [8, 128], strides = [1, 1]} : vector<8x512xf32> to vector<8x128xf32>
    %cst_232 = arith.constant 5.000000e-01 : f32
    %437 = vector.broadcast %cst_232 : f32 to vector<8x128xf32>
    %438 = arith.mulf %437, %436 : vector<8x128xf32>
    %439 = math.tanh %438 : vector<8x128xf32>
    %cst_233 = arith.constant 1.000000e+00 : f32
    %440 = vector.broadcast %cst_233 : f32 to vector<8x128xf32>
    %441 = arith.addf %439, %440 : vector<8x128xf32>
    %cst_234 = arith.constant 5.000000e-01 : f32
    %442 = vector.broadcast %cst_234 : f32 to vector<8x128xf32>
    %443 = arith.mulf %442, %441 : vector<8x128xf32>
    %444 = vector.extract_strided_slice %427 {offsets = [0, 256], sizes = [8, 128], strides = [1, 1]} : vector<8x512xf32> to vector<8x128xf32>
    %445 = math.tanh %444 : vector<8x128xf32>
    %446 = vector.extract_strided_slice %427 {offsets = [0, 384], sizes = [8, 128], strides = [1, 1]} : vector<8x512xf32> to vector<8x128xf32>
    %cst_235 = arith.constant 5.000000e-01 : f32
    %447 = vector.broadcast %cst_235 : f32 to vector<8x128xf32>
    %448 = arith.mulf %447, %446 : vector<8x128xf32>
    %449 = math.tanh %448 : vector<8x128xf32>
    %cst_236 = arith.constant 1.000000e+00 : f32
    %450 = vector.broadcast %cst_236 : f32 to vector<8x128xf32>
    %451 = arith.addf %449, %450 : vector<8x128xf32>
    %cst_237 = arith.constant 5.000000e-01 : f32
    %452 = vector.broadcast %cst_237 : f32 to vector<8x128xf32>
    %453 = arith.mulf %452, %451 : vector<8x128xf32>
    %454 = arith.mulf %443, %422 : vector<8x128xf32>
    %455 = arith.mulf %435, %445 : vector<8x128xf32>
    %456 = arith.addf %454, %455 : vector<8x128xf32>
    %457 = math.tanh %456 : vector<8x128xf32>
    %458 = arith.mulf %453, %457 : vector<8x128xf32>
    %c0_238 = arith.constant 0 : index
    %c0_239 = arith.constant 0 : index
    %459 = vector.load %arg13[%c0_238, %c0_239] : memref<8x128xf32, #tpu.memory_space<vmem>>, vector<8x128xf32>
    tpu.vector_store %arg13[%c0_238, %c0_239], %458 {strides = array<i32>} : memref<8x128xf32, #tpu.memory_space<vmem>>, vector<8x128xf32>,
    %c0_240 = arith.constant 0 : index
    %c0_241 = arith.constant 0 : index
    %460 = vector.load %arg14[%c0_240, %c0_241] : memref<8x128xf32, #tpu.memory_space<vmem>>, vector<8x128xf32>
    tpu.vector_store %arg14[%c0_240, %c0_241], %456 {strides = array<i32>} : memref<8x128xf32, #tpu.memory_space<vmem>>, vector<8x128xf32>,
    %c2_i32_242 = arith.constant 2 : i32
    %c8_i32_243 = arith.constant 8 : i32
    %461 = arith.muli %c2_i32_242, %c8_i32_243 : i32
    %462 = tpu.assume_multiple %461, 8 : i32
    %c0_244 = arith.constant 0 : index
    %c0_245 = arith.constant 0 : index
    %463 = vector.load %arg13[%c0_244, %c0_245] : memref<8x128xf32, #tpu.memory_space<vmem>>, vector<8x128xf32>
    %c0_246 = arith.constant 0 : index
    %c0_247 = arith.constant 0 : index
    %464 = vector.load %arg14[%c0_246, %c0_247] : memref<8x128xf32, #tpu.memory_space<vmem>>, vector<8x128xf32>
    %465 = arith.index_cast %462 : i32 to index
    %c0_248 = arith.constant 0 : index
    %466 = vector.load %arg12[%465, %c0_248] : memref<64x512xf32, #tpu.memory_space<vmem>>, vector<8x512xf32>
    %467 = arith.truncf %463 : vector<8x128xf32> to vector<8x128xbf16>
    %cst_249 = arith.constant dense<0.000000e+00> : vector<8x512xf32>
    %468 = tpu.matmul %467, %372, %cst_249 {dimension_numbers = #tpu.dot_dimension_numbers<[1], [0], [0], [1], [0, 0, 1, 1], [], []>} : vector<8x128xbf16>, vector<128x512xbf16>, vector<8x512xf32> -> vector<8x512xf32>
    %469 = arith.addf %466, %468 : vector<8x512xf32>
    %470 = vector.extract_strided_slice %469 {offsets = [0, 0], sizes = [8, 128], strides = [1, 1]} : vector<8x512xf32> to vector<8x128xf32>
    %cst_250 = arith.constant 5.000000e-01 : f32
    %471 = vector.broadcast %cst_250 : f32 to vector<8x128xf32>
    %472 = arith.mulf %471, %470 : vector<8x128xf32>
    %473 = math.tanh %472 : vector<8x128xf32>
    %cst_251 = arith.constant 1.000000e+00 : f32
    %474 = vector.broadcast %cst_251 : f32 to vector<8x128xf32>
    %475 = arith.addf %473, %474 : vector<8x128xf32>
    %cst_252 = arith.constant 5.000000e-01 : f32
    %476 = vector.broadcast %cst_252 : f32 to vector<8x128xf32>
    %477 = arith.mulf %476, %475 : vector<8x128xf32>
    %478 = vector.extract_strided_slice %469 {offsets = [0, 128], sizes = [8, 128], strides = [1, 1]} : vector<8x512xf32> to vector<8x128xf32>
    %cst_253 = arith.constant 5.000000e-01 : f32
    %479 = vector.broadcast %cst_253 : f32 to vector<8x128xf32>
    %480 = arith.mulf %479, %478 : vector<8x128xf32>
    %481 = math.tanh %480 : vector<8x128xf32>
    %cst_254 = arith.constant 1.000000e+00 : f32
    %482 = vector.broadcast %cst_254 : f32 to vector<8x128xf32>
    %483 = arith.addf %481, %482 : vector<8x128xf32>
    %cst_255 = arith.constant 5.000000e-01 : f32
    %484 = vector.broadcast %cst_255 : f32 to vector<8x128xf32>
    %485 = arith.mulf %484, %483 : vector<8x128xf32>
    %486 = vector.extract_strided_slice %469 {offsets = [0, 256], sizes = [8, 128], strides = [1, 1]} : vector<8x512xf32> to vector<8x128xf32>
    %487 = math.tanh %486 : vector<8x128xf32>
    %488 = vector.extract_strided_slice %469 {offsets = [0, 384], sizes = [8, 128], strides = [1, 1]} : vector<8x512xf32> to vector<8x128xf32>
    %cst_256 = arith.constant 5.000000e-01 : f32
    %489 = vector.broadcast %cst_256 : f32 to vector<8x128xf32>
    %490 = arith.mulf %489, %488 : vector<8x128xf32>
    %491 = math.tanh %490 : vector<8x128xf32>
    %cst_257 = arith.constant 1.000000e+00 : f32
    %492 = vector.broadcast %cst_257 : f32 to vector<8x128xf32>
    %493 = arith.addf %491, %492 : vector<8x128xf32>
    %cst_258 = arith.constant 5.000000e-01 : f32
    %494 = vector.broadcast %cst_258 : f32 to vector<8x128xf32>
    %495 = arith.mulf %494, %493 : vector<8x128xf32>
    %496 = arith.mulf %485, %464 : vector<8x128xf32>
    %497 = arith.mulf %477, %487 : vector<8x128xf32>
    %498 = arith.addf %496, %497 : vector<8x128xf32>
    %499 = math.tanh %498 : vector<8x128xf32>
    %500 = arith.mulf %495, %499 : vector<8x128xf32>
    %c0_259 = arith.constant 0 : index
    %c0_260 = arith.constant 0 : index
    %501 = vector.load %arg13[%c0_259, %c0_260] : memref<8x128xf32, #tpu.memory_space<vmem>>, vector<8x128xf32>
    tpu.vector_store %arg13[%c0_259, %c0_260], %500 {strides = array<i32>} : memref<8x128xf32, #tpu.memory_space<vmem>>, vector<8x128xf32>,
    %c0_261 = arith.constant 0 : index
    %c0_262 = arith.constant 0 : index
    %502 = vector.load %arg14[%c0_261, %c0_262] : memref<8x128xf32, #tpu.memory_space<vmem>>, vector<8x128xf32>
    tpu.vector_store %arg14[%c0_261, %c0_262], %498 {strides = array<i32>} : memref<8x128xf32, #tpu.memory_space<vmem>>, vector<8x128xf32>,
    %c3_i32_263 = arith.constant 3 : i32
    %c8_i32_264 = arith.constant 8 : i32
    %503 = arith.muli %c3_i32_263, %c8_i32_264 : i32
    %504 = tpu.assume_multiple %503, 8 : i32
    %c0_265 = arith.constant 0 : index
    %c0_266 = arith.constant 0 : index
    %505 = vector.load %arg13[%c0_265, %c0_266] : memref<8x128xf32, #tpu.memory_space<vmem>>, vector<8x128xf32>
    %c0_267 = arith.constant 0 : index
    %c0_268 = arith.constant 0 : index
    %506 = vector.load %arg14[%c0_267, %c0_268] : memref<8x128xf32, #tpu.memory_space<vmem>>, vector<8x128xf32>
    %507 = arith.index_cast %504 : i32 to index
    %c0_269 = arith.constant 0 : index
    %508 = vector.load %arg12[%507, %c0_269] : memref<64x512xf32, #tpu.memory_space<vmem>>, vector<8x512xf32>
    %509 = arith.truncf %505 : vector<8x128xf32> to vector<8x128xbf16>
    %cst_270 = arith.constant dense<0.000000e+00> : vector<8x512xf32>
    %510 = tpu.matmul %509, %372, %cst_270 {dimension_numbers = #tpu.dot_dimension_numbers<[1], [0], [0], [1], [0, 0, 1, 1], [], []>} : vector<8x128xbf16>, vector<128x512xbf16>, vector<8x512xf32> -> vector<8x512xf32>
    %511 = arith.addf %508, %510 : vector<8x512xf32>
    %512 = vector.extract_strided_slice %511 {offsets = [0, 0], sizes = [8, 128], strides = [1, 1]} : vector<8x512xf32> to vector<8x128xf32>
    %cst_271 = arith.constant 5.000000e-01 : f32
    %513 = vector.broadcast %cst_271 : f32 to vector<8x128xf32>
    %514 = arith.mulf %513, %512 : vector<8x128xf32>
    %515 = math.tanh %514 : vector<8x128xf32>
    %cst_272 = arith.constant 1.000000e+00 : f32
    %516 = vector.broadcast %cst_272 : f32 to vector<8x128xf32>
    %517 = arith.addf %515, %516 : vector<8x128xf32>
    %cst_273 = arith.constant 5.000000e-01 : f32
    %518 = vector.broadcast %cst_273 : f32 to vector<8x128xf32>
    %519 = arith.mulf %518, %517 : vector<8x128xf32>
    %520 = vector.extract_strided_slice %511 {offsets = [0, 128], sizes = [8, 128], strides = [1, 1]} : vector<8x512xf32> to vector<8x128xf32>
    %cst_274 = arith.constant 5.000000e-01 : f32
    %521 = vector.broadcast %cst_274 : f32 to vector<8x128xf32>
    %522 = arith.mulf %521, %520 : vector<8x128xf32>
    %523 = math.tanh %522 : vector<8x128xf32>
    %cst_275 = arith.constant 1.000000e+00 : f32
    %524 = vector.broadcast %cst_275 : f32 to vector<8x128xf32>
    %525 = arith.addf %523, %524 : vector<8x128xf32>
    %cst_276 = arith.constant 5.000000e-01 : f32
    %526 = vector.broadcast %cst_276 : f32 to vector<8x128xf32>
    %527 = arith.mulf %526, %525 : vector<8x128xf32>
    %528 = vector.extract_strided_slice %511 {offsets = [0, 256], sizes = [8, 128], strides = [1, 1]} : vector<8x512xf32> to vector<8x128xf32>
    %529 = math.tanh %528 : vector<8x128xf32>
    %530 = vector.extract_strided_slice %511 {offsets = [0, 384], sizes = [8, 128], strides = [1, 1]} : vector<8x512xf32> to vector<8x128xf32>
    %cst_277 = arith.constant 5.000000e-01 : f32
    %531 = vector.broadcast %cst_277 : f32 to vector<8x128xf32>
    %532 = arith.mulf %531, %530 : vector<8x128xf32>
    %533 = math.tanh %532 : vector<8x128xf32>
    %cst_278 = arith.constant 1.000000e+00 : f32
    %534 = vector.broadcast %cst_278 : f32 to vector<8x128xf32>
    %535 = arith.addf %533, %534 : vector<8x128xf32>
    %cst_279 = arith.constant 5.000000e-01 : f32
    %536 = vector.broadcast %cst_279 : f32 to vector<8x128xf32>
    %537 = arith.mulf %536, %535 : vector<8x128xf32>
    %538 = arith.mulf %527, %506 : vector<8x128xf32>
    %539 = arith.mulf %519, %529 : vector<8x128xf32>
    %540 = arith.addf %538, %539 : vector<8x128xf32>
    %541 = math.tanh %540 : vector<8x128xf32>
    %542 = arith.mulf %537, %541 : vector<8x128xf32>
    %c0_280 = arith.constant 0 : index
    %c0_281 = arith.constant 0 : index
    %543 = vector.load %arg13[%c0_280, %c0_281] : memref<8x128xf32, #tpu.memory_space<vmem>>, vector<8x128xf32>
    tpu.vector_store %arg13[%c0_280, %c0_281], %542 {strides = array<i32>} : memref<8x128xf32, #tpu.memory_space<vmem>>, vector<8x128xf32>,
    %c0_282 = arith.constant 0 : index
    %c0_283 = arith.constant 0 : index
    %544 = vector.load %arg14[%c0_282, %c0_283] : memref<8x128xf32, #tpu.memory_space<vmem>>, vector<8x128xf32>
    tpu.vector_store %arg14[%c0_282, %c0_283], %540 {strides = array<i32>} : memref<8x128xf32, #tpu.memory_space<vmem>>, vector<8x128xf32>,
    %c4_i32_284 = arith.constant 4 : i32
    %c8_i32_285 = arith.constant 8 : i32
    %545 = arith.muli %c4_i32_284, %c8_i32_285 : i32
    %546 = tpu.assume_multiple %545, 8 : i32
    %c0_286 = arith.constant 0 : index
    %c0_287 = arith.constant 0 : index
    %547 = vector.load %arg13[%c0_286, %c0_287] : memref<8x128xf32, #tpu.memory_space<vmem>>, vector<8x128xf32>
    %c0_288 = arith.constant 0 : index
    %c0_289 = arith.constant 0 : index
    %548 = vector.load %arg14[%c0_288, %c0_289] : memref<8x128xf32, #tpu.memory_space<vmem>>, vector<8x128xf32>
    %549 = arith.index_cast %546 : i32 to index
    %c0_290 = arith.constant 0 : index
    %550 = vector.load %arg12[%549, %c0_290] : memref<64x512xf32, #tpu.memory_space<vmem>>, vector<8x512xf32>
    %551 = arith.truncf %547 : vector<8x128xf32> to vector<8x128xbf16>
    %cst_291 = arith.constant dense<0.000000e+00> : vector<8x512xf32>
    %552 = tpu.matmul %551, %372, %cst_291 {dimension_numbers = #tpu.dot_dimension_numbers<[1], [0], [0], [1], [0, 0, 1, 1], [], []>} : vector<8x128xbf16>, vector<128x512xbf16>, vector<8x512xf32> -> vector<8x512xf32>
    %553 = arith.addf %550, %552 : vector<8x512xf32>
    %554 = vector.extract_strided_slice %553 {offsets = [0, 0], sizes = [8, 128], strides = [1, 1]} : vector<8x512xf32> to vector<8x128xf32>
    %cst_292 = arith.constant 5.000000e-01 : f32
    %555 = vector.broadcast %cst_292 : f32 to vector<8x128xf32>
    %556 = arith.mulf %555, %554 : vector<8x128xf32>
    %557 = math.tanh %556 : vector<8x128xf32>
    %cst_293 = arith.constant 1.000000e+00 : f32
    %558 = vector.broadcast %cst_293 : f32 to vector<8x128xf32>
    %559 = arith.addf %557, %558 : vector<8x128xf32>
    %cst_294 = arith.constant 5.000000e-01 : f32
    %560 = vector.broadcast %cst_294 : f32 to vector<8x128xf32>
    %561 = arith.mulf %560, %559 : vector<8x128xf32>
    %562 = vector.extract_strided_slice %553 {offsets = [0, 128], sizes = [8, 128], strides = [1, 1]} : vector<8x512xf32> to vector<8x128xf32>
    %cst_295 = arith.constant 5.000000e-01 : f32
    %563 = vector.broadcast %cst_295 : f32 to vector<8x128xf32>
    %564 = arith.mulf %563, %562 : vector<8x128xf32>
    %565 = math.tanh %564 : vector<8x128xf32>
    %cst_296 = arith.constant 1.000000e+00 : f32
    %566 = vector.broadcast %cst_296 : f32 to vector<8x128xf32>
    %567 = arith.addf %565, %566 : vector<8x128xf32>
    %cst_297 = arith.constant 5.000000e-01 : f32
    %568 = vector.broadcast %cst_297 : f32 to vector<8x128xf32>
    %569 = arith.mulf %568, %567 : vector<8x128xf32>
    %570 = vector.extract_strided_slice %553 {offsets = [0, 256], sizes = [8, 128], strides = [1, 1]} : vector<8x512xf32> to vector<8x128xf32>
    %571 = math.tanh %570 : vector<8x128xf32>
    %572 = vector.extract_strided_slice %553 {offsets = [0, 384], sizes = [8, 128], strides = [1, 1]} : vector<8x512xf32> to vector<8x128xf32>
    %cst_298 = arith.constant 5.000000e-01 : f32
    %573 = vector.broadcast %cst_298 : f32 to vector<8x128xf32>
    %574 = arith.mulf %573, %572 : vector<8x128xf32>
    %575 = math.tanh %574 : vector<8x128xf32>
    %cst_299 = arith.constant 1.000000e+00 : f32
    %576 = vector.broadcast %cst_299 : f32 to vector<8x128xf32>
    %577 = arith.addf %575, %576 : vector<8x128xf32>
    %cst_300 = arith.constant 5.000000e-01 : f32
    %578 = vector.broadcast %cst_300 : f32 to vector<8x128xf32>
    %579 = arith.mulf %578, %577 : vector<8x128xf32>
    %580 = arith.mulf %569, %548 : vector<8x128xf32>
    %581 = arith.mulf %561, %571 : vector<8x128xf32>
    %582 = arith.addf %580, %581 : vector<8x128xf32>
    %583 = math.tanh %582 : vector<8x128xf32>
    %584 = arith.mulf %579, %583 : vector<8x128xf32>
    %c0_301 = arith.constant 0 : index
    %c0_302 = arith.constant 0 : index
    %585 = vector.load %arg13[%c0_301, %c0_302] : memref<8x128xf32, #tpu.memory_space<vmem>>, vector<8x128xf32>
    tpu.vector_store %arg13[%c0_301, %c0_302], %584 {strides = array<i32>} : memref<8x128xf32, #tpu.memory_space<vmem>>, vector<8x128xf32>,
    %c0_303 = arith.constant 0 : index
    %c0_304 = arith.constant 0 : index
    %586 = vector.load %arg14[%c0_303, %c0_304] : memref<8x128xf32, #tpu.memory_space<vmem>>, vector<8x128xf32>
    tpu.vector_store %arg14[%c0_303, %c0_304], %582 {strides = array<i32>} : memref<8x128xf32, #tpu.memory_space<vmem>>, vector<8x128xf32>,
    %c5_i32_305 = arith.constant 5 : i32
    %c8_i32_306 = arith.constant 8 : i32
    %587 = arith.muli %c5_i32_305, %c8_i32_306 : i32
    %588 = tpu.assume_multiple %587, 8 : i32
    %c0_307 = arith.constant 0 : index
    %c0_308 = arith.constant 0 : index
    %589 = vector.load %arg13[%c0_307, %c0_308] : memref<8x128xf32, #tpu.memory_space<vmem>>, vector<8x128xf32>
    %c0_309 = arith.constant 0 : index
    %c0_310 = arith.constant 0 : index
    %590 = vector.load %arg14[%c0_309, %c0_310] : memref<8x128xf32, #tpu.memory_space<vmem>>, vector<8x128xf32>
    %591 = arith.index_cast %588 : i32 to index
    %c0_311 = arith.constant 0 : index
    %592 = vector.load %arg12[%591, %c0_311] : memref<64x512xf32, #tpu.memory_space<vmem>>, vector<8x512xf32>
    %593 = arith.truncf %589 : vector<8x128xf32> to vector<8x128xbf16>
    %cst_312 = arith.constant dense<0.000000e+00> : vector<8x512xf32>
    %594 = tpu.matmul %593, %372, %cst_312 {dimension_numbers = #tpu.dot_dimension_numbers<[1], [0], [0], [1], [0, 0, 1, 1], [], []>} : vector<8x128xbf16>, vector<128x512xbf16>, vector<8x512xf32> -> vector<8x512xf32>
    %595 = arith.addf %592, %594 : vector<8x512xf32>
    %596 = vector.extract_strided_slice %595 {offsets = [0, 0], sizes = [8, 128], strides = [1, 1]} : vector<8x512xf32> to vector<8x128xf32>
    %cst_313 = arith.constant 5.000000e-01 : f32
    %597 = vector.broadcast %cst_313 : f32 to vector<8x128xf32>
    %598 = arith.mulf %597, %596 : vector<8x128xf32>
    %599 = math.tanh %598 : vector<8x128xf32>
    %cst_314 = arith.constant 1.000000e+00 : f32
    %600 = vector.broadcast %cst_314 : f32 to vector<8x128xf32>
    %601 = arith.addf %599, %600 : vector<8x128xf32>
    %cst_315 = arith.constant 5.000000e-01 : f32
    %602 = vector.broadcast %cst_315 : f32 to vector<8x128xf32>
    %603 = arith.mulf %602, %601 : vector<8x128xf32>
    %604 = vector.extract_strided_slice %595 {offsets = [0, 128], sizes = [8, 128], strides = [1, 1]} : vector<8x512xf32> to vector<8x128xf32>
    %cst_316 = arith.constant 5.000000e-01 : f32
    %605 = vector.broadcast %cst_316 : f32 to vector<8x128xf32>
    %606 = arith.mulf %605, %604 : vector<8x128xf32>
    %607 = math.tanh %606 : vector<8x128xf32>
    %cst_317 = arith.constant 1.000000e+00 : f32
    %608 = vector.broadcast %cst_317 : f32 to vector<8x128xf32>
    %609 = arith.addf %607, %608 : vector<8x128xf32>
    %cst_318 = arith.constant 5.000000e-01 : f32
    %610 = vector.broadcast %cst_318 : f32 to vector<8x128xf32>
    %611 = arith.mulf %610, %609 : vector<8x128xf32>
    %612 = vector.extract_strided_slice %595 {offsets = [0, 256], sizes = [8, 128], strides = [1, 1]} : vector<8x512xf32> to vector<8x128xf32>
    %613 = math.tanh %612 : vector<8x128xf32>
    %614 = vector.extract_strided_slice %595 {offsets = [0, 384], sizes = [8, 128], strides = [1, 1]} : vector<8x512xf32> to vector<8x128xf32>
    %cst_319 = arith.constant 5.000000e-01 : f32
    %615 = vector.broadcast %cst_319 : f32 to vector<8x128xf32>
    %616 = arith.mulf %615, %614 : vector<8x128xf32>
    %617 = math.tanh %616 : vector<8x128xf32>
    %cst_320 = arith.constant 1.000000e+00 : f32
    %618 = vector.broadcast %cst_320 : f32 to vector<8x128xf32>
    %619 = arith.addf %617, %618 : vector<8x128xf32>
    %cst_321 = arith.constant 5.000000e-01 : f32
    %620 = vector.broadcast %cst_321 : f32 to vector<8x128xf32>
    %621 = arith.mulf %620, %619 : vector<8x128xf32>
    %622 = arith.mulf %611, %590 : vector<8x128xf32>
    %623 = arith.mulf %603, %613 : vector<8x128xf32>
    %624 = arith.addf %622, %623 : vector<8x128xf32>
    %625 = math.tanh %624 : vector<8x128xf32>
    %626 = arith.mulf %621, %625 : vector<8x128xf32>
    %c0_322 = arith.constant 0 : index
    %c0_323 = arith.constant 0 : index
    %627 = vector.load %arg13[%c0_322, %c0_323] : memref<8x128xf32, #tpu.memory_space<vmem>>, vector<8x128xf32>
    tpu.vector_store %arg13[%c0_322, %c0_323], %626 {strides = array<i32>} : memref<8x128xf32, #tpu.memory_space<vmem>>, vector<8x128xf32>,
    %c0_324 = arith.constant 0 : index
    %c0_325 = arith.constant 0 : index
    %628 = vector.load %arg14[%c0_324, %c0_325] : memref<8x128xf32, #tpu.memory_space<vmem>>, vector<8x128xf32>
    tpu.vector_store %arg14[%c0_324, %c0_325], %624 {strides = array<i32>} : memref<8x128xf32, #tpu.memory_space<vmem>>, vector<8x128xf32>,
    %c6_i32_326 = arith.constant 6 : i32
    %c8_i32_327 = arith.constant 8 : i32
    %629 = arith.muli %c6_i32_326, %c8_i32_327 : i32
    %630 = tpu.assume_multiple %629, 8 : i32
    %c0_328 = arith.constant 0 : index
    %c0_329 = arith.constant 0 : index
    %631 = vector.load %arg13[%c0_328, %c0_329] : memref<8x128xf32, #tpu.memory_space<vmem>>, vector<8x128xf32>
    %c0_330 = arith.constant 0 : index
    %c0_331 = arith.constant 0 : index
    %632 = vector.load %arg14[%c0_330, %c0_331] : memref<8x128xf32, #tpu.memory_space<vmem>>, vector<8x128xf32>
    %633 = arith.index_cast %630 : i32 to index
    %c0_332 = arith.constant 0 : index
    %634 = vector.load %arg12[%633, %c0_332] : memref<64x512xf32, #tpu.memory_space<vmem>>, vector<8x512xf32>
    %635 = arith.truncf %631 : vector<8x128xf32> to vector<8x128xbf16>
    %cst_333 = arith.constant dense<0.000000e+00> : vector<8x512xf32>
    %636 = tpu.matmul %635, %372, %cst_333 {dimension_numbers = #tpu.dot_dimension_numbers<[1], [0], [0], [1], [0, 0, 1, 1], [], []>} : vector<8x128xbf16>, vector<128x512xbf16>, vector<8x512xf32> -> vector<8x512xf32>
    %637 = arith.addf %634, %636 : vector<8x512xf32>
    %638 = vector.extract_strided_slice %637 {offsets = [0, 0], sizes = [8, 128], strides = [1, 1]} : vector<8x512xf32> to vector<8x128xf32>
    %cst_334 = arith.constant 5.000000e-01 : f32
    %639 = vector.broadcast %cst_334 : f32 to vector<8x128xf32>
    %640 = arith.mulf %639, %638 : vector<8x128xf32>
    %641 = math.tanh %640 : vector<8x128xf32>
    %cst_335 = arith.constant 1.000000e+00 : f32
    %642 = vector.broadcast %cst_335 : f32 to vector<8x128xf32>
    %643 = arith.addf %641, %642 : vector<8x128xf32>
    %cst_336 = arith.constant 5.000000e-01 : f32
    %644 = vector.broadcast %cst_336 : f32 to vector<8x128xf32>
    %645 = arith.mulf %644, %643 : vector<8x128xf32>
    %646 = vector.extract_strided_slice %637 {offsets = [0, 128], sizes = [8, 128], strides = [1, 1]} : vector<8x512xf32> to vector<8x128xf32>
    %cst_337 = arith.constant 5.000000e-01 : f32
    %647 = vector.broadcast %cst_337 : f32 to vector<8x128xf32>
    %648 = arith.mulf %647, %646 : vector<8x128xf32>
    %649 = math.tanh %648 : vector<8x128xf32>
    %cst_338 = arith.constant 1.000000e+00 : f32
    %650 = vector.broadcast %cst_338 : f32 to vector<8x128xf32>
    %651 = arith.addf %649, %650 : vector<8x128xf32>
    %cst_339 = arith.constant 5.000000e-01 : f32
    %652 = vector.broadcast %cst_339 : f32 to vector<8x128xf32>
    %653 = arith.mulf %652, %651 : vector<8x128xf32>
    %654 = vector.extract_strided_slice %637 {offsets = [0, 256], sizes = [8, 128], strides = [1, 1]} : vector<8x512xf32> to vector<8x128xf32>
    %655 = math.tanh %654 : vector<8x128xf32>
    %656 = vector.extract_strided_slice %637 {offsets = [0, 384], sizes = [8, 128], strides = [1, 1]} : vector<8x512xf32> to vector<8x128xf32>
    %cst_340 = arith.constant 5.000000e-01 : f32
    %657 = vector.broadcast %cst_340 : f32 to vector<8x128xf32>
    %658 = arith.mulf %657, %656 : vector<8x128xf32>
    %659 = math.tanh %658 : vector<8x128xf32>
    %cst_341 = arith.constant 1.000000e+00 : f32
    %660 = vector.broadcast %cst_341 : f32 to vector<8x128xf32>
    %661 = arith.addf %659, %660 : vector<8x128xf32>
    %cst_342 = arith.constant 5.000000e-01 : f32
    %662 = vector.broadcast %cst_342 : f32 to vector<8x128xf32>
    %663 = arith.mulf %662, %661 : vector<8x128xf32>
    %664 = arith.mulf %653, %632 : vector<8x128xf32>
    %665 = arith.mulf %645, %655 : vector<8x128xf32>
    %666 = arith.addf %664, %665 : vector<8x128xf32>
    %667 = math.tanh %666 : vector<8x128xf32>
    %668 = arith.mulf %663, %667 : vector<8x128xf32>
    %c0_343 = arith.constant 0 : index
    %c0_344 = arith.constant 0 : index
    %669 = vector.load %arg13[%c0_343, %c0_344] : memref<8x128xf32, #tpu.memory_space<vmem>>, vector<8x128xf32>
    tpu.vector_store %arg13[%c0_343, %c0_344], %668 {strides = array<i32>} : memref<8x128xf32, #tpu.memory_space<vmem>>, vector<8x128xf32>,
    %c0_345 = arith.constant 0 : index
    %c0_346 = arith.constant 0 : index
    %670 = vector.load %arg14[%c0_345, %c0_346] : memref<8x128xf32, #tpu.memory_space<vmem>>, vector<8x128xf32>
    tpu.vector_store %arg14[%c0_345, %c0_346], %666 {strides = array<i32>} : memref<8x128xf32, #tpu.memory_space<vmem>>, vector<8x128xf32>,
    %c7_i32_347 = arith.constant 7 : i32
    %c8_i32_348 = arith.constant 8 : i32
    %671 = arith.muli %c7_i32_347, %c8_i32_348 : i32
    %672 = tpu.assume_multiple %671, 8 : i32
    %c0_349 = arith.constant 0 : index
    %c0_350 = arith.constant 0 : index
    %673 = vector.load %arg13[%c0_349, %c0_350] : memref<8x128xf32, #tpu.memory_space<vmem>>, vector<8x128xf32>
    %c0_351 = arith.constant 0 : index
    %c0_352 = arith.constant 0 : index
    %674 = vector.load %arg14[%c0_351, %c0_352] : memref<8x128xf32, #tpu.memory_space<vmem>>, vector<8x128xf32>
    %675 = arith.index_cast %672 : i32 to index
    %c0_353 = arith.constant 0 : index
    %676 = vector.load %arg12[%675, %c0_353] : memref<64x512xf32, #tpu.memory_space<vmem>>, vector<8x512xf32>
    %677 = arith.truncf %673 : vector<8x128xf32> to vector<8x128xbf16>
    %cst_354 = arith.constant dense<0.000000e+00> : vector<8x512xf32>
    %678 = tpu.matmul %677, %372, %cst_354 {dimension_numbers = #tpu.dot_dimension_numbers<[1], [0], [0], [1], [0, 0, 1, 1], [], []>} : vector<8x128xbf16>, vector<128x512xbf16>, vector<8x512xf32> -> vector<8x512xf32>
    %679 = arith.addf %676, %678 : vector<8x512xf32>
    %680 = vector.extract_strided_slice %679 {offsets = [0, 0], sizes = [8, 128], strides = [1, 1]} : vector<8x512xf32> to vector<8x128xf32>
    %cst_355 = arith.constant 5.000000e-01 : f32
    %681 = vector.broadcast %cst_355 : f32 to vector<8x128xf32>
    %682 = arith.mulf %681, %680 : vector<8x128xf32>
    %683 = math.tanh %682 : vector<8x128xf32>
    %cst_356 = arith.constant 1.000000e+00 : f32
    %684 = vector.broadcast %cst_356 : f32 to vector<8x128xf32>
    %685 = arith.addf %683, %684 : vector<8x128xf32>
    %cst_357 = arith.constant 5.000000e-01 : f32
    %686 = vector.broadcast %cst_357 : f32 to vector<8x128xf32>
    %687 = arith.mulf %686, %685 : vector<8x128xf32>
    %688 = vector.extract_strided_slice %679 {offsets = [0, 128], sizes = [8, 128], strides = [1, 1]} : vector<8x512xf32> to vector<8x128xf32>
    %cst_358 = arith.constant 5.000000e-01 : f32
    %689 = vector.broadcast %cst_358 : f32 to vector<8x128xf32>
    %690 = arith.mulf %689, %688 : vector<8x128xf32>
    %691 = math.tanh %690 : vector<8x128xf32>
    %cst_359 = arith.constant 1.000000e+00 : f32
    %692 = vector.broadcast %cst_359 : f32 to vector<8x128xf32>
    %693 = arith.addf %691, %692 : vector<8x128xf32>
    %cst_360 = arith.constant 5.000000e-01 : f32
    %694 = vector.broadcast %cst_360 : f32 to vector<8x128xf32>
    %695 = arith.mulf %694, %693 : vector<8x128xf32>
    %696 = vector.extract_strided_slice %679 {offsets = [0, 256], sizes = [8, 128], strides = [1, 1]} : vector<8x512xf32> to vector<8x128xf32>
    %697 = math.tanh %696 : vector<8x128xf32>
    %698 = vector.extract_strided_slice %679 {offsets = [0, 384], sizes = [8, 128], strides = [1, 1]} : vector<8x512xf32> to vector<8x128xf32>
    %cst_361 = arith.constant 5.000000e-01 : f32
    %699 = vector.broadcast %cst_361 : f32 to vector<8x128xf32>
    %700 = arith.mulf %699, %698 : vector<8x128xf32>
    %701 = math.tanh %700 : vector<8x128xf32>
    %cst_362 = arith.constant 1.000000e+00 : f32
    %702 = vector.broadcast %cst_362 : f32 to vector<8x128xf32>
    %703 = arith.addf %701, %702 : vector<8x128xf32>
    %cst_363 = arith.constant 5.000000e-01 : f32
    %704 = vector.broadcast %cst_363 : f32 to vector<8x128xf32>
    %705 = arith.mulf %704, %703 : vector<8x128xf32>
    %706 = arith.mulf %695, %674 : vector<8x128xf32>
    %707 = arith.mulf %687, %697 : vector<8x128xf32>
    %708 = arith.addf %706, %707 : vector<8x128xf32>
    %709 = math.tanh %708 : vector<8x128xf32>
    %710 = arith.mulf %705, %709 : vector<8x128xf32>
    %c0_364 = arith.constant 0 : index
    %c0_365 = arith.constant 0 : index
    %711 = vector.load %arg13[%c0_364, %c0_365] : memref<8x128xf32, #tpu.memory_space<vmem>>, vector<8x128xf32>
    tpu.vector_store %arg13[%c0_364, %c0_365], %710 {strides = array<i32>} : memref<8x128xf32, #tpu.memory_space<vmem>>, vector<8x128xf32>,
    %c0_366 = arith.constant 0 : index
    %c0_367 = arith.constant 0 : index
    %712 = vector.load %arg14[%c0_366, %c0_367] : memref<8x128xf32, #tpu.memory_space<vmem>>, vector<8x128xf32>
    tpu.vector_store %arg14[%c0_366, %c0_367], %708 {strides = array<i32>} : memref<8x128xf32, #tpu.memory_space<vmem>>, vector<8x128xf32>,
    %c8_i32_368 = arith.constant 8 : i32
    %c0_369 = arith.constant 0 : index
    %c0_370 = arith.constant 0 : index
    %713 = vector.load %arg13[%c0_369, %c0_370] : memref<8x128xf32, #tpu.memory_space<vmem>>, vector<8x128xf32>
    %714 = arith.truncf %713 : vector<8x128xf32> to vector<8x128xbf16>
    %c0_371 = arith.constant 0 : index
    %c0_372 = arith.constant 0 : index
    %715 = vector.load %arg8[%c0_371, %c0_372] : memref<128x128xbf16, #tpu.memory_space<vmem>>, vector<128x128xbf16>
    %cst_373 = arith.constant dense<0.000000e+00> : vector<8x128xf32>
    %716 = tpu.matmul %714, %715, %cst_373 {dimension_numbers = #tpu.dot_dimension_numbers<[1], [0], [0], [1], [0, 0, 1, 1], [], []>} : vector<8x128xbf16>, vector<128x128xbf16>, vector<8x128xf32> -> vector<8x128xf32>
    %c0_374 = arith.constant 0 : index
    %c0_375 = arith.constant 0 : index
    %717 = vector.load %arg9[%c0_374, %c0_375] : memref<1x128xf32, #tpu.memory_space<vmem>>, vector<1x128xf32>
    %718 = vector.broadcast %717 : vector<1x128xf32> to vector<8x128xf32>
    %719 = arith.addf %716, %718 : vector<8x128xf32>
    %c0_376 = arith.constant 0 : index
    %c0_377 = arith.constant 0 : index
    %720 = vector.load %arg10[%c0_376, %c0_377] : memref<8x128xf32, #tpu.memory_space<vmem>>, vector<8x128xf32>
    tpu.vector_store %arg10[%c0_376, %c0_377], %719 {strides = array<i32>} : memref<8x128xf32, #tpu.memory_space<vmem>>, vector<8x128xf32>,
    return
  }
  func.func @transform_0(%arg0: i32) -> (i32, i32) {
    %c0_i32 = arith.constant 0 : i32
    %c0_i32_0 = arith.constant 0 : i32
    %c0_i32_1 = arith.constant 0 : i32
    return %c0_i32, %c0_i32_0 : i32, i32
  }
  func.func @transform_1(%arg0: i32) -> (i32, i32) {
    %c0_i32 = arith.constant 0 : i32
    %c0_i32_0 = arith.constant 0 : i32
    %c0_i32_1 = arith.constant 0 : i32
    return %c0_i32, %c0_i32_0 : i32, i32
  }
  func.func @transform_2(%arg0: i32) -> (i32, i32) {
    %c0_i32 = arith.constant 0 : i32
    %c0_i32_0 = arith.constant 0 : i32
    %c0_i32_1 = arith.constant 0 : i32
    return %c0_i32, %c0_i32_0 : i32, i32
  }
  func.func @transform_3(%arg0: i32) -> (i32, i32) {
    %c0_i32 = arith.constant 0 : i32
    %c0_i32_0 = arith.constant 0 : i32
    %c0_i32_1 = arith.constant 0 : i32
    return %c0_i32, %c0_i32_0 : i32, i32
  }
  func.func @transform_4(%arg0: i32) -> (i32, i32) {
    %c0_i32 = arith.constant 0 : i32
    %c0_i32_0 = arith.constant 0 : i32
    %c0_i32_1 = arith.constant 0 : i32
    return %c0_i32, %c0_i32_0 : i32, i32
  }
  func.func @transform_5(%arg0: i32) -> (i32, i32) {
    %c0_i32 = arith.constant 0 : i32
    %c0_i32_0 = arith.constant 0 : i32
    %c0_i32_1 = arith.constant 0 : i32
    return %c0_i32, %c0_i32_0 : i32, i32
  }
  func.func @transform_6(%arg0: i32) -> (i32, i32) {
    %c0_i32 = arith.constant 0 : i32
    %c0_i32_0 = arith.constant 0 : i32
    %c0_i32_1 = arith.constant 0 : i32
    return %c0_i32, %c0_i32_0 : i32, i32
  }
  func.func @transform_7(%arg0: i32) -> (i32, i32) {
    %c0_i32 = arith.constant 0 : i32
    %c0_i32_0 = arith.constant 0 : i32
    %c0_i32_1 = arith.constant 0 : i32
    return %c0_i32, %c0_i32_0 : i32, i32
  }
  func.func @transform_8(%arg0: i32) -> (i32, i32) {
    %c0_i32 = arith.constant 0 : i32
    %c0_i32_0 = arith.constant 0 : i32
    %c0_i32_1 = arith.constant 0 : i32
    return %c0_i32, %c0_i32_0 : i32, i32
  }
  func.func @transform_9(%arg0: i32) -> (i32, i32) {
    %c0_i32 = arith.constant 0 : i32
    %c0_i32_0 = arith.constant 0 : i32
    %c0_i32_1 = arith.constant 0 : i32
    return %c0_i32, %c0_i32_0 : i32, i32
  }
}

</mosaic_0001>

<llo_original>
// kernel: lstm_forward_pallas.1
$region0: #{lstm_forward_pallas.1}
  #allocation0 [shape = 'u32[]', space=smem, size = 0x4, offset = 0x4, fixed_abs, tag = 'smem constant byte address 0x4 - core index']
  #allocation1 [shape = 'u32[144,128]{1,0:T(1,128)}', space=vmem, size = 0x12000, scoped, tag = 'internal scratch']
  #allocation2 [shape = 'f32[64,128]{1,0:T(8,128)}', space=vmem, size = 0x8000, scoped, tag = 'scratch operand']
  #allocation3 [shape = 'f32[64,512]{1,0:T(8,128)}', space=vmem, size = 0x20000, scoped, tag = 'scratch operand']
  #allocation4 [shape = 'f32[8,128]{1,0:T(8,128)}', space=vmem, size = 0x1000, scoped, tag = 'scratch operand']
  #allocation5 [shape = 'f32[8,128]{1,0:T(8,128)}', space=vmem, size = 0x1000, scoped, tag = 'scratch operand']
  %s0 = inlined_call_operand.vmem [shape: bf16[64,128], index: 0, kind: input, shape index: {}]
  %s1 = inlined_call_operand.vmem [shape: bf16[128,512], index: 1, kind: input, shape index: {}]
  %s2 = inlined_call_operand.vmem [shape: bf16[128,512], index: 2, kind: input, shape index: {}]
  %s3 = inlined_call_operand.vmem [shape: f32[1,512], index: 3, kind: input, shape index: {}]
  %s4 = inlined_call_operand.vmem [shape: bf16[128,512], index: 4, kind: input, shape index: {}]
  %s5 = inlined_call_operand.vmem [shape: bf16[128,512], index: 5, kind: input, shape index: {}]
  %s6 = inlined_call_operand.vmem [shape: f32[1,512], index: 6, kind: input, shape index: {}]
  %s7 = inlined_call_operand.vmem [shape: bf16[128,128], index: 7, kind: input, shape index: {}]
  %s8 = inlined_call_operand.vmem [shape: f32[1,128], index: 8, kind: input, shape index: {}]
  %s9 = inlined_call_operand.vmem [shape: f32[8,128], index: 9, kind: output, shape index: {}]
  %s10 = sld [smem:[#allocation0]]
  $region46: #{lstm_forward_pallas.1} parent=0
    _
  %s12 = ssub.s32 1, %s10
  %s13 = scalar_select 0, %s12, %s10
  // Predicated region
  $region2: #{lstm_forward_pallas.1} parent=0 // pred_check
    _
  $region3: #{lstm_forward_pallas.1} parent=0 // pred_check_branch
    %15 = sbr.rel (0) target = $region5
  $region4: #{lstm_forward_pallas.1} parent=0 // pred_region
    _
  $region5: #{lstm_forward_pallas.1} parent=0 // pred_fallthru
    _
  // Predicated region
  $region6: #{lstm_forward_pallas.1} parent=0 // pred_check
    _
  $region7: #{lstm_forward_pallas.1} parent=0 // pred_check_branch
    %17 = sbr.rel (0) target = $region9
  $region8: #{lstm_forward_pallas.1} parent=0 // pred_region
    _
  $region9: #{lstm_forward_pallas.1} parent=0 // pred_fallthru
    _
  // Predicated region
  $region10: #{lstm_forward_pallas.1} parent=0 // pred_check
    _
  $region11: #{lstm_forward_pallas.1} parent=0 // pred_check_branch
    %19 = sbr.rel (0) target = $region13
  $region12: #{lstm_forward_pallas.1} parent=0 // pred_region
    _
  $region13: #{lstm_forward_pallas.1} parent=0 // pred_fallthru
    _
  // Predicated region
  $region14: #{lstm_forward_pallas.1} parent=0 // pred_check
    _
  $region15: #{lstm_forward_pallas.1} parent=0 // pred_check_branch
    %21 = sbr.rel (0) target = $region17
  $region16: #{lstm_forward_pallas.1} parent=0 // pred_region
    _
  $region17: #{lstm_forward_pallas.1} parent=0 // pred_fallthru
    _
  // Predicated region
  $region18: #{lstm_forward_pallas.1} parent=0 // pred_check
    _
  $region19: #{lstm_forward_pallas.1} parent=0 // pred_check_branch
    %23 = sbr.rel (0) target = $region21
  $region20: #{lstm_forward_pallas.1} parent=0 // pred_region
    _
  $region21: #{lstm_forward_pallas.1} parent=0 // pred_fallthru
    _
  // Predicated region
  $region22: #{lstm_forward_pallas.1} parent=0 // pred_check
    _
  $region23: #{lstm_forward_pallas.1} parent=0 // pred_check_branch
    %25 = sbr.rel (0) target = $region25
  $region24: #{lstm_forward_pallas.1} parent=0 // pred_region
    _
  $region25: #{lstm_forward_pallas.1} parent=0 // pred_fallthru
    _
  // Predicated region
  $region26: #{lstm_forward_pallas.1} parent=0 // pred_check
    _
  $region27: #{lstm_forward_pallas.1} parent=0 // pred_check_branch
    %27 = sbr.rel (0) target = $region29
  $region28: #{lstm_forward_pallas.1} parent=0 // pred_region
    _
  $region29: #{lstm_forward_pallas.1} parent=0 // pred_fallthru
    _
  // Predicated region
  $region30: #{lstm_forward_pallas.1} parent=0 // pred_check
    _
  $region31: #{lstm_forward_pallas.1} parent=0 // pred_check_branch
    %29 = sbr.rel (0) target = $region33
  $region32: #{lstm_forward_pallas.1} parent=0 // pred_region
    _
  $region33: #{lstm_forward_pallas.1} parent=0 // pred_fallthru
    _
  // Predicated region
  $region34: #{lstm_forward_pallas.1} parent=0 // pred_check
    _
  $region35: #{lstm_forward_pallas.1} parent=0 // pred_check_branch
    %31 = sbr.rel (0) target = $region37
  $region36: #{lstm_forward_pallas.1} parent=0 // pred_region
    _
  $region37: #{lstm_forward_pallas.1} parent=0 // pred_fallthru
    _
  %v33 = vld [vmem:[%s0] sm:$0xf]
  %v34 = vld [vmem:[%s0 + $0x4] sm:$0xf]
  %v35 = vld [vmem:[%s0 + $0x8] sm:$0xf]
  %v36 = vld [vmem:[%s0 + $0xc] sm:$0xf]
  %v37 = vld [vmem:[%s0 + $0x10] sm:$0xf]
  %v38 = vld [vmem:[%s0 + $0x14] sm:$0xf]
  %v39 = vld [vmem:[%s0 + $0x18] sm:$0xf]
  %v40 = vld [vmem:[%s0 + $0x1c] sm:$0xf]
  %v41 = vld [vmem:[%s1] sm:$0xff]
  %v42 = vld [vmem:[%s1 + $0x8] sm:$0xff]
  %v43 = vld [vmem:[%s1 + $0x10] sm:$0xff]
  %v44 = vld [vmem:[%s1 + $0x18] sm:$0xff]
  %v45 = vld [vmem:[%s1 + $0x20] sm:$0xff]
  %v46 = vld [vmem:[%s1 + $0x28] sm:$0xff]
  %v47 = vld [vmem:[%s1 + $0x30] sm:$0xff]
  %v48 = vld [vmem:[%s1 + $0x38] sm:$0xff]
  %v49 = vld [vmem:[%s1 + $0x40] sm:$0xff]
  %v50 = vld [vmem:[%s1 + $0x48] sm:$0xff]
  %v51 = vld [vmem:[%s1 + $0x50] sm:$0xff]
  %v52 = vld [vmem:[%s1 + $0x58] sm:$0xff]
  %v53 = vld [vmem:[%s1 + $0x60] sm:$0xff]
  %v54 = vld [vmem:[%s1 + $0x68] sm:$0xff]
  %v55 = vld [vmem:[%s1 + $0x70] sm:$0xff]
  %v56 = vld [vmem:[%s1 + $0x78] sm:$0xff]
  %v57 = vld [vmem:[%s1 + $0x80] sm:$0xff]
  %v58 = vld [vmem:[%s1 + $0x88] sm:$0xff]
  %v59 = vld [vmem:[%s1 + $0x90] sm:$0xff]
  %v60 = vld [vmem:[%s1 + $0x98] sm:$0xff]
  %v61 = vld [vmem:[%s1 + $0xa0] sm:$0xff]
  %v62 = vld [vmem:[%s1 + $0xa8] sm:$0xff]
  %v63 = vld [vmem:[%s1 + $0xb0] sm:$0xff]
  %v64 = vld [vmem:[%s1 + $0xb8] sm:$0xff]
  %v65 = vld [vmem:[%s1 + $0xc0] sm:$0xff]
  %v66 = vld [vmem:[%s1 + $0xc8] sm:$0xff]
  %v67 = vld [vmem:[%s1 + $0xd0] sm:$0xff]
  %v68 = vld [vmem:[%s1 + $0xd8] sm:$0xff]
  %v69 = vld [vmem:[%s1 + $0xe0] sm:$0xff]
  %v70 = vld [vmem:[%s1 + $0xe8] sm:$0xff]
  %v71 = vld [vmem:[%s1 + $0xf0] sm:$0xff]
  %v72 = vld [vmem:[%s1 + $0xf8] sm:$0xff]
  %v73 = vld [vmem:[%s3] sm:$0xf]
  %v75 = vlaneseq
  %v76 = vshrl.u32 %v75, 7
  %v77 = vsub.s32 0, %v76
  %v78 = vrot.slane %v73, %v77
  %v79 = vlaneseq
  %v80 = vshrl.u32 %v79, 7
  %v81 = vsub.s32 1, %v80
  %v82 = vrot.slane %v73, %v81
  %v83 = vlaneseq
  %v84 = vshrl.u32 %v83, 7
  %v85 = vsub.s32 2, %v84
  %v86 = vrot.slane %v73, %v85
  %v87 = vlaneseq
  %v88 = vshrl.u32 %v87, 7
  %v89 = vsub.s32 3, %v88
  %v90 = vrot.slane %v73, %v89
  %v103 = vunpack.c.l.b16 %v33
  %v104 = vunpack.c.l.b16 %v34
  %v105 = vunpack.c.l.b16 %v35
  %v106 = vunpack.c.l.b16 %v36
  %v107 = vunpack.c.l.b16 %v37
  %v108 = vunpack.c.l.b16 %v38
  %v109 = vunpack.c.l.b16 %v39
  %v110 = vunpack.c.l.b16 %v40
  %v111 = vpack.c.b16 %v104, %v103
  %v112 = vpack.c.b16 %v106, %v105
  %v113 = vpack.c.b16 %v108, %v107
  %v114 = vpack.c.b16 %v110, %v109
  %v151 = vunpack.c.l.b16 %v41
  %v152 = vunpack.c.h.b16 %v41
  %v153 = vunpack.c.l.b16 %v42
  %v154 = vunpack.c.h.b16 %v42
  %v155 = vunpack.c.l.b16 %v43
  %v156 = vunpack.c.h.b16 %v43
  %v157 = vunpack.c.l.b16 %v44
  %v158 = vunpack.c.h.b16 %v44
  %v159 = vunpack.c.l.b16 %v45
  %v160 = vunpack.c.h.b16 %v45
  %v161 = vunpack.c.l.b16 %v46
  %v162 = vunpack.c.h.b16 %v46
  %v163 = vunpack.c.l.b16 %v47
  %v164 = vunpack.c.h.b16 %v47
  %v165 = vunpack.c.l.b16 %v48
  %v166 = vunpack.c.h.b16 %v48
  %v167 = vunpack.c.l.b16 %v49
  %v168 = vunpack.c.h.b16 %v49
  %v169 = vunpack.c.l.b16 %v50
  %v170 = vunpack.c.h.b16 %v50
  %v171 = vunpack.c.l.b16 %v51
  %v172 = vunpack.c.h.b16 %v51
  %v173 = vunpack.c.l.b16 %v52
  %v174 = vunpack.c.h.b16 %v52
  %v175 = vunpack.c.l.b16 %v53
  %v176 = vunpack.c.h.b16 %v53
  %v177 = vunpack.c.l.b16 %v54
  %v178 = vunpack.c.h.b16 %v54
  %v179 = vunpack.c.l.b16 %v55
  %v180 = vunpack.c.h.b16 %v55
  %v181 = vunpack.c.l.b16 %v56
  %v182 = vunpack.c.h.b16 %v56
  %v183 = vunpack.c.l.b16 %v57
  %v184 = vunpack.c.h.b16 %v57
  %v185 = vunpack.c.l.b16 %v58
  %v186 = vunpack.c.h.b16 %v58
  %v187 = vunpack.c.l.b16 %v59
  %v188 = vunpack.c.h.b16 %v59
  %v189 = vunpack.c.l.b16 %v60
  %v190 = vunpack.c.h.b16 %v60
  %v191 = vunpack.c.l.b16 %v61
  %v192 = vunpack.c.h.b16 %v61
  %v193 = vunpack.c.l.b16 %v62
  %v194 = vunpack.c.h.b16 %v62
  %v195 = vunpack.c.l.b16 %v63
  %v196 = vunpack.c.h.b16 %v63
  %v197 = vunpack.c.l.b16 %v64
  %v198 = vunpack.c.h.b16 %v64
  %v199 = vunpack.c.l.b16 %v65
  %v200 = vunpack.c.h.b16 %v65
  %v201 = vunpack.c.l.b16 %v66
  %v202 = vunpack.c.h.b16 %v66
  %v203 = vunpack.c.l.b16 %v67
  %v204 = vunpack.c.h.b16 %v67
  %v205 = vunpack.c.l.b16 %v68
  %v206 = vunpack.c.h.b16 %v68
  %v207 = vunpack.c.l.b16 %v69
  %v208 = vunpack.c.h.b16 %v69
  %v209 = vunpack.c.l.b16 %v70
  %v210 = vunpack.c.h.b16 %v70
  %v211 = vunpack.c.l.b16 %v71
  %v212 = vunpack.c.h.b16 %v71
  %v213 = vunpack.c.l.b16 %v72
  %v214 = vunpack.c.h.b16 %v72
  %v215 = vpack.c.b16 %v155, %v151
  %v216 = vpack.c.b16 %v156, %v152
  %v217 = vpack.c.b16 %v157, %v153
  %v218 = vpack.c.b16 %v158, %v154
  %v219 = vpack.c.b16 %v163, %v159
  %v220 = vpack.c.b16 %v164, %v160
  %v221 = vpack.c.b16 %v165, %v161
  %v222 = vpack.c.b16 %v166, %v162
  %v223 = vpack.c.b16 %v171, %v167
  %v224 = vpack.c.b16 %v172, %v168
  %v225 = vpack.c.b16 %v173, %v169
  %v226 = vpack.c.b16 %v174, %v170
  %v227 = vpack.c.b16 %v179, %v175
  %v228 = vpack.c.b16 %v180, %v176
  %v229 = vpack.c.b16 %v181, %v177
  %v230 = vpack.c.b16 %v182, %v178
  %v231 = vpack.c.b16 %v187, %v183
  %v232 = vpack.c.b16 %v188, %v184
  %v233 = vpack.c.b16 %v189, %v185
  %v234 = vpack.c.b16 %v190, %v186
  %v235 = vpack.c.b16 %v195, %v191
  %v236 = vpack.c.b16 %v196, %v192
  %v237 = vpack.c.b16 %v197, %v193
  %v238 = vpack.c.b16 %v198, %v194
  %v239 = vpack.c.b16 %v203, %v199
  %v240 = vpack.c.b16 %v204, %v200
  %v241 = vpack.c.b16 %v205, %v201
  %v242 = vpack.c.b16 %v206, %v202
  %v243 = vpack.c.b16 %v211, %v207
  %v244 = vpack.c.b16 %v212, %v208
  %v245 = vpack.c.b16 %v213, %v209
  %v246 = vpack.c.b16 %v214, %v210
  %279 = vmatprep.subr.bf16.mxu0 %v244
  %280 = vmatpush1.bf16.msra.mxu0 %v243
  %281 = vmatprep.subr.bf16.mxu0 %v240
  %282 = vmatpush1.bf16.msra.mxu0 %v239
  %283 = vmatprep.subr.bf16.mxu0 %v236
  %284 = vmatpush1.bf16.msra.mxu0 %v235
  %285 = vmatprep.subr.bf16.mxu0 %v232
  %286 = vmatpush1.bf16.msra.mxu0 %v231
  %287 = vmatprep.subr.bf16.mxu0 %v228
  %288 = vmatpush1.bf16.msra.mxu0 %v227
  %289 = vmatprep.subr.bf16.mxu0 %v224
  %290 = vmatpush1.bf16.msra.mxu0 %v223
  %291 = vmatprep.subr.bf16.mxu0 %v220
  %292 = vmatpush1.bf16.msra.mxu0 %v219
  %293 = vmatprep.subr.bf16.mxu0 %v216
  %294 = vmatpush1.bf16.msra.mxu0 %v215
  %295 = vmatprep.subr.bf16.mxu0 0
  %296 = vmatpush2.bf16.msra.mxu0 0
  %297 = vmatprep.subr.bf16.mxu0 0
  %298 = vmatpush2.bf16.msra.mxu0 0
  %299 = vmatprep.subr.bf16.mxu0 0
  %300 = vmatpush2.bf16.msra.mxu0 0
  %301 = vmatprep.subr.bf16.mxu0 0
  %302 = vmatpush2.bf16.msra.mxu0 0
  %303 = vmatprep.subr.bf16.mxu0 0
  %304 = vmatpush2.bf16.msra.mxu0 0
  %305 = vmatprep.subr.bf16.mxu0 0
  %306 = vmatpush2.bf16.msra.mxu0 0
  %307 = vmatprep.subr.bf16.mxu0 0
  %308 = vmatpush2.bf16.msra.mxu0 0
  %309 = vmatprep.subr.bf16.mxu0 0
  %310 = vmatpush2.bf16.msra.mxu0 0
  %311 = vmatprep.mubr.bf16.mxu0 0
  %312 = vmatmul.mubr.bf16.gmra.mxu0 %v111
  %v313 = vpop.f32.mrf.mxu0
  %v314 = vadd.f32 %v78, %v313
  %v315 = vpop.f32.mrf.mxu0
  %v316 = vadd.f32 %v82, %v315
  %v317 = vpop.f32.mrf.mxu0
  %v318 = vadd.f32 %v78, %v317
  %v319 = vpop.f32.mrf.mxu0
  %v320 = vadd.f32 %v82, %v319
  %321 = vmatprep.mubr.bf16.mxu0 0
  %322 = vmatmul.mubr.bf16.gmra.mxu0 %v112
  %v323 = vpop.f32.mrf.mxu0
  %v324 = vadd.f32 %v78, %v323
  %v325 = vpop.f32.mrf.mxu0
  %v326 = vadd.f32 %v82, %v325
  %v327 = vpop.f32.mrf.mxu0
  %v328 = vadd.f32 %v78, %v327
  %v329 = vpop.f32.mrf.mxu0
  %v330 = vadd.f32 %v82, %v329
  %331 = vmatprep.mubr.bf16.mxu0 0
  %332 = vmatmul.mubr.bf16.gmra.mxu0 %v113
  %v333 = vpop.f32.mrf.mxu0
  %v334 = vadd.f32 %v78, %v333
  %v335 = vpop.f32.mrf.mxu0
  %v336 = vadd.f32 %v82, %v335
  %v337 = vpop.f32.mrf.mxu0
  %v338 = vadd.f32 %v78, %v337
  %v339 = vpop.f32.mrf.mxu0
  %v340 = vadd.f32 %v82, %v339
  %341 = vmatprep.mubr.bf16.mxu0 0
  %342 = vmatmul.mubr.bf16.gmra.mxu0 %v114
  %v343 = vpop.f32.mrf.mxu0
  %v344 = vadd.f32 %v78, %v343
  %v345 = vpop.f32.mrf.mxu0
  %v346 = vadd.f32 %v82, %v345
  %v347 = vpop.f32.mrf.mxu0
  %v348 = vadd.f32 %v78, %v347
  %v349 = vpop.f32.mrf.mxu0
  %v350 = vadd.f32 %v82, %v349
  %351 = vdwg.mxu0
  %352 = vmatprep.subr.bf16.mxu0 %v246
  %353 = vmatpush1.bf16.msra.mxu0 %v245
  %354 = vmatprep.subr.bf16.mxu0 %v242
  %355 = vmatpush1.bf16.msra.mxu0 %v241
  %356 = vmatprep.subr.bf16.mxu0 %v238
  %357 = vmatpush1.bf16.msra.mxu0 %v237
  %358 = vmatprep.subr.bf16.mxu0 %v234
  %359 = vmatpush1.bf16.msra.mxu0 %v233
  %360 = vmatprep.subr.bf16.mxu0 %v230
  %361 = vmatpush1.bf16.msra.mxu0 %v229
  %362 = vmatprep.subr.bf16.mxu0 %v226
  %363 = vmatpush1.bf16.msra.mxu0 %v225
  %364 = vmatprep.subr.bf16.mxu0 %v222
  %365 = vmatpush1.bf16.msra.mxu0 %v221
  %366 = vmatprep.subr.bf16.mxu0 %v218
  %367 = vmatpush1.bf16.msra.mxu0 %v217
  %368 = vmatprep.subr.bf16.mxu0 0
  %369 = vmatpush2.bf16.msra.mxu0 0
  %370 = vmatprep.subr.bf16.mxu0 0
  %371 = vmatpush2.bf16.msra.mxu0 0
  %372 = vmatprep.subr.bf16.mxu0 0
  %373 = vmatpush2.bf16.msra.mxu0 0
  %374 = vmatprep.subr.bf16.mxu0 0
  %375 = vmatpush2.bf16.msra.mxu0 0
  %376 = vmatprep.subr.bf16.mxu0 0
  %377 = vmatpush2.bf16.msra.mxu0 0
  %378 = vmatprep.subr.bf16.mxu0 0
  %379 = vmatpush2.bf16.msra.mxu0 0
  %380 = vmatprep.subr.bf16.mxu0 0
  %381 = vmatpush2.bf16.msra.mxu0 0
  %382 = vmatprep.subr.bf16.mxu0 0
  %383 = vmatpush2.bf16.msra.mxu0 0
  %384 = vmatprep.mubr.bf16.mxu0 0
  %385 = vmatmul.mubr.bf16.gmra.mxu0 %v111
  %v386 = vpop.f32.mrf.mxu0
  %v387 = vadd.f32 %v86, %v386
  %v388 = vpop.f32.mrf.mxu0
  %v389 = vadd.f32 %v90, %v388
  %v390 = vpop.f32.mrf.mxu0
  %v391 = vadd.f32 %v86, %v390
  %v392 = vpop.f32.mrf.mxu0
  %v393 = vadd.f32 %v90, %v392
  %394 = vmatprep.mubr.bf16.mxu0 0
  %395 = vmatmul.mubr.bf16.gmra.mxu0 %v112
  %v396 = vpop.f32.mrf.mxu0
  %v397 = vadd.f32 %v86, %v396
  %v398 = vpop.f32.mrf.mxu0
  %v399 = vadd.f32 %v90, %v398
  %v400 = vpop.f32.mrf.mxu0
  %v401 = vadd.f32 %v86, %v400
  %v402 = vpop.f32.mrf.mxu0
  %v403 = vadd.f32 %v90, %v402
  %404 = vmatprep.mubr.bf16.mxu0 0
  %405 = vmatmul.mubr.bf16.gmra.mxu0 %v113
  %v406 = vpop.f32.mrf.mxu0
  %v407 = vadd.f32 %v86, %v406
  %v408 = vpop.f32.mrf.mxu0
  %v409 = vadd.f32 %v90, %v408
  %v410 = vpop.f32.mrf.mxu0
  %v411 = vadd.f32 %v86, %v410
  %v412 = vpop.f32.mrf.mxu0
  %v413 = vadd.f32 %v90, %v412
  %414 = vmatprep.mubr.bf16.mxu0 0
  %415 = vmatmul.mubr.bf16.gmra.mxu0 %v114
  %v416 = vpop.f32.mrf.mxu0
  %v417 = vadd.f32 %v86, %v416
  %v418 = vpop.f32.mrf.mxu0
  %v419 = vadd.f32 %v90, %v418
  %v420 = vpop.f32.mrf.mxu0
  %v421 = vadd.f32 %v86, %v420
  %v422 = vpop.f32.mrf.mxu0
  %v423 = vadd.f32 %v90, %v422
  %424 = vdwg.mxu0
  %425 = vst [vmem:[#allocation3] sm:$0xff] %v314
  %426 = vst [vmem:[#allocation3 + $0x8] sm:$0xff] %v316
  %427 = vst [vmem:[#allocation3 + $0x10] sm:$0xff] %v387
  %428 = vst [vmem:[#allocation3 + $0x18] sm:$0xff] %v389
  %429 = vst [vmem:[#allocation3 + $0x20] sm:$0xff] %v318
  %430 = vst [vmem:[#allocation3 + $0x28] sm:$0xff] %v320
  %431 = vst [vmem:[#allocation3 + $0x30] sm:$0xff] %v391
  %432 = vst [vmem:[#allocation3 + $0x38] sm:$0xff] %v393
  %433 = vst [vmem:[#allocation3 + $0x40] sm:$0xff] %v324
  %434 = vst [vmem:[#allocation3 + $0x48] sm:$0xff] %v326
  %435 = vst [vmem:[#allocation3 + $0x50] sm:$0xff] %v397
  %436 = vst [vmem:[#allocation3 + $0x58] sm:$0xff] %v399
  %437 = vst [vmem:[#allocation3 + $0x60] sm:$0xff] %v328
  %438 = vst [vmem:[#allocation3 + $0x68] sm:$0xff] %v330
  %439 = vst [vmem:[#allocation3 + $0x70] sm:$0xff] %v401
  %440 = vst [vmem:[#allocation3 + $0x78] sm:$0xff] %v403
  %441 = vst [vmem:[#allocation3 + $0x80] sm:$0xff] %v334
  %442 = vst [vmem:[#allocation3 + $0x88] sm:$0xff] %v336
  %443 = vst [vmem:[#allocation3 + $0x90] sm:$0xff] %v407
  %444 = vst [vmem:[#allocation3 + $0x98] sm:$0xff] %v409
  %445 = vst [vmem:[#allocation3 + $0xa0] sm:$0xff] %v338
  %446 = vst [vmem:[#allocation3 + $0xa8] sm:$0xff] %v340
  %447 = vst [vmem:[#allocation3 + $0xb0] sm:$0xff] %v411
  %448 = vst [vmem:[#allocation3 + $0xb8] sm:$0xff] %v413
  %449 = vst [vmem:[#allocation3 + $0xc0] sm:$0xff] %v344
  %450 = vst [vmem:[#allocation3 + $0xc8] sm:$0xff] %v346
  %451 = vst [vmem:[#allocation3 + $0xd0] sm:$0xff] %v417
  %452 = vst [vmem:[#allocation3 + $0xd8] sm:$0xff] %v419
  %453 = vst [vmem:[#allocation3 + $0xe0] sm:$0xff] %v348
  %454 = vst [vmem:[#allocation3 + $0xe8] sm:$0xff] %v350
  %455 = vst [vmem:[#allocation3 + $0xf0] sm:$0xff] %v421
  %456 = vst [vmem:[#allocation3 + $0xf8] sm:$0xff] %v423
  %v457 = vld [vmem:[%s2] sm:$0xff]
  %v458 = vld [vmem:[%s2 + $0x8] sm:$0xff]
  %v459 = vld [vmem:[%s2 + $0x10] sm:$0xff]
  %v460 = vld [vmem:[%s2 + $0x18] sm:$0xff]
  %v461 = vld [vmem:[%s2 + $0x20] sm:$0xff]
  %v462 = vld [vmem:[%s2 + $0x28] sm:$0xff]
  %v463 = vld [vmem:[%s2 + $0x30] sm:$0xff]
  %v464 = vld [vmem:[%s2 + $0x38] sm:$0xff]
  %v465 = vld [vmem:[%s2 + $0x40] sm:$0xff]
  %v466 = vld [vmem:[%s2 + $0x48] sm:$0xff]
  %v467 = vld [vmem:[%s2 + $0x50] sm:$0xff]
  %v468 = vld [vmem:[%s2 + $0x58] sm:$0xff]
  %v469 = vld [vmem:[%s2 + $0x60] sm:$0xff]
  %v470 = vld [vmem:[%s2 + $0x68] sm:$0xff]
  %v471 = vld [vmem:[%s2 + $0x70] sm:$0xff]
  %v472 = vld [vmem:[%s2 + $0x78] sm:$0xff]
  %v473 = vld [vmem:[%s2 + $0x80] sm:$0xff]
  %v474 = vld [vmem:[%s2 + $0x88] sm:$0xff]
  %v475 = vld [vmem:[%s2 + $0x90] sm:$0xff]
  %v476 = vld [vmem:[%s2 + $0x98] sm:$0xff]
  %v477 = vld [vmem:[%s2 + $0xa0] sm:$0xff]
  %v478 = vld [vmem:[%s2 + $0xa8] sm:$0xff]
  %v479 = vld [vmem:[%s2 + $0xb0] sm:$0xff]
  %v480 = vld [vmem:[%s2 + $0xb8] sm:$0xff]
  %v481 = vld [vmem:[%s2 + $0xc0] sm:$0xff]
  %v482 = vld [vmem:[%s2 + $0xc8] sm:$0xff]
  %v483 = vld [vmem:[%s2 + $0xd0] sm:$0xff]
  %v484 = vld [vmem:[%s2 + $0xd8] sm:$0xff]
  %v485 = vld [vmem:[%s2 + $0xe0] sm:$0xff]
  %v486 = vld [vmem:[%s2 + $0xe8] sm:$0xff]
  %v487 = vld [vmem:[%s2 + $0xf0] sm:$0xff]
  %v488 = vld [vmem:[%s2 + $0xf8] sm:$0xff]
  %489 = vst [vmem:[#allocation4] sm:$0xff] 0.0
  %490 = vst [vmem:[#allocation5] sm:$0xff] 0.0
  %v491 = vld [vmem:[#allocation4] sm:$0xff]
  %v492 = vld [vmem:[#allocation5] sm:$0xff]
  %s493 = smul.u32 0, 4
  %s494 = smul.addr %s493, 8
  %s495 = scalar_lea.vmem [#allocation3], %s494
  %v496 = vld [vmem:[%s495] sm:$0xff]
  %v497 = vld [vmem:[%s495 + $0x8] sm:$0xff]
  %v498 = vld [vmem:[%s495 + $0x10] sm:$0xff]
  %v499 = vld [vmem:[%s495 + $0x18] sm:$0xff]
  %v500 = vpack.c.bf16 %v491, %v491
  %v533 = vunpack.c.l.b16 %v457
  %v534 = vunpack.c.h.b16 %v457
  %v535 = vunpack.c.l.b16 %v458
  %v536 = vunpack.c.h.b16 %v458
  %v537 = vunpack.c.l.b16 %v459
  %v538 = vunpack.c.h.b16 %v459
  %v539 = vunpack.c.l.b16 %v460
  %v540 = vunpack.c.h.b16 %v460
  %v541 = vunpack.c.l.b16 %v461
  %v542 = vunpack.c.h.b16 %v461
  %v543 = vunpack.c.l.b16 %v462
  %v544 = vunpack.c.h.b16 %v462
  %v545 = vunpack.c.l.b16 %v463
  %v546 = vunpack.c.h.b16 %v463
  %v547 = vunpack.c.l.b16 %v464
  %v548 = vunpack.c.h.b16 %v464
  %v549 = vunpack.c.l.b16 %v465
  %v550 = vunpack.c.h.b16 %v465
  %v551 = vunpack.c.l.b16 %v466
  %v552 = vunpack.c.h.b16 %v466
  %v553 = vunpack.c.l.b16 %v467
  %v554 = vunpack.c.h.b16 %v467
  %v555 = vunpack.c.l.b16 %v468
  %v556 = vunpack.c.h.b16 %v468
  %v557 = vunpack.c.l.b16 %v469
  %v558 = vunpack.c.h.b16 %v469
  %v559 = vunpack.c.l.b16 %v470
  %v560 = vunpack.c.h.b16 %v470
  %v561 = vunpack.c.l.b16 %v471
  %v562 = vunpack.c.h.b16 %v471
  %v563 = vunpack.c.l.b16 %v472
  %v564 = vunpack.c.h.b16 %v472
  %v565 = vunpack.c.l.b16 %v473
  %v566 = vunpack.c.h.b16 %v473
  %v567 = vunpack.c.l.b16 %v474
  %v568 = vunpack.c.h.b16 %v474
  %v569 = vunpack.c.l.b16 %v475
  %v570 = vunpack.c.h.b16 %v475
  %v571 = vunpack.c.l.b16 %v476
  %v572 = vunpack.c.h.b16 %v476
  %v573 = vunpack.c.l.b16 %v477
  %v574 = vunpack.c.h.b16 %v477
  %v575 = vunpack.c.l.b16 %v478
  %v576 = vunpack.c.h.b16 %v478
  %v577 = vunpack.c.l.b16 %v479
  %v578 = vunpack.c.h.b16 %v479
  %v579 = vunpack.c.l.b16 %v480
  %v580 = vunpack.c.h.b16 %v480
  %v581 = vunpack.c.l.b16 %v481
  %v582 = vunpack.c.h.b16 %v481
  %v583 = vunpack.c.l.b16 %v482
  %v584 = vunpack.c.h.b16 %v482
  %v585 = vunpack.c.l.b16 %v483
  %v586 = vunpack.c.h.b16 %v483
  %v587 = vunpack.c.l.b16 %v484
  %v588 = vunpack.c.h.b16 %v484
  %v589 = vunpack.c.l.b16 %v485
  %v590 = vunpack.c.h.b16 %v485
  %v591 = vunpack.c.l.b16 %v486
  %v592 = vunpack.c.h.b16 %v486
  %v593 = vunpack.c.l.b16 %v487
  %v594 = vunpack.c.h.b16 %v487
  %v595 = vunpack.c.l.b16 %v488
  %v596 = vunpack.c.h.b16 %v488
  %v597 = vpack.c.b16 %v537, %v533
  %v598 = vpack.c.b16 %v538, %v534
  %v599 = vpack.c.b16 %v539, %v535
  %v600 = vpack.c.b16 %v540, %v536
  %v601 = vpack.c.b16 %v545, %v541
  %v602 = vpack.c.b16 %v546, %v542
  %v603 = vpack.c.b16 %v547, %v543
  %v604 = vpack.c.b16 %v548, %v544
  %v605 = vpack.c.b16 %v553, %v549
  %v606 = vpack.c.b16 %v554, %v550
  %v607 = vpack.c.b16 %v555, %v551
  %v608 = vpack.c.b16 %v556, %v552
  %v609 = vpack.c.b16 %v561, %v557
  %v610 = vpack.c.b16 %v562, %v558
  %v611 = vpack.c.b16 %v563, %v559
  %v612 = vpack.c.b16 %v564, %v560
  %v613 = vpack.c.b16 %v569, %v565
  %v614 = vpack.c.b16 %v570, %v566
  %v615 = vpack.c.b16 %v571, %v567
  %v616 = vpack.c.b16 %v572, %v568
  %v617 = vpack.c.b16 %v577, %v573
  %v618 = vpack.c.b16 %v578, %v574
  %v619 = vpack.c.b16 %v579, %v575
  %v620 = vpack.c.b16 %v580, %v576
  %v621 = vpack.c.b16 %v585, %v581
  %v622 = vpack.c.b16 %v586, %v582
  %v623 = vpack.c.b16 %v587, %v583
  %v624 = vpack.c.b16 %v588, %v584
  %v625 = vpack.c.b16 %v593, %v589
  %v626 = vpack.c.b16 %v594, %v590
  %v627 = vpack.c.b16 %v595, %v591
  %v628 = vpack.c.b16 %v596, %v592
  %661 = vmatprep.subr.bf16.mxu0 %v626
  %662 = vmatpush1.bf16.msra.mxu0 %v625
  %663 = vmatprep.subr.bf16.mxu0 %v622
  %664 = vmatpush1.bf16.msra.mxu0 %v621
  %665 = vmatprep.subr.bf16.mxu0 %v618
  %666 = vmatpush1.bf16.msra.mxu0 %v617
  %667 = vmatprep.subr.bf16.mxu0 %v614
  %668 = vmatpush1.bf16.msra.mxu0 %v613
  %669 = vmatprep.subr.bf16.mxu0 %v610
  %670 = vmatpush1.bf16.msra.mxu0 %v609
  %671 = vmatprep.subr.bf16.mxu0 %v606
  %672 = vmatpush1.bf16.msra.mxu0 %v605
  %673 = vmatprep.subr.bf16.mxu0 %v602
  %674 = vmatpush1.bf16.msra.mxu0 %v601
  %675 = vmatprep.subr.bf16.mxu0 %v598
  %676 = vmatpush1.bf16.msra.mxu0 %v597
  %677 = vmatprep.subr.bf16.mxu0 0
  %678 = vmatpush2.bf16.msra.mxu0 0
  %679 = vmatprep.subr.bf16.mxu0 0
  %680 = vmatpush2.bf16.msra.mxu0 0
  %681 = vmatprep.subr.bf16.mxu0 0
  %682 = vmatpush2.bf16.msra.mxu0 0
  %683 = vmatprep.subr.bf16.mxu0 0
  %684 = vmatpush2.bf16.msra.mxu0 0
  %685 = vmatprep.subr.bf16.mxu0 0
  %686 = vmatpush2.bf16.msra.mxu0 0
  %687 = vmatprep.subr.bf16.mxu0 0
  %688 = vmatpush2.bf16.msra.mxu0 0
  %689 = vmatprep.subr.bf16.mxu0 0
  %690 = vmatpush2.bf16.msra.mxu0 0
  %691 = vmatprep.subr.bf16.mxu0 0
  %692 = vmatpush2.bf16.msra.mxu0 0
  %693 = vmatprep.mubr.bf16.mxu0 0
  %694 = vmatmul.mubr.bf16.gmra.mxu0 %v500
  %v695 = vpop.f32.mrf.mxu0
  %v696 = vadd.f32 0.0, %v695
  %v697 = vpop.f32.mrf.mxu0
  %v698 = vadd.f32 0.0, %v697
  %v699 = vpop.f32.mrf.mxu0
  %v700 = vpop.f32.mrf.mxu0
  %701 = vdwg.mxu0
  %702 = vmatprep.subr.bf16.mxu0 %v628
  %703 = vmatpush1.bf16.msra.mxu0 %v627
  %704 = vmatprep.subr.bf16.mxu0 %v624
  %705 = vmatpush1.bf16.msra.mxu0 %v623
  %706 = vmatprep.subr.bf16.mxu0 %v620
  %707 = vmatpush1.bf16.msra.mxu0 %v619
  %708 = vmatprep.subr.bf16.mxu0 %v616
  %709 = vmatpush1.bf16.msra.mxu0 %v615
  %710 = vmatprep.subr.bf16.mxu0 %v612
  %711 = vmatpush1.bf16.msra.mxu0 %v611
  %712 = vmatprep.subr.bf16.mxu0 %v608
  %713 = vmatpush1.bf16.msra.mxu0 %v607
  %714 = vmatprep.subr.bf16.mxu0 %v604
  %715 = vmatpush1.bf16.msra.mxu0 %v603
  %716 = vmatprep.subr.bf16.mxu0 %v600
  %717 = vmatpush1.bf16.msra.mxu0 %v599
  %718 = vmatprep.subr.bf16.mxu0 0
  %719 = vmatpush2.bf16.msra.mxu0 0
  %720 = vmatprep.subr.bf16.mxu0 0
  %721 = vmatpush2.bf16.msra.mxu0 0
  %722 = vmatprep.subr.bf16.mxu0 0
  %723 = vmatpush2.bf16.msra.mxu0 0
  %724 = vmatprep.subr.bf16.mxu0 0
  %725 = vmatpush2.bf16.msra.mxu0 0
  %726 = vmatprep.subr.bf16.mxu0 0
  %727 = vmatpush2.bf16.msra.mxu0 0
  %728 = vmatprep.subr.bf16.mxu0 0
  %729 = vmatpush2.bf16.msra.mxu0 0
  %730 = vmatprep.subr.bf16.mxu0 0
  %731 = vmatpush2.bf16.msra.mxu0 0
  %732 = vmatprep.subr.bf16.mxu0 0
  %733 = vmatpush2.bf16.msra.mxu0 0
  %734 = vmatprep.mubr.bf16.mxu0 0
  %735 = vmatmul.mubr.bf16.gmra.mxu0 %v500
  %v736 = vpop.f32.mrf.mxu0
  %v737 = vadd.f32 0.0, %v736
  %v738 = vpop.f32.mrf.mxu0
  %v739 = vadd.f32 0.0, %v738
  %v740 = vpop.f32.mrf.mxu0
  %v741 = vpop.f32.mrf.mxu0
  %742 = vdwg.mxu0
  %v743 = vadd.f32 %v496, %v696
  %v744 = vadd.f32 %v497, %v698
  %v745 = vadd.f32 %v498, %v737
  %v746 = vadd.f32 %v499, %v739
  %v747 = vmul.f32 %v743, 0.5
  %v748 = vtanh.pop %v747
  %v749 = vadd.f32 %v748, 1.0
  %v750 = vmul.f32 %v749, 0.5
  %v751 = vmul.f32 %v744, 0.5
  %v752 = vtanh.pop %v751
  %v753 = vadd.f32 %v752, 1.0
  %v754 = vmul.f32 %v753, 0.5
  %v755 = vtanh.pop %v745
  %v756 = vmul.f32 %v746, 0.5
  %v757 = vtanh.pop %v756
  %v758 = vadd.f32 %v757, 1.0
  %v759 = vmul.f32 %v758, 0.5
  %v760 = vmul.f32 %v754, %v492
  %v761 = vmul.f32 %v750, %v755
  %v762 = vadd.f32 %v760, %v761
  %v763 = vtanh.pop %v762
  %v764 = vmul.f32 %v759, %v763
  %765 = vst [vmem:[#allocation4] sm:$0xff] %v764
  %766 = vst [vmem:[#allocation5] sm:$0xff] %v762
  %767 = vst [vmem:[#allocation2] sm:$0xff] %v764
  %v768 = vld [vmem:[#allocation4] sm:$0xff]
  %v769 = vld [vmem:[#allocation5] sm:$0xff]
  %s770 = smul.u32 1, 4
  %s771 = smul.addr %s770, 8
  %s772 = scalar_lea.vmem [#allocation3], %s771
  %v773 = vld [vmem:[%s772] sm:$0xff]
  %v774 = vld [vmem:[%s772 + $0x8] sm:$0xff]
  %v775 = vld [vmem:[%s772 + $0x10] sm:$0xff]
  %v776 = vld [vmem:[%s772 + $0x18] sm:$0xff]
  %v777 = vpack.c.bf16 %v768, %v768
  %778 = vmatprep.subr.bf16.mxu0 %v626
  %779 = vmatpush1.bf16.msra.mxu0 %v625
  %780 = vmatprep.subr.bf16.mxu0 %v622
  %781 = vmatpush1.bf16.msra.mxu0 %v621
  %782 = vmatprep.subr.bf16.mxu0 %v618
  %783 = vmatpush1.bf16.msra.mxu0 %v617
  %784 = vmatprep.subr.bf16.mxu0 %v614
  %785 = vmatpush1.bf16.msra.mxu0 %v613
  %786 = vmatprep.subr.bf16.mxu0 %v610
  %787 = vmatpush1.bf16.msra.mxu0 %v609
  %788 = vmatprep.subr.bf16.mxu0 %v606
  %789 = vmatpush1.bf16.msra.mxu0 %v605
  %790 = vmatprep.subr.bf16.mxu0 %v602
  %791 = vmatpush1.bf16.msra.mxu0 %v601
  %792 = vmatprep.subr.bf16.mxu0 %v598
  %793 = vmatpush1.bf16.msra.mxu0 %v597
  %794 = vmatprep.subr.bf16.mxu0 0
  %795 = vmatpush2.bf16.msra.mxu0 0
  %796 = vmatprep.subr.bf16.mxu0 0
  %797 = vmatpush2.bf16.msra.mxu0 0
  %798 = vmatprep.subr.bf16.mxu0 0
  %799 = vmatpush2.bf16.msra.mxu0 0
  %800 = vmatprep.subr.bf16.mxu0 0
  %801 = vmatpush2.bf16.msra.mxu0 0
  %802 = vmatprep.subr.bf16.mxu0 0
  %803 = vmatpush2.bf16.msra.mxu0 0
  %804 = vmatprep.subr.bf16.mxu0 0
  %805 = vmatpush2.bf16.msra.mxu0 0
  %806 = vmatprep.subr.bf16.mxu0 0
  %807 = vmatpush2.bf16.msra.mxu0 0
  %808 = vmatprep.subr.bf16.mxu0 0
  %809 = vmatpush2.bf16.msra.mxu0 0
  %810 = vmatprep.mubr.bf16.mxu0 0
  %811 = vmatmul.mubr.bf16.gmra.mxu0 %v777
  %v812 = vpop.f32.mrf.mxu0
  %v813 = vadd.f32 0.0, %v812
  %v814 = vpop.f32.mrf.mxu0
  %v815 = vadd.f32 0.0, %v814
  %v816 = vpop.f32.mrf.mxu0
  %v817 = vpop.f32.mrf.mxu0
  %818 = vdwg.mxu0
  %819 = vmatprep.subr.bf16.mxu0 %v628
  %820 = vmatpush1.bf16.msra.mxu0 %v627
  %821 = vmatprep.subr.bf16.mxu0 %v624
  %822 = vmatpush1.bf16.msra.mxu0 %v623
  %823 = vmatprep.subr.bf16.mxu0 %v620
  %824 = vmatpush1.bf16.msra.mxu0 %v619
  %825 = vmatprep.subr.bf16.mxu0 %v616
  %826 = vmatpush1.bf16.msra.mxu0 %v615
  %827 = vmatprep.subr.bf16.mxu0 %v612
  %828 = vmatpush1.bf16.msra.mxu0 %v611
  %829 = vmatprep.subr.bf16.mxu0 %v608
  %830 = vmatpush1.bf16.msra.mxu0 %v607
  %831 = vmatprep.subr.bf16.mxu0 %v604
  %832 = vmatpush1.bf16.msra.mxu0 %v603
  %833 = vmatprep.subr.bf16.mxu0 %v600
  %834 = vmatpush1.bf16.msra.mxu0 %v599
  %835 = vmatprep.subr.bf16.mxu0 0
  %836 = vmatpush2.bf16.msra.mxu0 0
  %837 = vmatprep.subr.bf16.mxu0 0
  %838 = vmatpush2.bf16.msra.mxu0 0
  %839 = vmatprep.subr.bf16.mxu0 0
  %840 = vmatpush2.bf16.msra.mxu0 0
  %841 = vmatprep.subr.bf16.mxu0 0
  %842 = vmatpush2.bf16.msra.mxu0 0
  %843 = vmatprep.subr.bf16.mxu0 0
  %844 = vmatpush2.bf16.msra.mxu0 0
  %845 = vmatprep.subr.bf16.mxu0 0
  %846 = vmatpush2.bf16.msra.mxu0 0
  %847 = vmatprep.subr.bf16.mxu0 0
  %848 = vmatpush2.bf16.msra.mxu0 0
  %849 = vmatprep.subr.bf16.mxu0 0
  %850 = vmatpush2.bf16.msra.mxu0 0
  %851 = vmatprep.mubr.bf16.mxu0 0
  %852 = vmatmul.mubr.bf16.gmra.mxu0 %v777
  %v853 = vpop.f32.mrf.mxu0
  %v854 = vadd.f32 0.0, %v853
  %v855 = vpop.f32.mrf.mxu0
  %v856 = vadd.f32 0.0, %v855
  %v857 = vpop.f32.mrf.mxu0
  %v858 = vpop.f32.mrf.mxu0
  %859 = vdwg.mxu0
  %v860 = vadd.f32 %v773, %v813
  %v861 = vadd.f32 %v774, %v815
  %v862 = vadd.f32 %v775, %v854
  %v863 = vadd.f32 %v776, %v856
  %v864 = vmul.f32 %v860, 0.5
  %v865 = vtanh.pop %v864
  %v866 = vadd.f32 %v865, 1.0
  %v867 = vmul.f32 %v866, 0.5
  %v868 = vmul.f32 %v861, 0.5
  %v869 = vtanh.pop %v868
  %v870 = vadd.f32 %v869, 1.0
  %v871 = vmul.f32 %v870, 0.5
  %v872 = vtanh.pop %v862
  %v873 = vmul.f32 %v863, 0.5
  %v874 = vtanh.pop %v873
  %v875 = vadd.f32 %v874, 1.0
  %v876 = vmul.f32 %v875, 0.5
  %v877 = vmul.f32 %v871, %v769
  %v878 = vmul.f32 %v867, %v872
  %v879 = vadd.f32 %v877, %v878
  %v880 = vtanh.pop %v879
  %v881 = vmul.f32 %v876, %v880
  %882 = vst [vmem:[#allocation4] sm:$0xff] %v881
  %883 = vst [vmem:[#allocation5] sm:$0xff] %v879
  %s884 = scalar_lea.vmem [#allocation2], 8
  %885 = vst [vmem:[%s884] sm:$0xff] %v881
  %v886 = vld [vmem:[#allocation4] sm:$0xff]
  %v887 = vld [vmem:[#allocation5] sm:$0xff]
  %s888 = smul.u32 2, 4
  %s889 = smul.addr %s888, 8
  %s890 = scalar_lea.vmem [#allocation3], %s889
  %v891 = vld [vmem:[%s890] sm:$0xff]
  %v892 = vld [vmem:[%s890 + $0x8] sm:$0xff]
  %v893 = vld [vmem:[%s890 + $0x10] sm:$0xff]
  %v894 = vld [vmem:[%s890 + $0x18] sm:$0xff]
  %v895 = vpack.c.bf16 %v886, %v886
  %896 = vmatprep.subr.bf16.mxu0 %v626
  %897 = vmatpush1.bf16.msra.mxu0 %v625
  %898 = vmatprep.subr.bf16.mxu0 %v622
  %899 = vmatpush1.bf16.msra.mxu0 %v621
  %900 = vmatprep.subr.bf16.mxu0 %v618
  %901 = vmatpush1.bf16.msra.mxu0 %v617
  %902 = vmatprep.subr.bf16.mxu0 %v614
  %903 = vmatpush1.bf16.msra.mxu0 %v613
  %904 = vmatprep.subr.bf16.mxu0 %v610
  %905 = vmatpush1.bf16.msra.mxu0 %v609
  %906 = vmatprep.subr.bf16.mxu0 %v606
  %907 = vmatpush1.bf16.msra.mxu0 %v605
  %908 = vmatprep.subr.bf16.mxu0 %v602
  %909 = vmatpush1.bf16.msra.mxu0 %v601
  %910 = vmatprep.subr.bf16.mxu0 %v598
  %911 = vmatpush1.bf16.msra.mxu0 %v597
  %912 = vmatprep.subr.bf16.mxu0 0
  %913 = vmatpush2.bf16.msra.mxu0 0
  %914 = vmatprep.subr.bf16.mxu0 0
  %915 = vmatpush2.bf16.msra.mxu0 0
  %916 = vmatprep.subr.bf16.mxu0 0
  %917 = vmatpush2.bf16.msra.mxu0 0
  %918 = vmatprep.subr.bf16.mxu0 0
  %919 = vmatpush2.bf16.msra.mxu0 0
  %920 = vmatprep.subr.bf16.mxu0 0
  %921 = vmatpush2.bf16.msra.mxu0 0
  %922 = vmatprep.subr.bf16.mxu0 0
  %923 = vmatpush2.bf16.msra.mxu0 0
  %924 = vmatprep.subr.bf16.mxu0 0
  %925 = vmatpush2.bf16.msra.mxu0 0
  %926 = vmatprep.subr.bf16.mxu0 0
  %927 = vmatpush2.bf16.msra.mxu0 0
  %928 = vmatprep.mubr.bf16.mxu0 0
  %929 = vmatmul.mubr.bf16.gmra.mxu0 %v895
  %v930 = vpop.f32.mrf.mxu0
  %v931 = vadd.f32 0.0, %v930
  %v932 = vpop.f32.mrf.mxu0
  %v933 = vadd.f32 0.0, %v932
  %v934 = vpop.f32.mrf.mxu0
  %v935 = vpop.f32.mrf.mxu0
  %936 = vdwg.mxu0
  %937 = vmatprep.subr.bf16.mxu0 %v628
  %938 = vmatpush1.bf16.msra.mxu0 %v627
  %939 = vmatprep.subr.bf16.mxu0 %v624
  %940 = vmatpush1.bf16.msra.mxu0 %v623
  %941 = vmatprep.subr.bf16.mxu0 %v620
  %942 = vmatpush1.bf16.msra.mxu0 %v619
  %943 = vmatprep.subr.bf16.mxu0 %v616
  %944 = vmatpush1.bf16.msra.mxu0 %v615
  %945 = vmatprep.subr.bf16.mxu0 %v612
  %946 = vmatpush1.bf16.msra.mxu0 %v611
  %947 = vmatprep.subr.bf16.mxu0 %v608
  %948 = vmatpush1.bf16.msra.mxu0 %v607
  %949 = vmatprep.subr.bf16.mxu0 %v604
  %950 = vmatpush1.bf16.msra.mxu0 %v603
  %951 = vmatprep.subr.bf16.mxu0 %v600
  %952 = vmatpush1.bf16.msra.mxu0 %v599
  %953 = vmatprep.subr.bf16.mxu0 0
  %954 = vmatpush2.bf16.msra.mxu0 0
  %955 = vmatprep.subr.bf16.mxu0 0
  %956 = vmatpush2.bf16.msra.mxu0 0
  %957 = vmatprep.subr.bf16.mxu0 0
  %958 = vmatpush2.bf16.msra.mxu0 0
  %959 = vmatprep.subr.bf16.mxu0 0
  %960 = vmatpush2.bf16.msra.mxu0 0
  %961 = vmatprep.subr.bf16.mxu0 0
  %962 = vmatpush2.bf16.msra.mxu0 0
  %963 = vmatprep.subr.bf16.mxu0 0
  %964 = vmatpush2.bf16.msra.mxu0 0
  %965 = vmatprep.subr.bf16.mxu0 0
  %966 = vmatpush2.bf16.msra.mxu0 0
  %967 = vmatprep.subr.bf16.mxu0 0
  %968 = vmatpush2.bf16.msra.mxu0 0
  %969 = vmatprep.mubr.bf16.mxu0 0
  %970 = vmatmul.mubr.bf16.gmra.mxu0 %v895
  %v971 = vpop.f32.mrf.mxu0
  %v972 = vadd.f32 0.0, %v971
  %v973 = vpop.f32.mrf.mxu0
  %v974 = vadd.f32 0.0, %v973
  %v975 = vpop.f32.mrf.mxu0
  %v976 = vpop.f32.mrf.mxu0
  %977 = vdwg.mxu0
  %v978 = vadd.f32 %v891, %v931
  %v979 = vadd.f32 %v892, %v933
  %v980 = vadd.f32 %v893, %v972
  %v981 = vadd.f32 %v894, %v974
  %v982 = vmul.f32 %v978, 0.5
  %v983 = vtanh.pop %v982
  %v984 = vadd.f32 %v983, 1.0
  %v985 = vmul.f32 %v984, 0.5
  %v986 = vmul.f32 %v979, 0.5
  %v987 = vtanh.pop %v986
  %v988 = vadd.f32 %v987, 1.0
  %v989 = vmul.f32 %v988, 0.5
  %v990 = vtanh.pop %v980
  %v991 = vmul.f32 %v981, 0.5
  %v992 = vtanh.pop %v991
  %v993 = vadd.f32 %v992, 1.0
  %v994 = vmul.f32 %v993, 0.5
  %v995 = vmul.f32 %v989, %v887
  %v996 = vmul.f32 %v985, %v990
  %v997 = vadd.f32 %v995, %v996
  %v998 = vtanh.pop %v997
  %v999 = vmul.f32 %v994, %v998
  %1000 = vst [vmem:[#allocation4] sm:$0xff] %v999
  %1001 = vst [vmem:[#allocation5] sm:$0xff] %v997
  %s1002 = scalar_lea.vmem [#allocation2], 16
  %1003 = vst [vmem:[%s1002] sm:$0xff] %v999
  %v1004 = vld [vmem:[#allocation4] sm:$0xff]
  %v1005 = vld [vmem:[#allocation5] sm:$0xff]
  %s1006 = smul.u32 3, 4
  %s1007 = smul.addr %s1006, 8
  %s1008 = scalar_lea.vmem [#allocation3], %s1007
  %v1009 = vld [vmem:[%s1008] sm:$0xff]
  %v1010 = vld [vmem:[%s1008 + $0x8] sm:$0xff]
  %v1011 = vld [vmem:[%s1008 + $0x10] sm:$0xff]
  %v1012 = vld [vmem:[%s1008 + $0x18] sm:$0xff]
  %v1013 = vpack.c.bf16 %v1004, %v1004
  %1014 = vmatprep.subr.bf16.mxu0 %v626
  %1015 = vmatpush1.bf16.msra.mxu0 %v625
  %1016 = vmatprep.subr.bf16.mxu0 %v622
  %1017 = vmatpush1.bf16.msra.mxu0 %v621
  %1018 = vmatprep.subr.bf16.mxu0 %v618
  %1019 = vmatpush1.bf16.msra.mxu0 %v617
  %1020 = vmatprep.subr.bf16.mxu0 %v614
  %1021 = vmatpush1.bf16.msra.mxu0 %v613
  %1022 = vmatprep.subr.bf16.mxu0 %v610
  %1023 = vmatpush1.bf16.msra.mxu0 %v609
  %1024 = vmatprep.subr.bf16.mxu0 %v606
  %1025 = vmatpush1.bf16.msra.mxu0 %v605
  %1026 = vmatprep.subr.bf16.mxu0 %v602
  %1027 = vmatpush1.bf16.msra.mxu0 %v601
  %1028 = vmatprep.subr.bf16.mxu0 %v598
  %1029 = vmatpush1.bf16.msra.mxu0 %v597
  %1030 = vmatprep.subr.bf16.mxu0 0
  %1031 = vmatpush2.bf16.msra.mxu0 0
  %1032 = vmatprep.subr.bf16.mxu0 0
  %1033 = vmatpush2.bf16.msra.mxu0 0
  %1034 = vmatprep.subr.bf16.mxu0 0
  %1035 = vmatpush2.bf16.msra.mxu0 0
  %1036 = vmatprep.subr.bf16.mxu0 0
  %1037 = vmatpush2.bf16.msra.mxu0 0
  %1038 = vmatprep.subr.bf16.mxu0 0
  %1039 = vmatpush2.bf16.msra.mxu0 0
  %1040 = vmatprep.subr.bf16.mxu0 0
  %1041 = vmatpush2.bf16.msra.mxu0 0
  %1042 = vmatprep.subr.bf16.mxu0 0
  %1043 = vmatpush2.bf16.msra.mxu0 0
  %1044 = vmatprep.subr.bf16.mxu0 0
  %1045 = vmatpush2.bf16.msra.mxu0 0
  %1046 = vmatprep.mubr.bf16.mxu0 0
  %1047 = vmatmul.mubr.bf16.gmra.mxu0 %v1013
  %v1048 = vpop.f32.mrf.mxu0
  %v1049 = vadd.f32 0.0, %v1048
  %v1050 = vpop.f32.mrf.mxu0
  %v1051 = vadd.f32 0.0, %v1050
  %v1052 = vpop.f32.mrf.mxu0
  %v1053 = vpop.f32.mrf.mxu0
  %1054 = vdwg.mxu0
  %1055 = vmatprep.subr.bf16.mxu0 %v628
  %1056 = vmatpush1.bf16.msra.mxu0 %v627
  %1057 = vmatprep.subr.bf16.mxu0 %v624
  %1058 = vmatpush1.bf16.msra.mxu0 %v623
  %1059 = vmatprep.subr.bf16.mxu0 %v620
  %1060 = vmatpush1.bf16.msra.mxu0 %v619
  %1061 = vmatprep.subr.bf16.mxu0 %v616
  %1062 = vmatpush1.bf16.msra.mxu0 %v615
  %1063 = vmatprep.subr.bf16.mxu0 %v612
  %1064 = vmatpush1.bf16.msra.mxu0 %v611
  %1065 = vmatprep.subr.bf16.mxu0 %v608
  %1066 = vmatpush1.bf16.msra.mxu0 %v607
  %1067 = vmatprep.subr.bf16.mxu0 %v604
  %1068 = vmatpush1.bf16.msra.mxu0 %v603
  %1069 = vmatprep.subr.bf16.mxu0 %v600
  %1070 = vmatpush1.bf16.msra.mxu0 %v599
  %1071 = vmatprep.subr.bf16.mxu0 0
  %1072 = vmatpush2.bf16.msra.mxu0 0
  %1073 = vmatprep.subr.bf16.mxu0 0
  %1074 = vmatpush2.bf16.msra.mxu0 0
  %1075 = vmatprep.subr.bf16.mxu0 0
  %1076 = vmatpush2.bf16.msra.mxu0 0
  %1077 = vmatprep.subr.bf16.mxu0 0
  %1078 = vmatpush2.bf16.msra.mxu0 0
  %1079 = vmatprep.subr.bf16.mxu0 0
  %1080 = vmatpush2.bf16.msra.mxu0 0
  %1081 = vmatprep.subr.bf16.mxu0 0
  %1082 = vmatpush2.bf16.msra.mxu0 0
  %1083 = vmatprep.subr.bf16.mxu0 0
  %1084 = vmatpush2.bf16.msra.mxu0 0
  %1085 = vmatprep.subr.bf16.mxu0 0
  %1086 = vmatpush2.bf16.msra.mxu0 0
  %1087 = vmatprep.mubr.bf16.mxu0 0
  %1088 = vmatmul.mubr.bf16.gmra.mxu0 %v1013
  %v1089 = vpop.f32.mrf.mxu0
  %v1090 = vadd.f32 0.0, %v1089
  %v1091 = vpop.f32.mrf.mxu0
  %v1092 = vadd.f32 0.0, %v1091
  %v1093 = vpop.f32.mrf.mxu0
  %v1094 = vpop.f32.mrf.mxu0
  %1095 = vdwg.mxu0
  %v1096 = vadd.f32 %v1009, %v1049
  %v1097 = vadd.f32 %v1010, %v1051
  %v1098 = vadd.f32 %v1011, %v1090
  %v1099 = vadd.f32 %v1012, %v1092
  %v1100 = vmul.f32 %v1096, 0.5
  %v1101 = vtanh.pop %v1100
  %v1102 = vadd.f32 %v1101, 1.0
  %v1103 = vmul.f32 %v1102, 0.5
  %v1104 = vmul.f32 %v1097, 0.5
  %v1105 = vtanh.pop %v1104
  %v1106 = vadd.f32 %v1105, 1.0
  %v1107 = vmul.f32 %v1106, 0.5
  %v1108 = vtanh.pop %v1098
  %v1109 = vmul.f32 %v1099, 0.5
  %v1110 = vtanh.pop %v1109
  %v1111 = vadd.f32 %v1110, 1.0
  %v1112 = vmul.f32 %v1111, 0.5
  %v1113 = vmul.f32 %v1107, %v1005
  %v1114 = vmul.f32 %v1103, %v1108
  %v1115 = vadd.f32 %v1113, %v1114
  %v1116 = vtanh.pop %v1115
  %v1117 = vmul.f32 %v1112, %v1116
  %1118 = vst [vmem:[#allocation4] sm:$0xff] %v1117
  %1119 = vst [vmem:[#allocation5] sm:$0xff] %v1115
  %s1120 = scalar_lea.vmem [#allocation2], 24
  %1121 = vst [vmem:[%s1120] sm:$0xff] %v1117
  %v1122 = vld [vmem:[#allocation4] sm:$0xff]
  %v1123 = vld [vmem:[#allocation5] sm:$0xff]
  %s1124 = smul.u32 4, 4
  %s1125 = smul.addr %s1124, 8
  %s1126 = scalar_lea.vmem [#allocation3], %s1125
  %v1127 = vld [vmem:[%s1126] sm:$0xff]
  %v1128 = vld [vmem:[%s1126 + $0x8] sm:$0xff]
  %v1129 = vld [vmem:[%s1126 + $0x10] sm:$0xff]
  %v1130 = vld [vmem:[%s1126 + $0x18] sm:$0xff]
  %v1131 = vpack.c.bf16 %v1122, %v1122
  %1132 = vmatprep.subr.bf16.mxu0 %v626
  %1133 = vmatpush1.bf16.msra.mxu0 %v625
  %1134 = vmatprep.subr.bf16.mxu0 %v622
  %1135 = vmatpush1.bf16.msra.mxu0 %v621
  %1136 = vmatprep.subr.bf16.mxu0 %v618
  %1137 = vmatpush1.bf16.msra.mxu0 %v617
  %1138 = vmatprep.subr.bf16.mxu0 %v614
  %1139 = vmatpush1.bf16.msra.mxu0 %v613
  %1140 = vmatprep.subr.bf16.mxu0 %v610
  %1141 = vmatpush1.bf16.msra.mxu0 %v609
  %1142 = vmatprep.subr.bf16.mxu0 %v606
  %1143 = vmatpush1.bf16.msra.mxu0 %v605
  %1144 = vmatprep.subr.bf16.mxu0 %v602
  %1145 = vmatpush1.bf16.msra.mxu0 %v601
  %1146 = vmatprep.subr.bf16.mxu0 %v598
  %1147 = vmatpush1.bf16.msra.mxu0 %v597
  %1148 = vmatprep.subr.bf16.mxu0 0
  %1149 = vmatpush2.bf16.msra.mxu0 0
  %1150 = vmatprep.subr.bf16.mxu0 0
  %1151 = vmatpush2.bf16.msra.mxu0 0
  %1152 = vmatprep.subr.bf16.mxu0 0
  %1153 = vmatpush2.bf16.msra.mxu0 0
  %1154 = vmatprep.subr.bf16.mxu0 0
  %1155 = vmatpush2.bf16.msra.mxu0 0
  %1156 = vmatprep.subr.bf16.mxu0 0
  %1157 = vmatpush2.bf16.msra.mxu0 0
  %1158 = vmatprep.subr.bf16.mxu0 0
  %1159 = vmatpush2.bf16.msra.mxu0 0
  %1160 = vmatprep.subr.bf16.mxu0 0
  %1161 = vmatpush2.bf16.msra.mxu0 0
  %1162 = vmatprep.subr.bf16.mxu0 0
  %1163 = vmatpush2.bf16.msra.mxu0 0
  %1164 = vmatprep.mubr.bf16.mxu0 0
  %1165 = vmatmul.mubr.bf16.gmra.mxu0 %v1131
  %v1166 = vpop.f32.mrf.mxu0
  %v1167 = vadd.f32 0.0, %v1166
  %v1168 = vpop.f32.mrf.mxu0
  %v1169 = vadd.f32 0.0, %v1168
  %v1170 = vpop.f32.mrf.mxu0
  %v1171 = vpop.f32.mrf.mxu0
  %1172 = vdwg.mxu0
  %1173 = vmatprep.subr.bf16.mxu0 %v628
  %1174 = vmatpush1.bf16.msra.mxu0 %v627
  %1175 = vmatprep.subr.bf16.mxu0 %v624
  %1176 = vmatpush1.bf16.msra.mxu0 %v623
  %1177 = vmatprep.subr.bf16.mxu0 %v620
  %1178 = vmatpush1.bf16.msra.mxu0 %v619
  %1179 = vmatprep.subr.bf16.mxu0 %v616
  %1180 = vmatpush1.bf16.msra.mxu0 %v615
  %1181 = vmatprep.subr.bf16.mxu0 %v612
  %1182 = vmatpush1.bf16.msra.mxu0 %v611
  %1183 = vmatprep.subr.bf16.mxu0 %v608
  %1184 = vmatpush1.bf16.msra.mxu0 %v607
  %1185 = vmatprep.subr.bf16.mxu0 %v604
  %1186 = vmatpush1.bf16.msra.mxu0 %v603
  %1187 = vmatprep.subr.bf16.mxu0 %v600
  %1188 = vmatpush1.bf16.msra.mxu0 %v599
  %1189 = vmatprep.subr.bf16.mxu0 0
  %1190 = vmatpush2.bf16.msra.mxu0 0
  %1191 = vmatprep.subr.bf16.mxu0 0
  %1192 = vmatpush2.bf16.msra.mxu0 0
  %1193 = vmatprep.subr.bf16.mxu0 0
  %1194 = vmatpush2.bf16.msra.mxu0 0
  %1195 = vmatprep.subr.bf16.mxu0 0
  %1196 = vmatpush2.bf16.msra.mxu0 0
  %1197 = vmatprep.subr.bf16.mxu0 0
  %1198 = vmatpush2.bf16.msra.mxu0 0
  %1199 = vmatprep.subr.bf16.mxu0 0
  %1200 = vmatpush2.bf16.msra.mxu0 0
  %1201 = vmatprep.subr.bf16.mxu0 0
  %1202 = vmatpush2.bf16.msra.mxu0 0
  %1203 = vmatprep.subr.bf16.mxu0 0
  %1204 = vmatpush2.bf16.msra.mxu0 0
  %1205 = vmatprep.mubr.bf16.mxu0 0
  %1206 = vmatmul.mubr.bf16.gmra.mxu0 %v1131
  %v1207 = vpop.f32.mrf.mxu0
  %v1208 = vadd.f32 0.0, %v1207
  %v1209 = vpop.f32.mrf.mxu0
  %v1210 = vadd.f32 0.0, %v1209
  %v1211 = vpop.f32.mrf.mxu0
  %v1212 = vpop.f32.mrf.mxu0
  %1213 = vdwg.mxu0
  %v1214 = vadd.f32 %v1127, %v1167
  %v1215 = vadd.f32 %v1128, %v1169
  %v1216 = vadd.f32 %v1129, %v1208
  %v1217 = vadd.f32 %v1130, %v1210
  %v1218 = vmul.f32 %v1214, 0.5
  %v1219 = vtanh.pop %v1218
  %v1220 = vadd.f32 %v1219, 1.0
  %v1221 = vmul.f32 %v1220, 0.5
  %v1222 = vmul.f32 %v1215, 0.5
  %v1223 = vtanh.pop %v1222
  %v1224 = vadd.f32 %v1223, 1.0
  %v1225 = vmul.f32 %v1224, 0.5
  %v1226 = vtanh.pop %v1216
  %v1227 = vmul.f32 %v1217, 0.5
  %v1228 = vtanh.pop %v1227
  %v1229 = vadd.f32 %v1228, 1.0
  %v1230 = vmul.f32 %v1229, 0.5
  %v1231 = vmul.f32 %v1225, %v1123
  %v1232 = vmul.f32 %v1221, %v1226
  %v1233 = vadd.f32 %v1231, %v1232
  %v1234 = vtanh.pop %v1233
  %v1235 = vmul.f32 %v1230, %v1234
  %1236 = vst [vmem:[#allocation4] sm:$0xff] %v1235
  %1237 = vst [vmem:[#allocation5] sm:$0xff] %v1233
  %s1238 = scalar_lea.vmem [#allocation2], 32
  %1239 = vst [vmem:[%s1238] sm:$0xff] %v1235
  %v1240 = vld [vmem:[#allocation4] sm:$0xff]
  %v1241 = vld [vmem:[#allocation5] sm:$0xff]
  %s1242 = smul.u32 5, 4
  %s1243 = smul.addr %s1242, 8
  %s1244 = scalar_lea.vmem [#allocation3], %s1243
  %v1245 = vld [vmem:[%s1244] sm:$0xff]
  %v1246 = vld [vmem:[%s1244 + $0x8] sm:$0xff]
  %v1247 = vld [vmem:[%s1244 + $0x10] sm:$0xff]
  %v1248 = vld [vmem:[%s1244 + $0x18] sm:$0xff]
  %v1249 = vpack.c.bf16 %v1240, %v1240
  %1250 = vmatprep.subr.bf16.mxu0 %v626
  %1251 = vmatpush1.bf16.msra.mxu0 %v625
  %1252 = vmatprep.subr.bf16.mxu0 %v622
  %1253 = vmatpush1.bf16.msra.mxu0 %v621
  %1254 = vmatprep.subr.bf16.mxu0 %v618
  %1255 = vmatpush1.bf16.msra.mxu0 %v617
  %1256 = vmatprep.subr.bf16.mxu0 %v614
  %1257 = vmatpush1.bf16.msra.mxu0 %v613
  %1258 = vmatprep.subr.bf16.mxu0 %v610
  %1259 = vmatpush1.bf16.msra.mxu0 %v609
  %1260 = vmatprep.subr.bf16.mxu0 %v606
  %1261 = vmatpush1.bf16.msra.mxu0 %v605
  %1262 = vmatprep.subr.bf16.mxu0 %v602
  %1263 = vmatpush1.bf16.msra.mxu0 %v601
  %1264 = vmatprep.subr.bf16.mxu0 %v598
  %1265 = vmatpush1.bf16.msra.mxu0 %v597
  %1266 = vmatprep.subr.bf16.mxu0 0
  %1267 = vmatpush2.bf16.msra.mxu0 0
  %1268 = vmatprep.subr.bf16.mxu0 0
  %1269 = vmatpush2.bf16.msra.mxu0 0
  %1270 = vmatprep.subr.bf16.mxu0 0
  %1271 = vmatpush2.bf16.msra.mxu0 0
  %1272 = vmatprep.subr.bf16.mxu0 0
  %1273 = vmatpush2.bf16.msra.mxu0 0
  %1274 = vmatprep.subr.bf16.mxu0 0
  %1275 = vmatpush2.bf16.msra.mxu0 0
  %1276 = vmatprep.subr.bf16.mxu0 0
  %1277 = vmatpush2.bf16.msra.mxu0 0
  %1278 = vmatprep.subr.bf16.mxu0 0
  %1279 = vmatpush2.bf16.msra.mxu0 0
  %1280 = vmatprep.subr.bf16.mxu0 0
  %1281 = vmatpush2.bf16.msra.mxu0 0
  %1282 = vmatprep.mubr.bf16.mxu0 0
  %1283 = vmatmul.mubr.bf16.gmra.mxu0 %v1249
  %v1284 = vpop.f32.mrf.mxu0
  %v1285 = vadd.f32 0.0, %v1284
  %v1286 = vpop.f32.mrf.mxu0
  %v1287 = vadd.f32 0.0, %v1286
  %v1288 = vpop.f32.mrf.mxu0
  %v1289 = vpop.f32.mrf.mxu0
  %1290 = vdwg.mxu0
  %1291 = vmatprep.subr.bf16.mxu0 %v628
  %1292 = vmatpush1.bf16.msra.mxu0 %v627
  %1293 = vmatprep.subr.bf16.mxu0 %v624
  %1294 = vmatpush1.bf16.msra.mxu0 %v623
  %1295 = vmatprep.subr.bf16.mxu0 %v620
  %1296 = vmatpush1.bf16.msra.mxu0 %v619
  %1297 = vmatprep.subr.bf16.mxu0 %v616
  %1298 = vmatpush1.bf16.msra.mxu0 %v615
  %1299 = vmatprep.subr.bf16.mxu0 %v612
  %1300 = vmatpush1.bf16.msra.mxu0 %v611
  %1301 = vmatprep.subr.bf16.mxu0 %v608
  %1302 = vmatpush1.bf16.msra.mxu0 %v607
  %1303 = vmatprep.subr.bf16.mxu0 %v604
  %1304 = vmatpush1.bf16.msra.mxu0 %v603
  %1305 = vmatprep.subr.bf16.mxu0 %v600
  %1306 = vmatpush1.bf16.msra.mxu0 %v599
  %1307 = vmatprep.subr.bf16.mxu0 0
  %1308 = vmatpush2.bf16.msra.mxu0 0
  %1309 = vmatprep.subr.bf16.mxu0 0
  %1310 = vmatpush2.bf16.msra.mxu0 0
  %1311 = vmatprep.subr.bf16.mxu0 0
  %1312 = vmatpush2.bf16.msra.mxu0 0
  %1313 = vmatprep.subr.bf16.mxu0 0
  %1314 = vmatpush2.bf16.msra.mxu0 0
  %1315 = vmatprep.subr.bf16.mxu0 0
  %1316 = vmatpush2.bf16.msra.mxu0 0
  %1317 = vmatprep.subr.bf16.mxu0 0
  %1318 = vmatpush2.bf16.msra.mxu0 0
  %1319 = vmatprep.subr.bf16.mxu0 0
  %1320 = vmatpush2.bf16.msra.mxu0 0
  %1321 = vmatprep.subr.bf16.mxu0 0
  %1322 = vmatpush2.bf16.msra.mxu0 0
  %1323 = vmatprep.mubr.bf16.mxu0 0
  %1324 = vmatmul.mubr.bf16.gmra.mxu0 %v1249
  %v1325 = vpop.f32.mrf.mxu0
  %v1326 = vadd.f32 0.0, %v1325
  %v1327 = vpop.f32.mrf.mxu0
  %v1328 = vadd.f32 0.0, %v1327
  %v1329 = vpop.f32.mrf.mxu0
  %v1330 = vpop.f32.mrf.mxu0
  %1331 = vdwg.mxu0
  %v1332 = vadd.f32 %v1245, %v1285
  %v1333 = vadd.f32 %v1246, %v1287
  %v1334 = vadd.f32 %v1247, %v1326
  %v1335 = vadd.f32 %v1248, %v1328
  %v1336 = vmul.f32 %v1332, 0.5
  %v1337 = vtanh.pop %v1336
  %v1338 = vadd.f32 %v1337, 1.0
  %v1339 = vmul.f32 %v1338, 0.5
  %v1340 = vmul.f32 %v1333, 0.5
  %v1341 = vtanh.pop %v1340
  %v1342 = vadd.f32 %v1341, 1.0
  %v1343 = vmul.f32 %v1342, 0.5
  %v1344 = vtanh.pop %v1334
  %v1345 = vmul.f32 %v1335, 0.5
  %v1346 = vtanh.pop %v1345
  %v1347 = vadd.f32 %v1346, 1.0
  %v1348 = vmul.f32 %v1347, 0.5
  %v1349 = vmul.f32 %v1343, %v1241
  %v1350 = vmul.f32 %v1339, %v1344
  %v1351 = vadd.f32 %v1349, %v1350
  %v1352 = vtanh.pop %v1351
  %v1353 = vmul.f32 %v1348, %v1352
  %1354 = vst [vmem:[#allocation4] sm:$0xff] %v1353
  %1355 = vst [vmem:[#allocation5] sm:$0xff] %v1351
  %s1356 = scalar_lea.vmem [#allocation2], 40
  %1357 = vst [vmem:[%s1356] sm:$0xff] %v1353
  %v1358 = vld [vmem:[#allocation4] sm:$0xff]
  %v1359 = vld [vmem:[#allocation5] sm:$0xff]
  %s1360 = smul.u32 6, 4
  %s1361 = smul.addr %s1360, 8
  %s1362 = scalar_lea.vmem [#allocation3], %s1361
  %v1363 = vld [vmem:[%s1362] sm:$0xff]
  %v1364 = vld [vmem:[%s1362 + $0x8] sm:$0xff]
  %v1365 = vld [vmem:[%s1362 + $0x10] sm:$0xff]
  %v1366 = vld [vmem:[%s1362 + $0x18] sm:$0xff]
  %v1367 = vpack.c.bf16 %v1358, %v1358
  %1368 = vmatprep.subr.bf16.mxu0 %v626
  %1369 = vmatpush1.bf16.msra.mxu0 %v625
  %1370 = vmatprep.subr.bf16.mxu0 %v622
  %1371 = vmatpush1.bf16.msra.mxu0 %v621
  %1372 = vmatprep.subr.bf16.mxu0 %v618
  %1373 = vmatpush1.bf16.msra.mxu0 %v617
  %1374 = vmatprep.subr.bf16.mxu0 %v614
  %1375 = vmatpush1.bf16.msra.mxu0 %v613
  %1376 = vmatprep.subr.bf16.mxu0 %v610
  %1377 = vmatpush1.bf16.msra.mxu0 %v609
  %1378 = vmatprep.subr.bf16.mxu0 %v606
  %1379 = vmatpush1.bf16.msra.mxu0 %v605
  %1380 = vmatprep.subr.bf16.mxu0 %v602
  %1381 = vmatpush1.bf16.msra.mxu0 %v601
  %1382 = vmatprep.subr.bf16.mxu0 %v598
  %1383 = vmatpush1.bf16.msra.mxu0 %v597
  %1384 = vmatprep.subr.bf16.mxu0 0
  %1385 = vmatpush2.bf16.msra.mxu0 0
  %1386 = vmatprep.subr.bf16.mxu0 0
  %1387 = vmatpush2.bf16.msra.mxu0 0
  %1388 = vmatprep.subr.bf16.mxu0 0
  %1389 = vmatpush2.bf16.msra.mxu0 0
  %1390 = vmatprep.subr.bf16.mxu0 0
  %1391 = vmatpush2.bf16.msra.mxu0 0
  %1392 = vmatprep.subr.bf16.mxu0 0
  %1393 = vmatpush2.bf16.msra.mxu0 0
  %1394 = vmatprep.subr.bf16.mxu0 0
  %1395 = vmatpush2.bf16.msra.mxu0 0
  %1396 = vmatprep.subr.bf16.mxu0 0
  %1397 = vmatpush2.bf16.msra.mxu0 0
  %1398 = vmatprep.subr.bf16.mxu0 0
  %1399 = vmatpush2.bf16.msra.mxu0 0
  %1400 = vmatprep.mubr.bf16.mxu0 0
  %1401 = vmatmul.mubr.bf16.gmra.mxu0 %v1367
  %v1402 = vpop.f32.mrf.mxu0
  %v1403 = vadd.f32 0.0, %v1402
  %v1404 = vpop.f32.mrf.mxu0
  %v1405 = vadd.f32 0.0, %v1404
  %v1406 = vpop.f32.mrf.mxu0
  %v1407 = vpop.f32.mrf.mxu0
  %1408 = vdwg.mxu0
  %1409 = vmatprep.subr.bf16.mxu0 %v628
  %1410 = vmatpush1.bf16.msra.mxu0 %v627
  %1411 = vmatprep.subr.bf16.mxu0 %v624
  %1412 = vmatpush1.bf16.msra.mxu0 %v623
  %1413 = vmatprep.subr.bf16.mxu0 %v620
  %1414 = vmatpush1.bf16.msra.mxu0 %v619
  %1415 = vmatprep.subr.bf16.mxu0 %v616
  %1416 = vmatpush1.bf16.msra.mxu0 %v615
  %1417 = vmatprep.subr.bf16.mxu0 %v612
  %1418 = vmatpush1.bf16.msra.mxu0 %v611
  %1419 = vmatprep.subr.bf16.mxu0 %v608
  %1420 = vmatpush1.bf16.msra.mxu0 %v607
  %1421 = vmatprep.subr.bf16.mxu0 %v604
  %1422 = vmatpush1.bf16.msra.mxu0 %v603
  %1423 = vmatprep.subr.bf16.mxu0 %v600
  %1424 = vmatpush1.bf16.msra.mxu0 %v599
  %1425 = vmatprep.subr.bf16.mxu0 0
  %1426 = vmatpush2.bf16.msra.mxu0 0
  %1427 = vmatprep.subr.bf16.mxu0 0
  %1428 = vmatpush2.bf16.msra.mxu0 0
  %1429 = vmatprep.subr.bf16.mxu0 0
  %1430 = vmatpush2.bf16.msra.mxu0 0
  %1431 = vmatprep.subr.bf16.mxu0 0
  %1432 = vmatpush2.bf16.msra.mxu0 0
  %1433 = vmatprep.subr.bf16.mxu0 0
  %1434 = vmatpush2.bf16.msra.mxu0 0
  %1435 = vmatprep.subr.bf16.mxu0 0
  %1436 = vmatpush2.bf16.msra.mxu0 0
  %1437 = vmatprep.subr.bf16.mxu0 0
  %1438 = vmatpush2.bf16.msra.mxu0 0
  %1439 = vmatprep.subr.bf16.mxu0 0
  %1440 = vmatpush2.bf16.msra.mxu0 0
  %1441 = vmatprep.mubr.bf16.mxu0 0
  %1442 = vmatmul.mubr.bf16.gmra.mxu0 %v1367
  %v1443 = vpop.f32.mrf.mxu0
  %v1444 = vadd.f32 0.0, %v1443
  %v1445 = vpop.f32.mrf.mxu0
  %v1446 = vadd.f32 0.0, %v1445
  %v1447 = vpop.f32.mrf.mxu0
  %v1448 = vpop.f32.mrf.mxu0
  %1449 = vdwg.mxu0
  %v1450 = vadd.f32 %v1363, %v1403
  %v1451 = vadd.f32 %v1364, %v1405
  %v1452 = vadd.f32 %v1365, %v1444
  %v1453 = vadd.f32 %v1366, %v1446
  %v1454 = vmul.f32 %v1450, 0.5
  %v1455 = vtanh.pop %v1454
  %v1456 = vadd.f32 %v1455, 1.0
  %v1457 = vmul.f32 %v1456, 0.5
  %v1458 = vmul.f32 %v1451, 0.5
  %v1459 = vtanh.pop %v1458
  %v1460 = vadd.f32 %v1459, 1.0
  %v1461 = vmul.f32 %v1460, 0.5
  %v1462 = vtanh.pop %v1452
  %v1463 = vmul.f32 %v1453, 0.5
  %v1464 = vtanh.pop %v1463
  %v1465 = vadd.f32 %v1464, 1.0
  %v1466 = vmul.f32 %v1465, 0.5
  %v1467 = vmul.f32 %v1461, %v1359
  %v1468 = vmul.f32 %v1457, %v1462
  %v1469 = vadd.f32 %v1467, %v1468
  %v1470 = vtanh.pop %v1469
  %v1471 = vmul.f32 %v1466, %v1470
  %1472 = vst [vmem:[#allocation4] sm:$0xff] %v1471
  %1473 = vst [vmem:[#allocation5] sm:$0xff] %v1469
  %s1474 = scalar_lea.vmem [#allocation2], 48
  %1475 = vst [vmem:[%s1474] sm:$0xff] %v1471
  %v1476 = vld [vmem:[#allocation4] sm:$0xff]
  %v1477 = vld [vmem:[#allocation5] sm:$0xff]
  %s1478 = smul.u32 7, 4
  %s1479 = smul.addr %s1478, 8
  %s1480 = scalar_lea.vmem [#allocation3], %s1479
  %v1481 = vld [vmem:[%s1480] sm:$0xff]
  %v1482 = vld [vmem:[%s1480 + $0x8] sm:$0xff]
  %v1483 = vld [vmem:[%s1480 + $0x10] sm:$0xff]
  %v1484 = vld [vmem:[%s1480 + $0x18] sm:$0xff]
  %v1485 = vpack.c.bf16 %v1476, %v1476
  %1486 = vmatprep.subr.bf16.mxu0 %v626
  %1487 = vmatpush1.bf16.msra.mxu0 %v625
  %1488 = vmatprep.subr.bf16.mxu0 %v622
  %1489 = vmatpush1.bf16.msra.mxu0 %v621
  %1490 = vmatprep.subr.bf16.mxu0 %v618
  %1491 = vmatpush1.bf16.msra.mxu0 %v617
  %1492 = vmatprep.subr.bf16.mxu0 %v614
  %1493 = vmatpush1.bf16.msra.mxu0 %v613
  %1494 = vmatprep.subr.bf16.mxu0 %v610
  %1495 = vmatpush1.bf16.msra.mxu0 %v609
  %1496 = vmatprep.subr.bf16.mxu0 %v606
  %1497 = vmatpush1.bf16.msra.mxu0 %v605
  %1498 = vmatprep.subr.bf16.mxu0 %v602
  %1499 = vmatpush1.bf16.msra.mxu0 %v601
  %1500 = vmatprep.subr.bf16.mxu0 %v598
  %1501 = vmatpush1.bf16.msra.mxu0 %v597
  %1502 = vmatprep.subr.bf16.mxu0 0
  %1503 = vmatpush2.bf16.msra.mxu0 0
  %1504 = vmatprep.subr.bf16.mxu0 0
  %1505 = vmatpush2.bf16.msra.mxu0 0
  %1506 = vmatprep.subr.bf16.mxu0 0
  %1507 = vmatpush2.bf16.msra.mxu0 0
  %1508 = vmatprep.subr.bf16.mxu0 0
  %1509 = vmatpush2.bf16.msra.mxu0 0
  %1510 = vmatprep.subr.bf16.mxu0 0
  %1511 = vmatpush2.bf16.msra.mxu0 0
  %1512 = vmatprep.subr.bf16.mxu0 0
  %1513 = vmatpush2.bf16.msra.mxu0 0
  %1514 = vmatprep.subr.bf16.mxu0 0
  %1515 = vmatpush2.bf16.msra.mxu0 0
  %1516 = vmatprep.subr.bf16.mxu0 0
  %1517 = vmatpush2.bf16.msra.mxu0 0
  %1518 = vmatprep.mubr.bf16.mxu0 0
  %1519 = vmatmul.mubr.bf16.gmra.mxu0 %v1485
  %v1520 = vpop.f32.mrf.mxu0
  %v1521 = vadd.f32 0.0, %v1520
  %v1522 = vpop.f32.mrf.mxu0
  %v1523 = vadd.f32 0.0, %v1522
  %v1524 = vpop.f32.mrf.mxu0
  %v1525 = vpop.f32.mrf.mxu0
  %1526 = vdwg.mxu0
  %1527 = vmatprep.subr.bf16.mxu0 %v628
  %1528 = vmatpush1.bf16.msra.mxu0 %v627
  %1529 = vmatprep.subr.bf16.mxu0 %v624
  %1530 = vmatpush1.bf16.msra.mxu0 %v623
  %1531 = vmatprep.subr.bf16.mxu0 %v620
  %1532 = vmatpush1.bf16.msra.mxu0 %v619
  %1533 = vmatprep.subr.bf16.mxu0 %v616
  %1534 = vmatpush1.bf16.msra.mxu0 %v615
  %1535 = vmatprep.subr.bf16.mxu0 %v612
  %1536 = vmatpush1.bf16.msra.mxu0 %v611
  %1537 = vmatprep.subr.bf16.mxu0 %v608
  %1538 = vmatpush1.bf16.msra.mxu0 %v607
  %1539 = vmatprep.subr.bf16.mxu0 %v604
  %1540 = vmatpush1.bf16.msra.mxu0 %v603
  %1541 = vmatprep.subr.bf16.mxu0 %v600
  %1542 = vmatpush1.bf16.msra.mxu0 %v599
  %1543 = vmatprep.subr.bf16.mxu0 0
  %1544 = vmatpush2.bf16.msra.mxu0 0
  %1545 = vmatprep.subr.bf16.mxu0 0
  %1546 = vmatpush2.bf16.msra.mxu0 0
  %1547 = vmatprep.subr.bf16.mxu0 0
  %1548 = vmatpush2.bf16.msra.mxu0 0
  %1549 = vmatprep.subr.bf16.mxu0 0
  %1550 = vmatpush2.bf16.msra.mxu0 0
  %1551 = vmatprep.subr.bf16.mxu0 0
  %1552 = vmatpush2.bf16.msra.mxu0 0
  %1553 = vmatprep.subr.bf16.mxu0 0
  %1554 = vmatpush2.bf16.msra.mxu0 0
  %1555 = vmatprep.subr.bf16.mxu0 0
  %1556 = vmatpush2.bf16.msra.mxu0 0
  %1557 = vmatprep.subr.bf16.mxu0 0
  %1558 = vmatpush2.bf16.msra.mxu0 0
  %1559 = vmatprep.mubr.bf16.mxu0 0
  %1560 = vmatmul.mubr.bf16.gmra.mxu0 %v1485
  %v1561 = vpop.f32.mrf.mxu0
  %v1562 = vadd.f32 0.0, %v1561
  %v1563 = vpop.f32.mrf.mxu0
  %v1564 = vadd.f32 0.0, %v1563
  %v1565 = vpop.f32.mrf.mxu0
  %v1566 = vpop.f32.mrf.mxu0
  %1567 = vdwg.mxu0
  %v1568 = vadd.f32 %v1481, %v1521
  %v1569 = vadd.f32 %v1482, %v1523
  %v1570 = vadd.f32 %v1483, %v1562
  %v1571 = vadd.f32 %v1484, %v1564
  %v1572 = vmul.f32 %v1568, 0.5
  %v1573 = vtanh.pop %v1572
  %v1574 = vadd.f32 %v1573, 1.0
  %v1575 = vmul.f32 %v1574, 0.5
  %v1576 = vmul.f32 %v1569, 0.5
  %v1577 = vtanh.pop %v1576
  %v1578 = vadd.f32 %v1577, 1.0
  %v1579 = vmul.f32 %v1578, 0.5
  %v1580 = vtanh.pop %v1570
  %v1581 = vmul.f32 %v1571, 0.5
  %v1582 = vtanh.pop %v1581
  %v1583 = vadd.f32 %v1582, 1.0
  %v1584 = vmul.f32 %v1583, 0.5
  %v1585 = vmul.f32 %v1579, %v1477
  %v1586 = vmul.f32 %v1575, %v1580
  %v1587 = vadd.f32 %v1585, %v1586
  %v1588 = vtanh.pop %v1587
  %v1589 = vmul.f32 %v1584, %v1588
  %1590 = vst [vmem:[#allocation4] sm:$0xff] %v1589
  %1591 = vst [vmem:[#allocation5] sm:$0xff] %v1587
  %s1592 = scalar_lea.vmem [#allocation2], 56
  %1593 = vst [vmem:[%s1592] sm:$0xff] %v1589
  %v1594 = vld [vmem:[#allocation2] sm:$0xff]
  %v1595 = vld [vmem:[#allocation2 + $0x8] sm:$0xff]
  %v1596 = vld [vmem:[#allocation2 + $0x10] sm:$0xff]
  %v1597 = vld [vmem:[#allocation2 + $0x18] sm:$0xff]
  %v1598 = vld [vmem:[#allocation2 + $0x20] sm:$0xff]
  %v1599 = vld [vmem:[#allocation2 + $0x28] sm:$0xff]
  %v1600 = vld [vmem:[#allocation2 + $0x30] sm:$0xff]
  %v1601 = vld [vmem:[#allocation2 + $0x38] sm:$0xff]
  %v1602 = vpack.c.bf16 %v1595, %v1594
  %v1603 = vpack.c.bf16 %v1597, %v1596
  %v1604 = vpack.c.bf16 %v1599, %v1598
  %v1605 = vpack.c.bf16 %v1601, %v1600
  %v1606 = vld [vmem:[%s4] sm:$0xff]
  %v1607 = vld [vmem:[%s4 + $0x8] sm:$0xff]
  %v1608 = vld [vmem:[%s4 + $0x10] sm:$0xff]
  %v1609 = vld [vmem:[%s4 + $0x18] sm:$0xff]
  %v1610 = vld [vmem:[%s4 + $0x20] sm:$0xff]
  %v1611 = vld [vmem:[%s4 + $0x28] sm:$0xff]
  %v1612 = vld [vmem:[%s4 + $0x30] sm:$0xff]
  %v1613 = vld [vmem:[%s4 + $0x38] sm:$0xff]
  %v1614 = vld [vmem:[%s4 + $0x40] sm:$0xff]
  %v1615 = vld [vmem:[%s4 + $0x48] sm:$0xff]
  %v1616 = vld [vmem:[%s4 + $0x50] sm:$0xff]
  %v1617 = vld [vmem:[%s4 + $0x58] sm:$0xff]
  %v1618 = vld [vmem:[%s4 + $0x60] sm:$0xff]
  %v1619 = vld [vmem:[%s4 + $0x68] sm:$0xff]
  %v1620 = vld [vmem:[%s4 + $0x70] sm:$0xff]
  %v1621 = vld [vmem:[%s4 + $0x78] sm:$0xff]
  %v1622 = vld [vmem:[%s4 + $0x80] sm:$0xff]
  %v1623 = vld [vmem:[%s4 + $0x88] sm:$0xff]
  %v1624 = vld [vmem:[%s4 + $0x90] sm:$0xff]
  %v1625 = vld [vmem:[%s4 + $0x98] sm:$0xff]
  %v1626 = vld [vmem:[%s4 + $0xa0] sm:$0xff]
  %v1627 = vld [vmem:[%s4 + $0xa8] sm:$0xff]
  %v1628 = vld [vmem:[%s4 + $0xb0] sm:$0xff]
  %v1629 = vld [vmem:[%s4 + $0xb8] sm:$0xff]
  %v1630 = vld [vmem:[%s4 + $0xc0] sm:$0xff]
  %v1631 = vld [vmem:[%s4 + $0xc8] sm:$0xff]
  %v1632 = vld [vmem:[%s4 + $0xd0] sm:$0xff]
  %v1633 = vld [vmem:[%s4 + $0xd8] sm:$0xff]
  %v1634 = vld [vmem:[%s4 + $0xe0] sm:$0xff]
  %v1635 = vld [vmem:[%s4 + $0xe8] sm:$0xff]
  %v1636 = vld [vmem:[%s4 + $0xf0] sm:$0xff]
  %v1637 = vld [vmem:[%s4 + $0xf8] sm:$0xff]
  %v1638 = vld [vmem:[%s6] sm:$0xf]
  %v1640 = vlaneseq
  %v1641 = vshrl.u32 %v1640, 7
  %v1642 = vsub.s32 0, %v1641
  %v1643 = vrot.slane %v1638, %v1642
  %v1644 = vlaneseq
  %v1645 = vshrl.u32 %v1644, 7
  %v1646 = vsub.s32 1, %v1645
  %v1647 = vrot.slane %v1638, %v1646
  %v1648 = vlaneseq
  %v1649 = vshrl.u32 %v1648, 7
  %v1650 = vsub.s32 2, %v1649
  %v1651 = vrot.slane %v1638, %v1650
  %v1652 = vlaneseq
  %v1653 = vshrl.u32 %v1652, 7
  %v1654 = vsub.s32 3, %v1653
  %v1655 = vrot.slane %v1638, %v1654
  %v1692 = vunpack.c.l.b16 %v1606
  %v1693 = vunpack.c.h.b16 %v1606
  %v1694 = vunpack.c.l.b16 %v1607
  %v1695 = vunpack.c.h.b16 %v1607
  %v1696 = vunpack.c.l.b16 %v1608
  %v1697 = vunpack.c.h.b16 %v1608
  %v1698 = vunpack.c.l.b16 %v1609
  %v1699 = vunpack.c.h.b16 %v1609
  %v1700 = vunpack.c.l.b16 %v1610
  %v1701 = vunpack.c.h.b16 %v1610
  %v1702 = vunpack.c.l.b16 %v1611
  %v1703 = vunpack.c.h.b16 %v1611
  %v1704 = vunpack.c.l.b16 %v1612
  %v1705 = vunpack.c.h.b16 %v1612
  %v1706 = vunpack.c.l.b16 %v1613
  %v1707 = vunpack.c.h.b16 %v1613
  %v1708 = vunpack.c.l.b16 %v1614
  %v1709 = vunpack.c.h.b16 %v1614
  %v1710 = vunpack.c.l.b16 %v1615
  %v1711 = vunpack.c.h.b16 %v1615
  %v1712 = vunpack.c.l.b16 %v1616
  %v1713 = vunpack.c.h.b16 %v1616
  %v1714 = vunpack.c.l.b16 %v1617
  %v1715 = vunpack.c.h.b16 %v1617
  %v1716 = vunpack.c.l.b16 %v1618
  %v1717 = vunpack.c.h.b16 %v1618
  %v1718 = vunpack.c.l.b16 %v1619
  %v1719 = vunpack.c.h.b16 %v1619
  %v1720 = vunpack.c.l.b16 %v1620
  %v1721 = vunpack.c.h.b16 %v1620
  %v1722 = vunpack.c.l.b16 %v1621
  %v1723 = vunpack.c.h.b16 %v1621
  %v1724 = vunpack.c.l.b16 %v1622
  %v1725 = vunpack.c.h.b16 %v1622
  %v1726 = vunpack.c.l.b16 %v1623
  %v1727 = vunpack.c.h.b16 %v1623
  %v1728 = vunpack.c.l.b16 %v1624
  %v1729 = vunpack.c.h.b16 %v1624
  %v1730 = vunpack.c.l.b16 %v1625
  %v1731 = vunpack.c.h.b16 %v1625
  %v1732 = vunpack.c.l.b16 %v1626
  %v1733 = vunpack.c.h.b16 %v1626
  %v1734 = vunpack.c.l.b16 %v1627
  %v1735 = vunpack.c.h.b16 %v1627
  %v1736 = vunpack.c.l.b16 %v1628
  %v1737 = vunpack.c.h.b16 %v1628
  %v1738 = vunpack.c.l.b16 %v1629
  %v1739 = vunpack.c.h.b16 %v1629
  %v1740 = vunpack.c.l.b16 %v1630
  %v1741 = vunpack.c.h.b16 %v1630
  %v1742 = vunpack.c.l.b16 %v1631
  %v1743 = vunpack.c.h.b16 %v1631
  %v1744 = vunpack.c.l.b16 %v1632
  %v1745 = vunpack.c.h.b16 %v1632
  %v1746 = vunpack.c.l.b16 %v1633
  %v1747 = vunpack.c.h.b16 %v1633
  %v1748 = vunpack.c.l.b16 %v1634
  %v1749 = vunpack.c.h.b16 %v1634
  %v1750 = vunpack.c.l.b16 %v1635
  %v1751 = vunpack.c.h.b16 %v1635
  %v1752 = vunpack.c.l.b16 %v1636
  %v1753 = vunpack.c.h.b16 %v1636
  %v1754 = vunpack.c.l.b16 %v1637
  %v1755 = vunpack.c.h.b16 %v1637
  %v1756 = vpack.c.b16 %v1696, %v1692
  %v1757 = vpack.c.b16 %v1697, %v1693
  %v1758 = vpack.c.b16 %v1698, %v1694
  %v1759 = vpack.c.b16 %v1699, %v1695
  %v1760 = vpack.c.b16 %v1704, %v1700
  %v1761 = vpack.c.b16 %v1705, %v1701
  %v1762 = vpack.c.b16 %v1706, %v1702
  %v1763 = vpack.c.b16 %v1707, %v1703
  %v1764 = vpack.c.b16 %v1712, %v1708
  %v1765 = vpack.c.b16 %v1713, %v1709
  %v1766 = vpack.c.b16 %v1714, %v1710
  %v1767 = vpack.c.b16 %v1715, %v1711
  %v1768 = vpack.c.b16 %v1720, %v1716
  %v1769 = vpack.c.b16 %v1721, %v1717
  %v1770 = vpack.c.b16 %v1722, %v1718
  %v1771 = vpack.c.b16 %v1723, %v1719
  %v1772 = vpack.c.b16 %v1728, %v1724
  %v1773 = vpack.c.b16 %v1729, %v1725
  %v1774 = vpack.c.b16 %v1730, %v1726
  %v1775 = vpack.c.b16 %v1731, %v1727
  %v1776 = vpack.c.b16 %v1736, %v1732
  %v1777 = vpack.c.b16 %v1737, %v1733
  %v1778 = vpack.c.b16 %v1738, %v1734
  %v1779 = vpack.c.b16 %v1739, %v1735
  %v1780 = vpack.c.b16 %v1744, %v1740
  %v1781 = vpack.c.b16 %v1745, %v1741
  %v1782 = vpack.c.b16 %v1746, %v1742
  %v1783 = vpack.c.b16 %v1747, %v1743
  %v1784 = vpack.c.b16 %v1752, %v1748
  %v1785 = vpack.c.b16 %v1753, %v1749
  %v1786 = vpack.c.b16 %v1754, %v1750
  %v1787 = vpack.c.b16 %v1755, %v1751
  %1820 = vmatprep.subr.bf16.mxu0 %v1785
  %1821 = vmatpush1.bf16.msra.mxu0 %v1784
  %1822 = vmatprep.subr.bf16.mxu0 %v1781
  %1823 = vmatpush1.bf16.msra.mxu0 %v1780
  %1824 = vmatprep.subr.bf16.mxu0 %v1777
  %1825 = vmatpush1.bf16.msra.mxu0 %v1776
  %1826 = vmatprep.subr.bf16.mxu0 %v1773
  %1827 = vmatpush1.bf16.msra.mxu0 %v1772
  %1828 = vmatprep.subr.bf16.mxu0 %v1769
  %1829 = vmatpush1.bf16.msra.mxu0 %v1768
  %1830 = vmatprep.subr.bf16.mxu0 %v1765
  %1831 = vmatpush1.bf16.msra.mxu0 %v1764
  %1832 = vmatprep.subr.bf16.mxu0 %v1761
  %1833 = vmatpush1.bf16.msra.mxu0 %v1760
  %1834 = vmatprep.subr.bf16.mxu0 %v1757
  %1835 = vmatpush1.bf16.msra.mxu0 %v1756
  %1836 = vmatprep.subr.bf16.mxu0 0
  %1837 = vmatpush2.bf16.msra.mxu0 0
  %1838 = vmatprep.subr.bf16.mxu0 0
  %1839 = vmatpush2.bf16.msra.mxu0 0
  %1840 = vmatprep.subr.bf16.mxu0 0
  %1841 = vmatpush2.bf16.msra.mxu0 0
  %1842 = vmatprep.subr.bf16.mxu0 0
  %1843 = vmatpush2.bf16.msra.mxu0 0
  %1844 = vmatprep.subr.bf16.mxu0 0
  %1845 = vmatpush2.bf16.msra.mxu0 0
  %1846 = vmatprep.subr.bf16.mxu0 0
  %1847 = vmatpush2.bf16.msra.mxu0 0
  %1848 = vmatprep.subr.bf16.mxu0 0
  %1849 = vmatpush2.bf16.msra.mxu0 0
  %1850 = vmatprep.subr.bf16.mxu0 0
  %1851 = vmatpush2.bf16.msra.mxu0 0
  %1852 = vmatprep.mubr.bf16.mxu0 0
  %1853 = vmatmul.mubr.bf16.gmra.mxu0 %v1602
  %v1854 = vpop.f32.mrf.mxu0
  %v1855 = vadd.f32 %v1643, %v1854
  %v1856 = vpop.f32.mrf.mxu0
  %v1857 = vadd.f32 %v1647, %v1856
  %v1858 = vpop.f32.mrf.mxu0
  %v1859 = vadd.f32 %v1643, %v1858
  %v1860 = vpop.f32.mrf.mxu0
  %v1861 = vadd.f32 %v1647, %v1860
  %1862 = vmatprep.mubr.bf16.mxu0 0
  %1863 = vmatmul.mubr.bf16.gmra.mxu0 %v1603
  %v1864 = vpop.f32.mrf.mxu0
  %v1865 = vadd.f32 %v1643, %v1864
  %v1866 = vpop.f32.mrf.mxu0
  %v1867 = vadd.f32 %v1647, %v1866
  %v1868 = vpop.f32.mrf.mxu0
  %v1869 = vadd.f32 %v1643, %v1868
  %v1870 = vpop.f32.mrf.mxu0
  %v1871 = vadd.f32 %v1647, %v1870
  %1872 = vmatprep.mubr.bf16.mxu0 0
  %1873 = vmatmul.mubr.bf16.gmra.mxu0 %v1604
  %v1874 = vpop.f32.mrf.mxu0
  %v1875 = vadd.f32 %v1643, %v1874
  %v1876 = vpop.f32.mrf.mxu0
  %v1877 = vadd.f32 %v1647, %v1876
  %v1878 = vpop.f32.mrf.mxu0
  %v1879 = vadd.f32 %v1643, %v1878
  %v1880 = vpop.f32.mrf.mxu0
  %v1881 = vadd.f32 %v1647, %v1880
  %1882 = vmatprep.mubr.bf16.mxu0 0
  %1883 = vmatmul.mubr.bf16.gmra.mxu0 %v1605
  %v1884 = vpop.f32.mrf.mxu0
  %v1885 = vadd.f32 %v1643, %v1884
  %v1886 = vpop.f32.mrf.mxu0
  %v1887 = vadd.f32 %v1647, %v1886
  %v1888 = vpop.f32.mrf.mxu0
  %v1889 = vadd.f32 %v1643, %v1888
  %v1890 = vpop.f32.mrf.mxu0
  %v1891 = vadd.f32 %v1647, %v1890
  %1892 = vdwg.mxu0
  %1893 = vmatprep.subr.bf16.mxu0 %v1787
  %1894 = vmatpush1.bf16.msra.mxu0 %v1786
  %1895 = vmatprep.subr.bf16.mxu0 %v1783
  %1896 = vmatpush1.bf16.msra.mxu0 %v1782
  %1897 = vmatprep.subr.bf16.mxu0 %v1779
  %1898 = vmatpush1.bf16.msra.mxu0 %v1778
  %1899 = vmatprep.subr.bf16.mxu0 %v1775
  %1900 = vmatpush1.bf16.msra.mxu0 %v1774
  %1901 = vmatprep.subr.bf16.mxu0 %v1771
  %1902 = vmatpush1.bf16.msra.mxu0 %v1770
  %1903 = vmatprep.subr.bf16.mxu0 %v1767
  %1904 = vmatpush1.bf16.msra.mxu0 %v1766
  %1905 = vmatprep.subr.bf16.mxu0 %v1763
  %1906 = vmatpush1.bf16.msra.mxu0 %v1762
  %1907 = vmatprep.subr.bf16.mxu0 %v1759
  %1908 = vmatpush1.bf16.msra.mxu0 %v1758
  %1909 = vmatprep.subr.bf16.mxu0 0
  %1910 = vmatpush2.bf16.msra.mxu0 0
  %1911 = vmatprep.subr.bf16.mxu0 0
  %1912 = vmatpush2.bf16.msra.mxu0 0
  %1913 = vmatprep.subr.bf16.mxu0 0
  %1914 = vmatpush2.bf16.msra.mxu0 0
  %1915 = vmatprep.subr.bf16.mxu0 0
  %1916 = vmatpush2.bf16.msra.mxu0 0
  %1917 = vmatprep.subr.bf16.mxu0 0
  %1918 = vmatpush2.bf16.msra.mxu0 0
  %1919 = vmatprep.subr.bf16.mxu0 0
  %1920 = vmatpush2.bf16.msra.mxu0 0
  %1921 = vmatprep.subr.bf16.mxu0 0
  %1922 = vmatpush2.bf16.msra.mxu0 0
  %1923 = vmatprep.subr.bf16.mxu0 0
  %1924 = vmatpush2.bf16.msra.mxu0 0
  %1925 = vmatprep.mubr.bf16.mxu0 0
  %1926 = vmatmul.mubr.bf16.gmra.mxu0 %v1602
  %v1927 = vpop.f32.mrf.mxu0
  %v1928 = vadd.f32 %v1651, %v1927
  %v1929 = vpop.f32.mrf.mxu0
  %v1930 = vadd.f32 %v1655, %v1929
  %v1931 = vpop.f32.mrf.mxu0
  %v1932 = vadd.f32 %v1651, %v1931
  %v1933 = vpop.f32.mrf.mxu0
  %v1934 = vadd.f32 %v1655, %v1933
  %1935 = vmatprep.mubr.bf16.mxu0 0
  %1936 = vmatmul.mubr.bf16.gmra.mxu0 %v1603
  %v1937 = vpop.f32.mrf.mxu0
  %v1938 = vadd.f32 %v1651, %v1937
  %v1939 = vpop.f32.mrf.mxu0
  %v1940 = vadd.f32 %v1655, %v1939
  %v1941 = vpop.f32.mrf.mxu0
  %v1942 = vadd.f32 %v1651, %v1941
  %v1943 = vpop.f32.mrf.mxu0
  %v1944 = vadd.f32 %v1655, %v1943
  %1945 = vmatprep.mubr.bf16.mxu0 0
  %1946 = vmatmul.mubr.bf16.gmra.mxu0 %v1604
  %v1947 = vpop.f32.mrf.mxu0
  %v1948 = vadd.f32 %v1651, %v1947
  %v1949 = vpop.f32.mrf.mxu0
  %v1950 = vadd.f32 %v1655, %v1949
  %v1951 = vpop.f32.mrf.mxu0
  %v1952 = vadd.f32 %v1651, %v1951
  %v1953 = vpop.f32.mrf.mxu0
  %v1954 = vadd.f32 %v1655, %v1953
  %1955 = vmatprep.mubr.bf16.mxu0 0
  %1956 = vmatmul.mubr.bf16.gmra.mxu0 %v1605
  %v1957 = vpop.f32.mrf.mxu0
  %v1958 = vadd.f32 %v1651, %v1957
  %v1959 = vpop.f32.mrf.mxu0
  %v1960 = vadd.f32 %v1655, %v1959
  %v1961 = vpop.f32.mrf.mxu0
  %v1962 = vadd.f32 %v1651, %v1961
  %v1963 = vpop.f32.mrf.mxu0
  %v1964 = vadd.f32 %v1655, %v1963
  %1965 = vdwg.mxu0
  %1966 = vst [vmem:[#allocation3] sm:$0xff] %v1855
  %1967 = vst [vmem:[#allocation3 + $0x8] sm:$0xff] %v1857
  %1968 = vst [vmem:[#allocation3 + $0x10] sm:$0xff] %v1928
  %1969 = vst [vmem:[#allocation3 + $0x18] sm:$0xff] %v1930
  %1970 = vst [vmem:[#allocation3 + $0x20] sm:$0xff] %v1859
  %1971 = vst [vmem:[#allocation3 + $0x28] sm:$0xff] %v1861
  %1972 = vst [vmem:[#allocation3 + $0x30] sm:$0xff] %v1932
  %1973 = vst [vmem:[#allocation3 + $0x38] sm:$0xff] %v1934
  %1974 = vst [vmem:[#allocation3 + $0x40] sm:$0xff] %v1865
  %1975 = vst [vmem:[#allocation3 + $0x48] sm:$0xff] %v1867
  %1976 = vst [vmem:[#allocation3 + $0x50] sm:$0xff] %v1938
  %1977 = vst [vmem:[#allocation3 + $0x58] sm:$0xff] %v1940
  %1978 = vst [vmem:[#allocation3 + $0x60] sm:$0xff] %v1869
  %1979 = vst [vmem:[#allocation3 + $0x68] sm:$0xff] %v1871
  %1980 = vst [vmem:[#allocation3 + $0x70] sm:$0xff] %v1942
  %1981 = vst [vmem:[#allocation3 + $0x78] sm:$0xff] %v1944
  %1982 = vst [vmem:[#allocation3 + $0x80] sm:$0xff] %v1875
  %1983 = vst [vmem:[#allocation3 + $0x88] sm:$0xff] %v1877
  %1984 = vst [vmem:[#allocation3 + $0x90] sm:$0xff] %v1948
  %1985 = vst [vmem:[#allocation3 + $0x98] sm:$0xff] %v1950
  %1986 = vst [vmem:[#allocation3 + $0xa0] sm:$0xff] %v1879
  %1987 = vst [vmem:[#allocation3 + $0xa8] sm:$0xff] %v1881
  %1988 = vst [vmem:[#allocation3 + $0xb0] sm:$0xff] %v1952
  %1989 = vst [vmem:[#allocation3 + $0xb8] sm:$0xff] %v1954
  %1990 = vst [vmem:[#allocation3 + $0xc0] sm:$0xff] %v1885
  %1991 = vst [vmem:[#allocation3 + $0xc8] sm:$0xff] %v1887
  %1992 = vst [vmem:[#allocation3 + $0xd0] sm:$0xff] %v1958
  %1993 = vst [vmem:[#allocation3 + $0xd8] sm:$0xff] %v1960
  %1994 = vst [vmem:[#allocation3 + $0xe0] sm:$0xff] %v1889
  %1995 = vst [vmem:[#allocation3 + $0xe8] sm:$0xff] %v1891
  %1996 = vst [vmem:[#allocation3 + $0xf0] sm:$0xff] %v1962
  %1997 = vst [vmem:[#allocation3 + $0xf8] sm:$0xff] %v1964
  %v1998 = vld [vmem:[%s5] sm:$0xff]
  %v1999 = vld [vmem:[%s5 + $0x8] sm:$0xff]
  %v2000 = vld [vmem:[%s5 + $0x10] sm:$0xff]
  %v2001 = vld [vmem:[%s5 + $0x18] sm:$0xff]
  %v2002 = vld [vmem:[%s5 + $0x20] sm:$0xff]
  %v2003 = vld [vmem:[%s5 + $0x28] sm:$0xff]
  %v2004 = vld [vmem:[%s5 + $0x30] sm:$0xff]
  %v2005 = vld [vmem:[%s5 + $0x38] sm:$0xff]
  %v2006 = vld [vmem:[%s5 + $0x40] sm:$0xff]
  %v2007 = vld [vmem:[%s5 + $0x48] sm:$0xff]
  %v2008 = vld [vmem:[%s5 + $0x50] sm:$0xff]
  %v2009 = vld [vmem:[%s5 + $0x58] sm:$0xff]
  %v2010 = vld [vmem:[%s5 + $0x60] sm:$0xff]
  %v2011 = vld [vmem:[%s5 + $0x68] sm:$0xff]
  %v2012 = vld [vmem:[%s5 + $0x70] sm:$0xff]
  %v2013 = vld [vmem:[%s5 + $0x78] sm:$0xff]
  %v2014 = vld [vmem:[%s5 + $0x80] sm:$0xff]
  %v2015 = vld [vmem:[%s5 + $0x88] sm:$0xff]
  %v2016 = vld [vmem:[%s5 + $0x90] sm:$0xff]
  %v2017 = vld [vmem:[%s5 + $0x98] sm:$0xff]
  %v2018 = vld [vmem:[%s5 + $0xa0] sm:$0xff]
  %v2019 = vld [vmem:[%s5 + $0xa8] sm:$0xff]
  %v2020 = vld [vmem:[%s5 + $0xb0] sm:$0xff]
  %v2021 = vld [vmem:[%s5 + $0xb8] sm:$0xff]
  %v2022 = vld [vmem:[%s5 + $0xc0] sm:$0xff]
  %v2023 = vld [vmem:[%s5 + $0xc8] sm:$0xff]
  %v2024 = vld [vmem:[%s5 + $0xd0] sm:$0xff]
  %v2025 = vld [vmem:[%s5 + $0xd8] sm:$0xff]
  %v2026 = vld [vmem:[%s5 + $0xe0] sm:$0xff]
  %v2027 = vld [vmem:[%s5 + $0xe8] sm:$0xff]
  %v2028 = vld [vmem:[%s5 + $0xf0] sm:$0xff]
  %v2029 = vld [vmem:[%s5 + $0xf8] sm:$0xff]
  %2030 = vst [vmem:[#allocation4] sm:$0xff] 0.0
  %2031 = vst [vmem:[#allocation5] sm:$0xff] 0.0
  %v2032 = vld [vmem:[#allocation4] sm:$0xff]
  %v2033 = vld [vmem:[#allocation5] sm:$0xff]
  %v2034 = vld [vmem:[%s495] sm:$0xff]
  %v2035 = vld [vmem:[%s495 + $0x8] sm:$0xff]
  %v2036 = vld [vmem:[%s495 + $0x10] sm:$0xff]
  %v2037 = vld [vmem:[%s495 + $0x18] sm:$0xff]
  %v2038 = vpack.c.bf16 %v2032, %v2032
  %v2071 = vunpack.c.l.b16 %v1998
  %v2072 = vunpack.c.h.b16 %v1998
  %v2073 = vunpack.c.l.b16 %v1999
  %v2074 = vunpack.c.h.b16 %v1999
  %v2075 = vunpack.c.l.b16 %v2000
  %v2076 = vunpack.c.h.b16 %v2000
  %v2077 = vunpack.c.l.b16 %v2001
  %v2078 = vunpack.c.h.b16 %v2001
  %v2079 = vunpack.c.l.b16 %v2002
  %v2080 = vunpack.c.h.b16 %v2002
  %v2081 = vunpack.c.l.b16 %v2003
  %v2082 = vunpack.c.h.b16 %v2003
  %v2083 = vunpack.c.l.b16 %v2004
  %v2084 = vunpack.c.h.b16 %v2004
  %v2085 = vunpack.c.l.b16 %v2005
  %v2086 = vunpack.c.h.b16 %v2005
  %v2087 = vunpack.c.l.b16 %v2006
  %v2088 = vunpack.c.h.b16 %v2006
  %v2089 = vunpack.c.l.b16 %v2007
  %v2090 = vunpack.c.h.b16 %v2007
  %v2091 = vunpack.c.l.b16 %v2008
  %v2092 = vunpack.c.h.b16 %v2008
  %v2093 = vunpack.c.l.b16 %v2009
  %v2094 = vunpack.c.h.b16 %v2009
  %v2095 = vunpack.c.l.b16 %v2010
  %v2096 = vunpack.c.h.b16 %v2010
  %v2097 = vunpack.c.l.b16 %v2011
  %v2098 = vunpack.c.h.b16 %v2011
  %v2099 = vunpack.c.l.b16 %v2012
  %v2100 = vunpack.c.h.b16 %v2012
  %v2101 = vunpack.c.l.b16 %v2013
  %v2102 = vunpack.c.h.b16 %v2013
  %v2103 = vunpack.c.l.b16 %v2014
  %v2104 = vunpack.c.h.b16 %v2014
  %v2105 = vunpack.c.l.b16 %v2015
  %v2106 = vunpack.c.h.b16 %v2015
  %v2107 = vunpack.c.l.b16 %v2016
  %v2108 = vunpack.c.h.b16 %v2016
  %v2109 = vunpack.c.l.b16 %v2017
  %v2110 = vunpack.c.h.b16 %v2017
  %v2111 = vunpack.c.l.b16 %v2018
  %v2112 = vunpack.c.h.b16 %v2018
  %v2113 = vunpack.c.l.b16 %v2019
  %v2114 = vunpack.c.h.b16 %v2019
  %v2115 = vunpack.c.l.b16 %v2020
  %v2116 = vunpack.c.h.b16 %v2020
  %v2117 = vunpack.c.l.b16 %v2021
  %v2118 = vunpack.c.h.b16 %v2021
  %v2119 = vunpack.c.l.b16 %v2022
  %v2120 = vunpack.c.h.b16 %v2022
  %v2121 = vunpack.c.l.b16 %v2023
  %v2122 = vunpack.c.h.b16 %v2023
  %v2123 = vunpack.c.l.b16 %v2024
  %v2124 = vunpack.c.h.b16 %v2024
  %v2125 = vunpack.c.l.b16 %v2025
  %v2126 = vunpack.c.h.b16 %v2025
  %v2127 = vunpack.c.l.b16 %v2026
  %v2128 = vunpack.c.h.b16 %v2026
  %v2129 = vunpack.c.l.b16 %v2027
  %v2130 = vunpack.c.h.b16 %v2027
  %v2131 = vunpack.c.l.b16 %v2028
  %v2132 = vunpack.c.h.b16 %v2028
  %v2133 = vunpack.c.l.b16 %v2029
  %v2134 = vunpack.c.h.b16 %v2029
  %v2135 = vpack.c.b16 %v2075, %v2071
  %v2136 = vpack.c.b16 %v2076, %v2072
  %v2137 = vpack.c.b16 %v2077, %v2073
  %v2138 = vpack.c.b16 %v2078, %v2074
  %v2139 = vpack.c.b16 %v2083, %v2079
  %v2140 = vpack.c.b16 %v2084, %v2080
  %v2141 = vpack.c.b16 %v2085, %v2081
  %v2142 = vpack.c.b16 %v2086, %v2082
  %v2143 = vpack.c.b16 %v2091, %v2087
  %v2144 = vpack.c.b16 %v2092, %v2088
  %v2145 = vpack.c.b16 %v2093, %v2089
  %v2146 = vpack.c.b16 %v2094, %v2090
  %v2147 = vpack.c.b16 %v2099, %v2095
  %v2148 = vpack.c.b16 %v2100, %v2096
  %v2149 = vpack.c.b16 %v2101, %v2097
  %v2150 = vpack.c.b16 %v2102, %v2098
  %v2151 = vpack.c.b16 %v2107, %v2103
  %v2152 = vpack.c.b16 %v2108, %v2104
  %v2153 = vpack.c.b16 %v2109, %v2105
  %v2154 = vpack.c.b16 %v2110, %v2106
  %v2155 = vpack.c.b16 %v2115, %v2111
  %v2156 = vpack.c.b16 %v2116, %v2112
  %v2157 = vpack.c.b16 %v2117, %v2113
  %v2158 = vpack.c.b16 %v2118, %v2114
  %v2159 = vpack.c.b16 %v2123, %v2119
  %v2160 = vpack.c.b16 %v2124, %v2120
  %v2161 = vpack.c.b16 %v2125, %v2121
  %v2162 = vpack.c.b16 %v2126, %v2122
  %v2163 = vpack.c.b16 %v2131, %v2127
  %v2164 = vpack.c.b16 %v2132, %v2128
  %v2165 = vpack.c.b16 %v2133, %v2129
  %v2166 = vpack.c.b16 %v2134, %v2130
  %2199 = vmatprep.subr.bf16.mxu0 %v2164
  %2200 = vmatpush1.bf16.msra.mxu0 %v2163
  %2201 = vmatprep.subr.bf16.mxu0 %v2160
  %2202 = vmatpush1.bf16.msra.mxu0 %v2159
  %2203 = vmatprep.subr.bf16.mxu0 %v2156
  %2204 = vmatpush1.bf16.msra.mxu0 %v2155
  %2205 = vmatprep.subr.bf16.mxu0 %v2152
  %2206 = vmatpush1.bf16.msra.mxu0 %v2151
  %2207 = vmatprep.subr.bf16.mxu0 %v2148
  %2208 = vmatpush1.bf16.msra.mxu0 %v2147
  %2209 = vmatprep.subr.bf16.mxu0 %v2144
  %2210 = vmatpush1.bf16.msra.mxu0 %v2143
  %2211 = vmatprep.subr.bf16.mxu0 %v2140
  %2212 = vmatpush1.bf16.msra.mxu0 %v2139
  %2213 = vmatprep.subr.bf16.mxu0 %v2136
  %2214 = vmatpush1.bf16.msra.mxu0 %v2135
  %2215 = vmatprep.subr.bf16.mxu0 0
  %2216 = vmatpush2.bf16.msra.mxu0 0
  %2217 = vmatprep.subr.bf16.mxu0 0
  %2218 = vmatpush2.bf16.msra.mxu0 0
  %2219 = vmatprep.subr.bf16.mxu0 0
  %2220 = vmatpush2.bf16.msra.mxu0 0
  %2221 = vmatprep.subr.bf16.mxu0 0
  %2222 = vmatpush2.bf16.msra.mxu0 0
  %2223 = vmatprep.subr.bf16.mxu0 0
  %2224 = vmatpush2.bf16.msra.mxu0 0
  %2225 = vmatprep.subr.bf16.mxu0 0
  %2226 = vmatpush2.bf16.msra.mxu0 0
  %2227 = vmatprep.subr.bf16.mxu0 0
  %2228 = vmatpush2.bf16.msra.mxu0 0
  %2229 = vmatprep.subr.bf16.mxu0 0
  %2230 = vmatpush2.bf16.msra.mxu0 0
  %2231 = vmatprep.mubr.bf16.mxu0 0
  %2232 = vmatmul.mubr.bf16.gmra.mxu0 %v2038
  %v2233 = vpop.f32.mrf.mxu0
  %v2234 = vadd.f32 0.0, %v2233
  %v2235 = vpop.f32.mrf.mxu0
  %v2236 = vadd.f32 0.0, %v2235
  %v2237 = vpop.f32.mrf.mxu0
  %v2238 = vpop.f32.mrf.mxu0
  %2239 = vdwg.mxu0
  %2240 = vmatprep.subr.bf16.mxu0 %v2166
  %2241 = vmatpush1.bf16.msra.mxu0 %v2165
  %2242 = vmatprep.subr.bf16.mxu0 %v2162
  %2243 = vmatpush1.bf16.msra.mxu0 %v2161
  %2244 = vmatprep.subr.bf16.mxu0 %v2158
  %2245 = vmatpush1.bf16.msra.mxu0 %v2157
  %2246 = vmatprep.subr.bf16.mxu0 %v2154
  %2247 = vmatpush1.bf16.msra.mxu0 %v2153
  %2248 = vmatprep.subr.bf16.mxu0 %v2150
  %2249 = vmatpush1.bf16.msra.mxu0 %v2149
  %2250 = vmatprep.subr.bf16.mxu0 %v2146
  %2251 = vmatpush1.bf16.msra.mxu0 %v2145
  %2252 = vmatprep.subr.bf16.mxu0 %v2142
  %2253 = vmatpush1.bf16.msra.mxu0 %v2141
  %2254 = vmatprep.subr.bf16.mxu0 %v2138
  %2255 = vmatpush1.bf16.msra.mxu0 %v2137
  %2256 = vmatprep.subr.bf16.mxu0 0
  %2257 = vmatpush2.bf16.msra.mxu0 0
  %2258 = vmatprep.subr.bf16.mxu0 0
  %2259 = vmatpush2.bf16.msra.mxu0 0
  %2260 = vmatprep.subr.bf16.mxu0 0
  %2261 = vmatpush2.bf16.msra.mxu0 0
  %2262 = vmatprep.subr.bf16.mxu0 0
  %2263 = vmatpush2.bf16.msra.mxu0 0
  %2264 = vmatprep.subr.bf16.mxu0 0
  %2265 = vmatpush2.bf16.msra.mxu0 0
  %2266 = vmatprep.subr.bf16.mxu0 0
  %2267 = vmatpush2.bf16.msra.mxu0 0
  %2268 = vmatprep.subr.bf16.mxu0 0
  %2269 = vmatpush2.bf16.msra.mxu0 0
  %2270 = vmatprep.subr.bf16.mxu0 0
  %2271 = vmatpush2.bf16.msra.mxu0 0
  %2272 = vmatprep.mubr.bf16.mxu0 0
  %2273 = vmatmul.mubr.bf16.gmra.mxu0 %v2038
  %v2274 = vpop.f32.mrf.mxu0
  %v2275 = vadd.f32 0.0, %v2274
  %v2276 = vpop.f32.mrf.mxu0
  %v2277 = vadd.f32 0.0, %v2276
  %v2278 = vpop.f32.mrf.mxu0
  %v2279 = vpop.f32.mrf.mxu0
  %2280 = vdwg.mxu0
  %v2281 = vadd.f32 %v2034, %v2234
  %v2282 = vadd.f32 %v2035, %v2236
  %v2283 = vadd.f32 %v2036, %v2275
  %v2284 = vadd.f32 %v2037, %v2277
  %v2285 = vmul.f32 %v2281, 0.5
  %v2286 = vtanh.pop %v2285
  %v2287 = vadd.f32 %v2286, 1.0
  %v2288 = vmul.f32 %v2287, 0.5
  %v2289 = vmul.f32 %v2282, 0.5
  %v2290 = vtanh.pop %v2289
  %v2291 = vadd.f32 %v2290, 1.0
  %v2292 = vmul.f32 %v2291, 0.5
  %v2293 = vtanh.pop %v2283
  %v2294 = vmul.f32 %v2284, 0.5
  %v2295 = vtanh.pop %v2294
  %v2296 = vadd.f32 %v2295, 1.0
  %v2297 = vmul.f32 %v2296, 0.5
  %v2298 = vmul.f32 %v2292, %v2033
  %v2299 = vmul.f32 %v2288, %v2293
  %v2300 = vadd.f32 %v2298, %v2299
  %v2301 = vtanh.pop %v2300
  %v2302 = vmul.f32 %v2297, %v2301
  %2303 = vst [vmem:[#allocation4] sm:$0xff] %v2302
  %2304 = vst [vmem:[#allocation5] sm:$0xff] %v2300
  %v2305 = vld [vmem:[#allocation4] sm:$0xff]
  %v2306 = vld [vmem:[#allocation5] sm:$0xff]
  %v2307 = vld [vmem:[%s772] sm:$0xff]
  %v2308 = vld [vmem:[%s772 + $0x8] sm:$0xff]
  %v2309 = vld [vmem:[%s772 + $0x10] sm:$0xff]
  %v2310 = vld [vmem:[%s772 + $0x18] sm:$0xff]
  %v2311 = vpack.c.bf16 %v2305, %v2305
  %2312 = vmatprep.subr.bf16.mxu0 %v2164
  %2313 = vmatpush1.bf16.msra.mxu0 %v2163
  %2314 = vmatprep.subr.bf16.mxu0 %v2160
  %2315 = vmatpush1.bf16.msra.mxu0 %v2159
  %2316 = vmatprep.subr.bf16.mxu0 %v2156
  %2317 = vmatpush1.bf16.msra.mxu0 %v2155
  %2318 = vmatprep.subr.bf16.mxu0 %v2152
  %2319 = vmatpush1.bf16.msra.mxu0 %v2151
  %2320 = vmatprep.subr.bf16.mxu0 %v2148
  %2321 = vmatpush1.bf16.msra.mxu0 %v2147
  %2322 = vmatprep.subr.bf16.mxu0 %v2144
  %2323 = vmatpush1.bf16.msra.mxu0 %v2143
  %2324 = vmatprep.subr.bf16.mxu0 %v2140
  %2325 = vmatpush1.bf16.msra.mxu0 %v2139
  %2326 = vmatprep.subr.bf16.mxu0 %v2136
  %2327 = vmatpush1.bf16.msra.mxu0 %v2135
  %2328 = vmatprep.subr.bf16.mxu0 0
  %2329 = vmatpush2.bf16.msra.mxu0 0
  %2330 = vmatprep.subr.bf16.mxu0 0
  %2331 = vmatpush2.bf16.msra.mxu0 0
  %2332 = vmatprep.subr.bf16.mxu0 0
  %2333 = vmatpush2.bf16.msra.mxu0 0
  %2334 = vmatprep.subr.bf16.mxu0 0
  %2335 = vmatpush2.bf16.msra.mxu0 0
  %2336 = vmatprep.subr.bf16.mxu0 0
  %2337 = vmatpush2.bf16.msra.mxu0 0
  %2338 = vmatprep.subr.bf16.mxu0 0
  %2339 = vmatpush2.bf16.msra.mxu0 0
  %2340 = vmatprep.subr.bf16.mxu0 0
  %2341 = vmatpush2.bf16.msra.mxu0 0
  %2342 = vmatprep.subr.bf16.mxu0 0
  %2343 = vmatpush2.bf16.msra.mxu0 0
  %2344 = vmatprep.mubr.bf16.mxu0 0
  %2345 = vmatmul.mubr.bf16.gmra.mxu0 %v2311
  %v2346 = vpop.f32.mrf.mxu0
  %v2347 = vadd.f32 0.0, %v2346
  %v2348 = vpop.f32.mrf.mxu0
  %v2349 = vadd.f32 0.0, %v2348
  %v2350 = vpop.f32.mrf.mxu0
  %v2351 = vpop.f32.mrf.mxu0
  %2352 = vdwg.mxu0
  %2353 = vmatprep.subr.bf16.mxu0 %v2166
  %2354 = vmatpush1.bf16.msra.mxu0 %v2165
  %2355 = vmatprep.subr.bf16.mxu0 %v2162
  %2356 = vmatpush1.bf16.msra.mxu0 %v2161
  %2357 = vmatprep.subr.bf16.mxu0 %v2158
  %2358 = vmatpush1.bf16.msra.mxu0 %v2157
  %2359 = vmatprep.subr.bf16.mxu0 %v2154
  %2360 = vmatpush1.bf16.msra.mxu0 %v2153
  %2361 = vmatprep.subr.bf16.mxu0 %v2150
  %2362 = vmatpush1.bf16.msra.mxu0 %v2149
  %2363 = vmatprep.subr.bf16.mxu0 %v2146
  %2364 = vmatpush1.bf16.msra.mxu0 %v2145
  %2365 = vmatprep.subr.bf16.mxu0 %v2142
  %2366 = vmatpush1.bf16.msra.mxu0 %v2141
  %2367 = vmatprep.subr.bf16.mxu0 %v2138
  %2368 = vmatpush1.bf16.msra.mxu0 %v2137
  %2369 = vmatprep.subr.bf16.mxu0 0
  %2370 = vmatpush2.bf16.msra.mxu0 0
  %2371 = vmatprep.subr.bf16.mxu0 0
  %2372 = vmatpush2.bf16.msra.mxu0 0
  %2373 = vmatprep.subr.bf16.mxu0 0
  %2374 = vmatpush2.bf16.msra.mxu0 0
  %2375 = vmatprep.subr.bf16.mxu0 0
  %2376 = vmatpush2.bf16.msra.mxu0 0
  %2377 = vmatprep.subr.bf16.mxu0 0
  %2378 = vmatpush2.bf16.msra.mxu0 0
  %2379 = vmatprep.subr.bf16.mxu0 0
  %2380 = vmatpush2.bf16.msra.mxu0 0
  %2381 = vmatprep.subr.bf16.mxu0 0
  %2382 = vmatpush2.bf16.msra.mxu0 0
  %2383 = vmatprep.subr.bf16.mxu0 0
  %2384 = vmatpush2.bf16.msra.mxu0 0
  %2385 = vmatprep.mubr.bf16.mxu0 0
  %2386 = vmatmul.mubr.bf16.gmra.mxu0 %v2311
  %v2387 = vpop.f32.mrf.mxu0
  %v2388 = vadd.f32 0.0, %v2387
  %v2389 = vpop.f32.mrf.mxu0
  %v2390 = vadd.f32 0.0, %v2389
  %v2391 = vpop.f32.mrf.mxu0
  %v2392 = vpop.f32.mrf.mxu0
  %2393 = vdwg.mxu0
  %v2394 = vadd.f32 %v2307, %v2347
  %v2395 = vadd.f32 %v2308, %v2349
  %v2396 = vadd.f32 %v2309, %v2388
  %v2397 = vadd.f32 %v2310, %v2390
  %v2398 = vmul.f32 %v2394, 0.5
  %v2399 = vtanh.pop %v2398
  %v2400 = vadd.f32 %v2399, 1.0
  %v2401 = vmul.f32 %v2400, 0.5
  %v2402 = vmul.f32 %v2395, 0.5
  %v2403 = vtanh.pop %v2402
  %v2404 = vadd.f32 %v2403, 1.0
  %v2405 = vmul.f32 %v2404, 0.5
  %v2406 = vtanh.pop %v2396
  %v2407 = vmul.f32 %v2397, 0.5
  %v2408 = vtanh.pop %v2407
  %v2409 = vadd.f32 %v2408, 1.0
  %v2410 = vmul.f32 %v2409, 0.5
  %v2411 = vmul.f32 %v2405, %v2306
  %v2412 = vmul.f32 %v2401, %v2406
  %v2413 = vadd.f32 %v2411, %v2412
  %v2414 = vtanh.pop %v2413
  %v2415 = vmul.f32 %v2410, %v2414
  %2416 = vst [vmem:[#allocation4] sm:$0xff] %v2415
  %2417 = vst [vmem:[#allocation5] sm:$0xff] %v2413
  %v2418 = vld [vmem:[#allocation4] sm:$0xff]
  %v2419 = vld [vmem:[#allocation5] sm:$0xff]
  %v2420 = vld [vmem:[%s890] sm:$0xff]
  %v2421 = vld [vmem:[%s890 + $0x8] sm:$0xff]
  %v2422 = vld [vmem:[%s890 + $0x10] sm:$0xff]
  %v2423 = vld [vmem:[%s890 + $0x18] sm:$0xff]
  %v2424 = vpack.c.bf16 %v2418, %v2418
  %2425 = vmatprep.subr.bf16.mxu0 %v2164
  %2426 = vmatpush1.bf16.msra.mxu0 %v2163
  %2427 = vmatprep.subr.bf16.mxu0 %v2160
  %2428 = vmatpush1.bf16.msra.mxu0 %v2159
  %2429 = vmatprep.subr.bf16.mxu0 %v2156
  %2430 = vmatpush1.bf16.msra.mxu0 %v2155
  %2431 = vmatprep.subr.bf16.mxu0 %v2152
  %2432 = vmatpush1.bf16.msra.mxu0 %v2151
  %2433 = vmatprep.subr.bf16.mxu0 %v2148
  %2434 = vmatpush1.bf16.msra.mxu0 %v2147
  %2435 = vmatprep.subr.bf16.mxu0 %v2144
  %2436 = vmatpush1.bf16.msra.mxu0 %v2143
  %2437 = vmatprep.subr.bf16.mxu0 %v2140
  %2438 = vmatpush1.bf16.msra.mxu0 %v2139
  %2439 = vmatprep.subr.bf16.mxu0 %v2136
  %2440 = vmatpush1.bf16.msra.mxu0 %v2135
  %2441 = vmatprep.subr.bf16.mxu0 0
  %2442 = vmatpush2.bf16.msra.mxu0 0
  %2443 = vmatprep.subr.bf16.mxu0 0
  %2444 = vmatpush2.bf16.msra.mxu0 0
  %2445 = vmatprep.subr.bf16.mxu0 0
  %2446 = vmatpush2.bf16.msra.mxu0 0
  %2447 = vmatprep.subr.bf16.mxu0 0
  %2448 = vmatpush2.bf16.msra.mxu0 0
  %2449 = vmatprep.subr.bf16.mxu0 0
  %2450 = vmatpush2.bf16.msra.mxu0 0
  %2451 = vmatprep.subr.bf16.mxu0 0
  %2452 = vmatpush2.bf16.msra.mxu0 0
  %2453 = vmatprep.subr.bf16.mxu0 0
  %2454 = vmatpush2.bf16.msra.mxu0 0
  %2455 = vmatprep.subr.bf16.mxu0 0
  %2456 = vmatpush2.bf16.msra.mxu0 0
  %2457 = vmatprep.mubr.bf16.mxu0 0
  %2458 = vmatmul.mubr.bf16.gmra.mxu0 %v2424
  %v2459 = vpop.f32.mrf.mxu0
  %v2460 = vadd.f32 0.0, %v2459
  %v2461 = vpop.f32.mrf.mxu0
  %v2462 = vadd.f32 0.0, %v2461
  %v2463 = vpop.f32.mrf.mxu0
  %v2464 = vpop.f32.mrf.mxu0
  %2465 = vdwg.mxu0
  %2466 = vmatprep.subr.bf16.mxu0 %v2166
  %2467 = vmatpush1.bf16.msra.mxu0 %v2165
  %2468 = vmatprep.subr.bf16.mxu0 %v2162
  %2469 = vmatpush1.bf16.msra.mxu0 %v2161
  %2470 = vmatprep.subr.bf16.mxu0 %v2158
  %2471 = vmatpush1.bf16.msra.mxu0 %v2157
  %2472 = vmatprep.subr.bf16.mxu0 %v2154
  %2473 = vmatpush1.bf16.msra.mxu0 %v2153
  %2474 = vmatprep.subr.bf16.mxu0 %v2150
  %2475 = vmatpush1.bf16.msra.mxu0 %v2149
  %2476 = vmatprep.subr.bf16.mxu0 %v2146
  %2477 = vmatpush1.bf16.msra.mxu0 %v2145
  %2478 = vmatprep.subr.bf16.mxu0 %v2142
  %2479 = vmatpush1.bf16.msra.mxu0 %v2141
  %2480 = vmatprep.subr.bf16.mxu0 %v2138
  %2481 = vmatpush1.bf16.msra.mxu0 %v2137
  %2482 = vmatprep.subr.bf16.mxu0 0
  %2483 = vmatpush2.bf16.msra.mxu0 0
  %2484 = vmatprep.subr.bf16.mxu0 0
  %2485 = vmatpush2.bf16.msra.mxu0 0
  %2486 = vmatprep.subr.bf16.mxu0 0
  %2487 = vmatpush2.bf16.msra.mxu0 0
  %2488 = vmatprep.subr.bf16.mxu0 0
  %2489 = vmatpush2.bf16.msra.mxu0 0
  %2490 = vmatprep.subr.bf16.mxu0 0
  %2491 = vmatpush2.bf16.msra.mxu0 0
  %2492 = vmatprep.subr.bf16.mxu0 0
  %2493 = vmatpush2.bf16.msra.mxu0 0
  %2494 = vmatprep.subr.bf16.mxu0 0
  %2495 = vmatpush2.bf16.msra.mxu0 0
  %2496 = vmatprep.subr.bf16.mxu0 0
  %2497 = vmatpush2.bf16.msra.mxu0 0
  %2498 = vmatprep.mubr.bf16.mxu0 0
  %2499 = vmatmul.mubr.bf16.gmra.mxu0 %v2424
  %v2500 = vpop.f32.mrf.mxu0
  %v2501 = vadd.f32 0.0, %v2500
  %v2502 = vpop.f32.mrf.mxu0
  %v2503 = vadd.f32 0.0, %v2502
  %v2504 = vpop.f32.mrf.mxu0
  %v2505 = vpop.f32.mrf.mxu0
  %2506 = vdwg.mxu0
  %v2507 = vadd.f32 %v2420, %v2460
  %v2508 = vadd.f32 %v2421, %v2462
  %v2509 = vadd.f32 %v2422, %v2501
  %v2510 = vadd.f32 %v2423, %v2503
  %v2511 = vmul.f32 %v2507, 0.5
  %v2512 = vtanh.pop %v2511
  %v2513 = vadd.f32 %v2512, 1.0
  %v2514 = vmul.f32 %v2513, 0.5
  %v2515 = vmul.f32 %v2508, 0.5
  %v2516 = vtanh.pop %v2515
  %v2517 = vadd.f32 %v2516, 1.0
  %v2518 = vmul.f32 %v2517, 0.5
  %v2519 = vtanh.pop %v2509
  %v2520 = vmul.f32 %v2510, 0.5
  %v2521 = vtanh.pop %v2520
  %v2522 = vadd.f32 %v2521, 1.0
  %v2523 = vmul.f32 %v2522, 0.5
  %v2524 = vmul.f32 %v2518, %v2419
  %v2525 = vmul.f32 %v2514, %v2519
  %v2526 = vadd.f32 %v2524, %v2525
  %v2527 = vtanh.pop %v2526
  %v2528 = vmul.f32 %v2523, %v2527
  %2529 = vst [vmem:[#allocation4] sm:$0xff] %v2528
  %2530 = vst [vmem:[#allocation5] sm:$0xff] %v2526
  %v2531 = vld [vmem:[#allocation4] sm:$0xff]
  %v2532 = vld [vmem:[#allocation5] sm:$0xff]
  %v2533 = vld [vmem:[%s1008] sm:$0xff]
  %v2534 = vld [vmem:[%s1008 + $0x8] sm:$0xff]
  %v2535 = vld [vmem:[%s1008 + $0x10] sm:$0xff]
  %v2536 = vld [vmem:[%s1008 + $0x18] sm:$0xff]
  %v2537 = vpack.c.bf16 %v2531, %v2531
  %2538 = vmatprep.subr.bf16.mxu0 %v2164
  %2539 = vmatpush1.bf16.msra.mxu0 %v2163
  %2540 = vmatprep.subr.bf16.mxu0 %v2160
  %2541 = vmatpush1.bf16.msra.mxu0 %v2159
  %2542 = vmatprep.subr.bf16.mxu0 %v2156
  %2543 = vmatpush1.bf16.msra.mxu0 %v2155
  %2544 = vmatprep.subr.bf16.mxu0 %v2152
  %2545 = vmatpush1.bf16.msra.mxu0 %v2151
  %2546 = vmatprep.subr.bf16.mxu0 %v2148
  %2547 = vmatpush1.bf16.msra.mxu0 %v2147
  %2548 = vmatprep.subr.bf16.mxu0 %v2144
  %2549 = vmatpush1.bf16.msra.mxu0 %v2143
  %2550 = vmatprep.subr.bf16.mxu0 %v2140
  %2551 = vmatpush1.bf16.msra.mxu0 %v2139
  %2552 = vmatprep.subr.bf16.mxu0 %v2136
  %2553 = vmatpush1.bf16.msra.mxu0 %v2135
  %2554 = vmatprep.subr.bf16.mxu0 0
  %2555 = vmatpush2.bf16.msra.mxu0 0
  %2556 = vmatprep.subr.bf16.mxu0 0
  %2557 = vmatpush2.bf16.msra.mxu0 0
  %2558 = vmatprep.subr.bf16.mxu0 0
  %2559 = vmatpush2.bf16.msra.mxu0 0
  %2560 = vmatprep.subr.bf16.mxu0 0
  %2561 = vmatpush2.bf16.msra.mxu0 0
  %2562 = vmatprep.subr.bf16.mxu0 0
  %2563 = vmatpush2.bf16.msra.mxu0 0
  %2564 = vmatprep.subr.bf16.mxu0 0
  %2565 = vmatpush2.bf16.msra.mxu0 0
  %2566 = vmatprep.subr.bf16.mxu0 0
  %2567 = vmatpush2.bf16.msra.mxu0 0
  %2568 = vmatprep.subr.bf16.mxu0 0
  %2569 = vmatpush2.bf16.msra.mxu0 0
  %2570 = vmatprep.mubr.bf16.mxu0 0
  %2571 = vmatmul.mubr.bf16.gmra.mxu0 %v2537
  %v2572 = vpop.f32.mrf.mxu0
  %v2573 = vadd.f32 0.0, %v2572
  %v2574 = vpop.f32.mrf.mxu0
  %v2575 = vadd.f32 0.0, %v2574
  %v2576 = vpop.f32.mrf.mxu0
  %v2577 = vpop.f32.mrf.mxu0
  %2578 = vdwg.mxu0
  %2579 = vmatprep.subr.bf16.mxu0 %v2166
  %2580 = vmatpush1.bf16.msra.mxu0 %v2165
  %2581 = vmatprep.subr.bf16.mxu0 %v2162
  %2582 = vmatpush1.bf16.msra.mxu0 %v2161
  %2583 = vmatprep.subr.bf16.mxu0 %v2158
  %2584 = vmatpush1.bf16.msra.mxu0 %v2157
  %2585 = vmatprep.subr.bf16.mxu0 %v2154
  %2586 = vmatpush1.bf16.msra.mxu0 %v2153
  %2587 = vmatprep.subr.bf16.mxu0 %v2150
  %2588 = vmatpush1.bf16.msra.mxu0 %v2149
  %2589 = vmatprep.subr.bf16.mxu0 %v2146
  %2590 = vmatpush1.bf16.msra.mxu0 %v2145
  %2591 = vmatprep.subr.bf16.mxu0 %v2142
  %2592 = vmatpush1.bf16.msra.mxu0 %v2141
  %2593 = vmatprep.subr.bf16.mxu0 %v2138
  %2594 = vmatpush1.bf16.msra.mxu0 %v2137
  %2595 = vmatprep.subr.bf16.mxu0 0
  %2596 = vmatpush2.bf16.msra.mxu0 0
  %2597 = vmatprep.subr.bf16.mxu0 0
  %2598 = vmatpush2.bf16.msra.mxu0 0
  %2599 = vmatprep.subr.bf16.mxu0 0
  %2600 = vmatpush2.bf16.msra.mxu0 0
  %2601 = vmatprep.subr.bf16.mxu0 0
  %2602 = vmatpush2.bf16.msra.mxu0 0
  %2603 = vmatprep.subr.bf16.mxu0 0
  %2604 = vmatpush2.bf16.msra.mxu0 0
  %2605 = vmatprep.subr.bf16.mxu0 0
  %2606 = vmatpush2.bf16.msra.mxu0 0
  %2607 = vmatprep.subr.bf16.mxu0 0
  %2608 = vmatpush2.bf16.msra.mxu0 0
  %2609 = vmatprep.subr.bf16.mxu0 0
  %2610 = vmatpush2.bf16.msra.mxu0 0
  %2611 = vmatprep.mubr.bf16.mxu0 0
  %2612 = vmatmul.mubr.bf16.gmra.mxu0 %v2537
  %v2613 = vpop.f32.mrf.mxu0
  %v2614 = vadd.f32 0.0, %v2613
  %v2615 = vpop.f32.mrf.mxu0
  %v2616 = vadd.f32 0.0, %v2615
  %v2617 = vpop.f32.mrf.mxu0
  %v2618 = vpop.f32.mrf.mxu0
  %2619 = vdwg.mxu0
  %v2620 = vadd.f32 %v2533, %v2573
  %v2621 = vadd.f32 %v2534, %v2575
  %v2622 = vadd.f32 %v2535, %v2614
  %v2623 = vadd.f32 %v2536, %v2616
  %v2624 = vmul.f32 %v2620, 0.5
  %v2625 = vtanh.pop %v2624
  %v2626 = vadd.f32 %v2625, 1.0
  %v2627 = vmul.f32 %v2626, 0.5
  %v2628 = vmul.f32 %v2621, 0.5
  %v2629 = vtanh.pop %v2628
  %v2630 = vadd.f32 %v2629, 1.0
  %v2631 = vmul.f32 %v2630, 0.5
  %v2632 = vtanh.pop %v2622
  %v2633 = vmul.f32 %v2623, 0.5
  %v2634 = vtanh.pop %v2633
  %v2635 = vadd.f32 %v2634, 1.0
  %v2636 = vmul.f32 %v2635, 0.5
  %v2637 = vmul.f32 %v2631, %v2532
  %v2638 = vmul.f32 %v2627, %v2632
  %v2639 = vadd.f32 %v2637, %v2638
  %v2640 = vtanh.pop %v2639
  %v2641 = vmul.f32 %v2636, %v2640
  %2642 = vst [vmem:[#allocation4] sm:$0xff] %v2641
  %2643 = vst [vmem:[#allocation5] sm:$0xff] %v2639
  %v2644 = vld [vmem:[#allocation4] sm:$0xff]
  %v2645 = vld [vmem:[#allocation5] sm:$0xff]
  %v2646 = vld [vmem:[%s1126] sm:$0xff]
  %v2647 = vld [vmem:[%s1126 + $0x8] sm:$0xff]
  %v2648 = vld [vmem:[%s1126 + $0x10] sm:$0xff]
  %v2649 = vld [vmem:[%s1126 + $0x18] sm:$0xff]
  %v2650 = vpack.c.bf16 %v2644, %v2644
  %2651 = vmatprep.subr.bf16.mxu0 %v2164
  %2652 = vmatpush1.bf16.msra.mxu0 %v2163
  %2653 = vmatprep.subr.bf16.mxu0 %v2160
  %2654 = vmatpush1.bf16.msra.mxu0 %v2159
  %2655 = vmatprep.subr.bf16.mxu0 %v2156
  %2656 = vmatpush1.bf16.msra.mxu0 %v2155
  %2657 = vmatprep.subr.bf16.mxu0 %v2152
  %2658 = vmatpush1.bf16.msra.mxu0 %v2151
  %2659 = vmatprep.subr.bf16.mxu0 %v2148
  %2660 = vmatpush1.bf16.msra.mxu0 %v2147
  %2661 = vmatprep.subr.bf16.mxu0 %v2144
  %2662 = vmatpush1.bf16.msra.mxu0 %v2143
  %2663 = vmatprep.subr.bf16.mxu0 %v2140
  %2664 = vmatpush1.bf16.msra.mxu0 %v2139
  %2665 = vmatprep.subr.bf16.mxu0 %v2136
  %2666 = vmatpush1.bf16.msra.mxu0 %v2135
  %2667 = vmatprep.subr.bf16.mxu0 0
  %2668 = vmatpush2.bf16.msra.mxu0 0
  %2669 = vmatprep.subr.bf16.mxu0 0
  %2670 = vmatpush2.bf16.msra.mxu0 0
  %2671 = vmatprep.subr.bf16.mxu0 0
  %2672 = vmatpush2.bf16.msra.mxu0 0
  %2673 = vmatprep.subr.bf16.mxu0 0
  %2674 = vmatpush2.bf16.msra.mxu0 0
  %2675 = vmatprep.subr.bf16.mxu0 0
  %2676 = vmatpush2.bf16.msra.mxu0 0
  %2677 = vmatprep.subr.bf16.mxu0 0
  %2678 = vmatpush2.bf16.msra.mxu0 0
  %2679 = vmatprep.subr.bf16.mxu0 0
  %2680 = vmatpush2.bf16.msra.mxu0 0
  %2681 = vmatprep.subr.bf16.mxu0 0
  %2682 = vmatpush2.bf16.msra.mxu0 0
  %2683 = vmatprep.mubr.bf16.mxu0 0
  %2684 = vmatmul.mubr.bf16.gmra.mxu0 %v2650
  %v2685 = vpop.f32.mrf.mxu0
  %v2686 = vadd.f32 0.0, %v2685
  %v2687 = vpop.f32.mrf.mxu0
  %v2688 = vadd.f32 0.0, %v2687
  %v2689 = vpop.f32.mrf.mxu0
  %v2690 = vpop.f32.mrf.mxu0
  %2691 = vdwg.mxu0
  %2692 = vmatprep.subr.bf16.mxu0 %v2166
  %2693 = vmatpush1.bf16.msra.mxu0 %v2165
  %2694 = vmatprep.subr.bf16.mxu0 %v2162
  %2695 = vmatpush1.bf16.msra.mxu0 %v2161
  %2696 = vmatprep.subr.bf16.mxu0 %v2158
  %2697 = vmatpush1.bf16.msra.mxu0 %v2157
  %2698 = vmatprep.subr.bf16.mxu0 %v2154
  %2699 = vmatpush1.bf16.msra.mxu0 %v2153
  %2700 = vmatprep.subr.bf16.mxu0 %v2150
  %2701 = vmatpush1.bf16.msra.mxu0 %v2149
  %2702 = vmatprep.subr.bf16.mxu0 %v2146
  %2703 = vmatpush1.bf16.msra.mxu0 %v2145
  %2704 = vmatprep.subr.bf16.mxu0 %v2142
  %2705 = vmatpush1.bf16.msra.mxu0 %v2141
  %2706 = vmatprep.subr.bf16.mxu0 %v2138
  %2707 = vmatpush1.bf16.msra.mxu0 %v2137
  %2708 = vmatprep.subr.bf16.mxu0 0
  %2709 = vmatpush2.bf16.msra.mxu0 0
  %2710 = vmatprep.subr.bf16.mxu0 0
  %2711 = vmatpush2.bf16.msra.mxu0 0
  %2712 = vmatprep.subr.bf16.mxu0 0
  %2713 = vmatpush2.bf16.msra.mxu0 0
  %2714 = vmatprep.subr.bf16.mxu0 0
  %2715 = vmatpush2.bf16.msra.mxu0 0
  %2716 = vmatprep.subr.bf16.mxu0 0
  %2717 = vmatpush2.bf16.msra.mxu0 0
  %2718 = vmatprep.subr.bf16.mxu0 0
  %2719 = vmatpush2.bf16.msra.mxu0 0
  %2720 = vmatprep.subr.bf16.mxu0 0
  %2721 = vmatpush2.bf16.msra.mxu0 0
  %2722 = vmatprep.subr.bf16.mxu0 0
  %2723 = vmatpush2.bf16.msra.mxu0 0
  %2724 = vmatprep.mubr.bf16.mxu0 0
  %2725 = vmatmul.mubr.bf16.gmra.mxu0 %v2650
  %v2726 = vpop.f32.mrf.mxu0
  %v2727 = vadd.f32 0.0, %v2726
  %v2728 = vpop.f32.mrf.mxu0
  %v2729 = vadd.f32 0.0, %v2728
  %v2730 = vpop.f32.mrf.mxu0
  %v2731 = vpop.f32.mrf.mxu0
  %2732 = vdwg.mxu0
  %v2733 = vadd.f32 %v2646, %v2686
  %v2734 = vadd.f32 %v2647, %v2688
  %v2735 = vadd.f32 %v2648, %v2727
  %v2736 = vadd.f32 %v2649, %v2729
  %v2737 = vmul.f32 %v2733, 0.5
  %v2738 = vtanh.pop %v2737
  %v2739 = vadd.f32 %v2738, 1.0
  %v2740 = vmul.f32 %v2739, 0.5
  %v2741 = vmul.f32 %v2734, 0.5
  %v2742 = vtanh.pop %v2741
  %v2743 = vadd.f32 %v2742, 1.0
  %v2744 = vmul.f32 %v2743, 0.5
  %v2745 = vtanh.pop %v2735
  %v2746 = vmul.f32 %v2736, 0.5
  %v2747 = vtanh.pop %v2746
  %v2748 = vadd.f32 %v2747, 1.0
  %v2749 = vmul.f32 %v2748, 0.5
  %v2750 = vmul.f32 %v2744, %v2645
  %v2751 = vmul.f32 %v2740, %v2745
  %v2752 = vadd.f32 %v2750, %v2751
  %v2753 = vtanh.pop %v2752
  %v2754 = vmul.f32 %v2749, %v2753
  %2755 = vst [vmem:[#allocation4] sm:$0xff] %v2754
  %2756 = vst [vmem:[#allocation5] sm:$0xff] %v2752
  %v2757 = vld [vmem:[#allocation4] sm:$0xff]
  %v2758 = vld [vmem:[#allocation5] sm:$0xff]
  %v2759 = vld [vmem:[%s1244] sm:$0xff]
  %v2760 = vld [vmem:[%s1244 + $0x8] sm:$0xff]
  %v2761 = vld [vmem:[%s1244 + $0x10] sm:$0xff]
  %v2762 = vld [vmem:[%s1244 + $0x18] sm:$0xff]
  %v2763 = vpack.c.bf16 %v2757, %v2757
  %2764 = vmatprep.subr.bf16.mxu0 %v2164
  %2765 = vmatpush1.bf16.msra.mxu0 %v2163
  %2766 = vmatprep.subr.bf16.mxu0 %v2160
  %2767 = vmatpush1.bf16.msra.mxu0 %v2159
  %2768 = vmatprep.subr.bf16.mxu0 %v2156
  %2769 = vmatpush1.bf16.msra.mxu0 %v2155
  %2770 = vmatprep.subr.bf16.mxu0 %v2152
  %2771 = vmatpush1.bf16.msra.mxu0 %v2151
  %2772 = vmatprep.subr.bf16.mxu0 %v2148
  %2773 = vmatpush1.bf16.msra.mxu0 %v2147
  %2774 = vmatprep.subr.bf16.mxu0 %v2144
  %2775 = vmatpush1.bf16.msra.mxu0 %v2143
  %2776 = vmatprep.subr.bf16.mxu0 %v2140
  %2777 = vmatpush1.bf16.msra.mxu0 %v2139
  %2778 = vmatprep.subr.bf16.mxu0 %v2136
  %2779 = vmatpush1.bf16.msra.mxu0 %v2135
  %2780 = vmatprep.subr.bf16.mxu0 0
  %2781 = vmatpush2.bf16.msra.mxu0 0
  %2782 = vmatprep.subr.bf16.mxu0 0
  %2783 = vmatpush2.bf16.msra.mxu0 0
  %2784 = vmatprep.subr.bf16.mxu0 0
  %2785 = vmatpush2.bf16.msra.mxu0 0
  %2786 = vmatprep.subr.bf16.mxu0 0
  %2787 = vmatpush2.bf16.msra.mxu0 0
  %2788 = vmatprep.subr.bf16.mxu0 0
  %2789 = vmatpush2.bf16.msra.mxu0 0
  %2790 = vmatprep.subr.bf16.mxu0 0
  %2791 = vmatpush2.bf16.msra.mxu0 0
  %2792 = vmatprep.subr.bf16.mxu0 0
  %2793 = vmatpush2.bf16.msra.mxu0 0
  %2794 = vmatprep.subr.bf16.mxu0 0
  %2795 = vmatpush2.bf16.msra.mxu0 0
  %2796 = vmatprep.mubr.bf16.mxu0 0
  %2797 = vmatmul.mubr.bf16.gmra.mxu0 %v2763
  %v2798 = vpop.f32.mrf.mxu0
  %v2799 = vadd.f32 0.0, %v2798
  %v2800 = vpop.f32.mrf.mxu0
  %v2801 = vadd.f32 0.0, %v2800
  %v2802 = vpop.f32.mrf.mxu0
  %v2803 = vpop.f32.mrf.mxu0
  %2804 = vdwg.mxu0
  %2805 = vmatprep.subr.bf16.mxu0 %v2166
  %2806 = vmatpush1.bf16.msra.mxu0 %v2165
  %2807 = vmatprep.subr.bf16.mxu0 %v2162
  %2808 = vmatpush1.bf16.msra.mxu0 %v2161
  %2809 = vmatprep.subr.bf16.mxu0 %v2158
  %2810 = vmatpush1.bf16.msra.mxu0 %v2157
  %2811 = vmatprep.subr.bf16.mxu0 %v2154
  %2812 = vmatpush1.bf16.msra.mxu0 %v2153
  %2813 = vmatprep.subr.bf16.mxu0 %v2150
  %2814 = vmatpush1.bf16.msra.mxu0 %v2149
  %2815 = vmatprep.subr.bf16.mxu0 %v2146
  %2816 = vmatpush1.bf16.msra.mxu0 %v2145
  %2817 = vmatprep.subr.bf16.mxu0 %v2142
  %2818 = vmatpush1.bf16.msra.mxu0 %v2141
  %2819 = vmatprep.subr.bf16.mxu0 %v2138
  %2820 = vmatpush1.bf16.msra.mxu0 %v2137
  %2821 = vmatprep.subr.bf16.mxu0 0
  %2822 = vmatpush2.bf16.msra.mxu0 0
  %2823 = vmatprep.subr.bf16.mxu0 0
  %2824 = vmatpush2.bf16.msra.mxu0 0
  %2825 = vmatprep.subr.bf16.mxu0 0
  %2826 = vmatpush2.bf16.msra.mxu0 0
  %2827 = vmatprep.subr.bf16.mxu0 0
  %2828 = vmatpush2.bf16.msra.mxu0 0
  %2829 = vmatprep.subr.bf16.mxu0 0
  %2830 = vmatpush2.bf16.msra.mxu0 0
  %2831 = vmatprep.subr.bf16.mxu0 0
  %2832 = vmatpush2.bf16.msra.mxu0 0
  %2833 = vmatprep.subr.bf16.mxu0 0
  %2834 = vmatpush2.bf16.msra.mxu0 0
  %2835 = vmatprep.subr.bf16.mxu0 0
  %2836 = vmatpush2.bf16.msra.mxu0 0
  %2837 = vmatprep.mubr.bf16.mxu0 0
  %2838 = vmatmul.mubr.bf16.gmra.mxu0 %v2763
  %v2839 = vpop.f32.mrf.mxu0
  %v2840 = vadd.f32 0.0, %v2839
  %v2841 = vpop.f32.mrf.mxu0
  %v2842 = vadd.f32 0.0, %v2841
  %v2843 = vpop.f32.mrf.mxu0
  %v2844 = vpop.f32.mrf.mxu0
  %2845 = vdwg.mxu0
  %v2846 = vadd.f32 %v2759, %v2799
  %v2847 = vadd.f32 %v2760, %v2801
  %v2848 = vadd.f32 %v2761, %v2840
  %v2849 = vadd.f32 %v2762, %v2842
  %v2850 = vmul.f32 %v2846, 0.5
  %v2851 = vtanh.pop %v2850
  %v2852 = vadd.f32 %v2851, 1.0
  %v2853 = vmul.f32 %v2852, 0.5
  %v2854 = vmul.f32 %v2847, 0.5
  %v2855 = vtanh.pop %v2854
  %v2856 = vadd.f32 %v2855, 1.0
  %v2857 = vmul.f32 %v2856, 0.5
  %v2858 = vtanh.pop %v2848
  %v2859 = vmul.f32 %v2849, 0.5
  %v2860 = vtanh.pop %v2859
  %v2861 = vadd.f32 %v2860, 1.0
  %v2862 = vmul.f32 %v2861, 0.5
  %v2863 = vmul.f32 %v2857, %v2758
  %v2864 = vmul.f32 %v2853, %v2858
  %v2865 = vadd.f32 %v2863, %v2864
  %v2866 = vtanh.pop %v2865
  %v2867 = vmul.f32 %v2862, %v2866
  %2868 = vst [vmem:[#allocation4] sm:$0xff] %v2867
  %2869 = vst [vmem:[#allocation5] sm:$0xff] %v2865
  %v2870 = vld [vmem:[#allocation4] sm:$0xff]
  %v2871 = vld [vmem:[#allocation5] sm:$0xff]
  %v2872 = vld [vmem:[%s1362] sm:$0xff]
  %v2873 = vld [vmem:[%s1362 + $0x8] sm:$0xff]
  %v2874 = vld [vmem:[%s1362 + $0x10] sm:$0xff]
  %v2875 = vld [vmem:[%s1362 + $0x18] sm:$0xff]
  %v2876 = vpack.c.bf16 %v2870, %v2870
  %2877 = vmatprep.subr.bf16.mxu0 %v2164
  %2878 = vmatpush1.bf16.msra.mxu0 %v2163
  %2879 = vmatprep.subr.bf16.mxu0 %v2160
  %2880 = vmatpush1.bf16.msra.mxu0 %v2159
  %2881 = vmatprep.subr.bf16.mxu0 %v2156
  %2882 = vmatpush1.bf16.msra.mxu0 %v2155
  %2883 = vmatprep.subr.bf16.mxu0 %v2152
  %2884 = vmatpush1.bf16.msra.mxu0 %v2151
  %2885 = vmatprep.subr.bf16.mxu0 %v2148
  %2886 = vmatpush1.bf16.msra.mxu0 %v2147
  %2887 = vmatprep.subr.bf16.mxu0 %v2144
  %2888 = vmatpush1.bf16.msra.mxu0 %v2143
  %2889 = vmatprep.subr.bf16.mxu0 %v2140
  %2890 = vmatpush1.bf16.msra.mxu0 %v2139
  %2891 = vmatprep.subr.bf16.mxu0 %v2136
  %2892 = vmatpush1.bf16.msra.mxu0 %v2135
  %2893 = vmatprep.subr.bf16.mxu0 0
  %2894 = vmatpush2.bf16.msra.mxu0 0
  %2895 = vmatprep.subr.bf16.mxu0 0
  %2896 = vmatpush2.bf16.msra.mxu0 0
  %2897 = vmatprep.subr.bf16.mxu0 0
  %2898 = vmatpush2.bf16.msra.mxu0 0
  %2899 = vmatprep.subr.bf16.mxu0 0
  %2900 = vmatpush2.bf16.msra.mxu0 0
  %2901 = vmatprep.subr.bf16.mxu0 0
  %2902 = vmatpush2.bf16.msra.mxu0 0
  %2903 = vmatprep.subr.bf16.mxu0 0
  %2904 = vmatpush2.bf16.msra.mxu0 0
  %2905 = vmatprep.subr.bf16.mxu0 0
  %2906 = vmatpush2.bf16.msra.mxu0 0
  %2907 = vmatprep.subr.bf16.mxu0 0
  %2908 = vmatpush2.bf16.msra.mxu0 0
  %2909 = vmatprep.mubr.bf16.mxu0 0
  %2910 = vmatmul.mubr.bf16.gmra.mxu0 %v2876
  %v2911 = vpop.f32.mrf.mxu0
  %v2912 = vadd.f32 0.0, %v2911
  %v2913 = vpop.f32.mrf.mxu0
  %v2914 = vadd.f32 0.0, %v2913
  %v2915 = vpop.f32.mrf.mxu0
  %v2916 = vpop.f32.mrf.mxu0
  %2917 = vdwg.mxu0
  %2918 = vmatprep.subr.bf16.mxu0 %v2166
  %2919 = vmatpush1.bf16.msra.mxu0 %v2165
  %2920 = vmatprep.subr.bf16.mxu0 %v2162
  %2921 = vmatpush1.bf16.msra.mxu0 %v2161
  %2922 = vmatprep.subr.bf16.mxu0 %v2158
  %2923 = vmatpush1.bf16.msra.mxu0 %v2157
  %2924 = vmatprep.subr.bf16.mxu0 %v2154
  %2925 = vmatpush1.bf16.msra.mxu0 %v2153
  %2926 = vmatprep.subr.bf16.mxu0 %v2150
  %2927 = vmatpush1.bf16.msra.mxu0 %v2149
  %2928 = vmatprep.subr.bf16.mxu0 %v2146
  %2929 = vmatpush1.bf16.msra.mxu0 %v2145
  %2930 = vmatprep.subr.bf16.mxu0 %v2142
  %2931 = vmatpush1.bf16.msra.mxu0 %v2141
  %2932 = vmatprep.subr.bf16.mxu0 %v2138
  %2933 = vmatpush1.bf16.msra.mxu0 %v2137
  %2934 = vmatprep.subr.bf16.mxu0 0
  %2935 = vmatpush2.bf16.msra.mxu0 0
  %2936 = vmatprep.subr.bf16.mxu0 0
  %2937 = vmatpush2.bf16.msra.mxu0 0
  %2938 = vmatprep.subr.bf16.mxu0 0
  %2939 = vmatpush2.bf16.msra.mxu0 0
  %2940 = vmatprep.subr.bf16.mxu0 0
  %2941 = vmatpush2.bf16.msra.mxu0 0
  %2942 = vmatprep.subr.bf16.mxu0 0
  %2943 = vmatpush2.bf16.msra.mxu0 0
  %2944 = vmatprep.subr.bf16.mxu0 0
  %2945 = vmatpush2.bf16.msra.mxu0 0
  %2946 = vmatprep.subr.bf16.mxu0 0
  %2947 = vmatpush2.bf16.msra.mxu0 0
  %2948 = vmatprep.subr.bf16.mxu0 0
  %2949 = vmatpush2.bf16.msra.mxu0 0
  %2950 = vmatprep.mubr.bf16.mxu0 0
  %2951 = vmatmul.mubr.bf16.gmra.mxu0 %v2876
  %v2952 = vpop.f32.mrf.mxu0
  %v2953 = vadd.f32 0.0, %v2952
  %v2954 = vpop.f32.mrf.mxu0
  %v2955 = vadd.f32 0.0, %v2954
  %v2956 = vpop.f32.mrf.mxu0
  %v2957 = vpop.f32.mrf.mxu0
  %2958 = vdwg.mxu0
  %v2959 = vadd.f32 %v2872, %v2912
  %v2960 = vadd.f32 %v2873, %v2914
  %v2961 = vadd.f32 %v2874, %v2953
  %v2962 = vadd.f32 %v2875, %v2955
  %v2963 = vmul.f32 %v2959, 0.5
  %v2964 = vtanh.pop %v2963
  %v2965 = vadd.f32 %v2964, 1.0
  %v2966 = vmul.f32 %v2965, 0.5
  %v2967 = vmul.f32 %v2960, 0.5
  %v2968 = vtanh.pop %v2967
  %v2969 = vadd.f32 %v2968, 1.0
  %v2970 = vmul.f32 %v2969, 0.5
  %v2971 = vtanh.pop %v2961
  %v2972 = vmul.f32 %v2962, 0.5
  %v2973 = vtanh.pop %v2972
  %v2974 = vadd.f32 %v2973, 1.0
  %v2975 = vmul.f32 %v2974, 0.5
  %v2976 = vmul.f32 %v2970, %v2871
  %v2977 = vmul.f32 %v2966, %v2971
  %v2978 = vadd.f32 %v2976, %v2977
  %v2979 = vtanh.pop %v2978
  %v2980 = vmul.f32 %v2975, %v2979
  %2981 = vst [vmem:[#allocation4] sm:$0xff] %v2980
  %2982 = vst [vmem:[#allocation5] sm:$0xff] %v2978
  %v2983 = vld [vmem:[#allocation4] sm:$0xff]
  %v2984 = vld [vmem:[#allocation5] sm:$0xff]
  %v2985 = vld [vmem:[%s1480] sm:$0xff]
  %v2986 = vld [vmem:[%s1480 + $0x8] sm:$0xff]
  %v2987 = vld [vmem:[%s1480 + $0x10] sm:$0xff]
  %v2988 = vld [vmem:[%s1480 + $0x18] sm:$0xff]
  %v2989 = vpack.c.bf16 %v2983, %v2983
  %2990 = vmatprep.subr.bf16.mxu0 %v2164
  %2991 = vmatpush1.bf16.msra.mxu0 %v2163
  %2992 = vmatprep.subr.bf16.mxu0 %v2160
  %2993 = vmatpush1.bf16.msra.mxu0 %v2159
  %2994 = vmatprep.subr.bf16.mxu0 %v2156
  %2995 = vmatpush1.bf16.msra.mxu0 %v2155
  %2996 = vmatprep.subr.bf16.mxu0 %v2152
  %2997 = vmatpush1.bf16.msra.mxu0 %v2151
  %2998 = vmatprep.subr.bf16.mxu0 %v2148
  %2999 = vmatpush1.bf16.msra.mxu0 %v2147
  %3000 = vmatprep.subr.bf16.mxu0 %v2144
  %3001 = vmatpush1.bf16.msra.mxu0 %v2143
  %3002 = vmatprep.subr.bf16.mxu0 %v2140
  %3003 = vmatpush1.bf16.msra.mxu0 %v2139
  %3004 = vmatprep.subr.bf16.mxu0 %v2136
  %3005 = vmatpush1.bf16.msra.mxu0 %v2135
  %3006 = vmatprep.subr.bf16.mxu0 0
  %3007 = vmatpush2.bf16.msra.mxu0 0
  %3008 = vmatprep.subr.bf16.mxu0 0
  %3009 = vmatpush2.bf16.msra.mxu0 0
  %3010 = vmatprep.subr.bf16.mxu0 0
  %3011 = vmatpush2.bf16.msra.mxu0 0
  %3012 = vmatprep.subr.bf16.mxu0 0
  %3013 = vmatpush2.bf16.msra.mxu0 0
  %3014 = vmatprep.subr.bf16.mxu0 0
  %3015 = vmatpush2.bf16.msra.mxu0 0
  %3016 = vmatprep.subr.bf16.mxu0 0
  %3017 = vmatpush2.bf16.msra.mxu0 0
  %3018 = vmatprep.subr.bf16.mxu0 0
  %3019 = vmatpush2.bf16.msra.mxu0 0
  %3020 = vmatprep.subr.bf16.mxu0 0
  %3021 = vmatpush2.bf16.msra.mxu0 0
  %3022 = vmatprep.mubr.bf16.mxu0 0
  %3023 = vmatmul.mubr.bf16.gmra.mxu0 %v2989
  %v3024 = vpop.f32.mrf.mxu0
  %v3025 = vadd.f32 0.0, %v3024
  %v3026 = vpop.f32.mrf.mxu0
  %v3027 = vadd.f32 0.0, %v3026
  %v3028 = vpop.f32.mrf.mxu0
  %v3029 = vpop.f32.mrf.mxu0
  %3030 = vdwg.mxu0
  %3031 = vmatprep.subr.bf16.mxu0 %v2166
  %3032 = vmatpush1.bf16.msra.mxu0 %v2165
  %3033 = vmatprep.subr.bf16.mxu0 %v2162
  %3034 = vmatpush1.bf16.msra.mxu0 %v2161
  %3035 = vmatprep.subr.bf16.mxu0 %v2158
  %3036 = vmatpush1.bf16.msra.mxu0 %v2157
  %3037 = vmatprep.subr.bf16.mxu0 %v2154
  %3038 = vmatpush1.bf16.msra.mxu0 %v2153
  %3039 = vmatprep.subr.bf16.mxu0 %v2150
  %3040 = vmatpush1.bf16.msra.mxu0 %v2149
  %3041 = vmatprep.subr.bf16.mxu0 %v2146
  %3042 = vmatpush1.bf16.msra.mxu0 %v2145
  %3043 = vmatprep.subr.bf16.mxu0 %v2142
  %3044 = vmatpush1.bf16.msra.mxu0 %v2141
  %3045 = vmatprep.subr.bf16.mxu0 %v2138
  %3046 = vmatpush1.bf16.msra.mxu0 %v2137
  %3047 = vmatprep.subr.bf16.mxu0 0
  %3048 = vmatpush2.bf16.msra.mxu0 0
  %3049 = vmatprep.subr.bf16.mxu0 0
  %3050 = vmatpush2.bf16.msra.mxu0 0
  %3051 = vmatprep.subr.bf16.mxu0 0
  %3052 = vmatpush2.bf16.msra.mxu0 0
  %3053 = vmatprep.subr.bf16.mxu0 0
  %3054 = vmatpush2.bf16.msra.mxu0 0
  %3055 = vmatprep.subr.bf16.mxu0 0
  %3056 = vmatpush2.bf16.msra.mxu0 0
  %3057 = vmatprep.subr.bf16.mxu0 0
  %3058 = vmatpush2.bf16.msra.mxu0 0
  %3059 = vmatprep.subr.bf16.mxu0 0
  %3060 = vmatpush2.bf16.msra.mxu0 0
  %3061 = vmatprep.subr.bf16.mxu0 0
  %3062 = vmatpush2.bf16.msra.mxu0 0
  %3063 = vmatprep.mubr.bf16.mxu0 0
  %3064 = vmatmul.mubr.bf16.gmra.mxu0 %v2989
  %v3065 = vpop.f32.mrf.mxu0
  %v3066 = vadd.f32 0.0, %v3065
  %v3067 = vpop.f32.mrf.mxu0
  %v3068 = vadd.f32 0.0, %v3067
  %v3069 = vpop.f32.mrf.mxu0
  %v3070 = vpop.f32.mrf.mxu0
  %3071 = vdwg.mxu0
  %v3072 = vadd.f32 %v2985, %v3025
  %v3073 = vadd.f32 %v2986, %v3027
  %v3074 = vadd.f32 %v2987, %v3066
  %v3075 = vadd.f32 %v2988, %v3068
  %v3076 = vmul.f32 %v3072, 0.5
  %v3077 = vtanh.pop %v3076
  %v3078 = vadd.f32 %v3077, 1.0
  %v3079 = vmul.f32 %v3078, 0.5
  %v3080 = vmul.f32 %v3073, 0.5
  %v3081 = vtanh.pop %v3080
  %v3082 = vadd.f32 %v3081, 1.0
  %v3083 = vmul.f32 %v3082, 0.5
  %v3084 = vtanh.pop %v3074
  %v3085 = vmul.f32 %v3075, 0.5
  %v3086 = vtanh.pop %v3085
  %v3087 = vadd.f32 %v3086, 1.0
  %v3088 = vmul.f32 %v3087, 0.5
  %v3089 = vmul.f32 %v3083, %v2984
  %v3090 = vmul.f32 %v3079, %v3084
  %v3091 = vadd.f32 %v3089, %v3090
  %v3092 = vtanh.pop %v3091
  %v3093 = vmul.f32 %v3088, %v3092
  %3094 = vst [vmem:[#allocation4] sm:$0xff] %v3093
  %3095 = vst [vmem:[#allocation5] sm:$0xff] %v3091
  %v3096 = vld [vmem:[#allocation4] sm:$0xff]
  %v3097 = vpack.c.bf16 %v3096, %v3096
  %v3098 = vld [vmem:[%s7] sm:$0xf]
  %v3099 = vld [vmem:[%s7 + $0x4] sm:$0xf]
  %v3100 = vld [vmem:[%s7 + $0x8] sm:$0xf]
  %v3101 = vld [vmem:[%s7 + $0xc] sm:$0xf]
  %v3102 = vld [vmem:[%s7 + $0x10] sm:$0xf]
  %v3103 = vld [vmem:[%s7 + $0x14] sm:$0xf]
  %v3104 = vld [vmem:[%s7 + $0x18] sm:$0xf]
  %v3105 = vld [vmem:[%s7 + $0x1c] sm:$0xf]
  %v3106 = vld [vmem:[%s7 + $0x20] sm:$0xf]
  %v3107 = vld [vmem:[%s7 + $0x24] sm:$0xf]
  %v3108 = vld [vmem:[%s7 + $0x28] sm:$0xf]
  %v3109 = vld [vmem:[%s7 + $0x2c] sm:$0xf]
  %v3110 = vld [vmem:[%s7 + $0x30] sm:$0xf]
  %v3111 = vld [vmem:[%s7 + $0x34] sm:$0xf]
  %v3112 = vld [vmem:[%s7 + $0x38] sm:$0xf]
  %v3113 = vld [vmem:[%s7 + $0x3c] sm:$0xf]
  %v3114 = vld [vmem:[%s8] sm:$0x1]
  %v3116 = vlaneseq
  %v3117 = vshrl.u32 %v3116, 7
  %v3118 = vsub.s32 0, %v3117
  %v3119 = vrot.slane %v3114, %v3118
  %v3137 = vunpack.c.l.b16 %v3098
  %v3138 = vunpack.c.l.b16 %v3099
  %v3139 = vunpack.c.l.b16 %v3100
  %v3140 = vunpack.c.l.b16 %v3101
  %v3141 = vunpack.c.l.b16 %v3102
  %v3142 = vunpack.c.l.b16 %v3103
  %v3143 = vunpack.c.l.b16 %v3104
  %v3144 = vunpack.c.l.b16 %v3105
  %v3145 = vunpack.c.l.b16 %v3106
  %v3146 = vunpack.c.l.b16 %v3107
  %v3147 = vunpack.c.l.b16 %v3108
  %v3148 = vunpack.c.l.b16 %v3109
  %v3149 = vunpack.c.l.b16 %v3110
  %v3150 = vunpack.c.l.b16 %v3111
  %v3151 = vunpack.c.l.b16 %v3112
  %v3152 = vunpack.c.l.b16 %v3113
  %v3153 = vpack.c.b16 %v3138, %v3137
  %v3154 = vpack.c.b16 %v3140, %v3139
  %v3155 = vpack.c.b16 %v3142, %v3141
  %v3156 = vpack.c.b16 %v3144, %v3143
  %v3157 = vpack.c.b16 %v3146, %v3145
  %v3158 = vpack.c.b16 %v3148, %v3147
  %v3159 = vpack.c.b16 %v3150, %v3149
  %v3160 = vpack.c.b16 %v3152, %v3151
  %3169 = vmatprep.subr.bf16.mxu0 0
  %3170 = vmatpush1.bf16.msra.mxu0 %v3160
  %3171 = vmatprep.subr.bf16.mxu0 0
  %3172 = vmatpush1.bf16.msra.mxu0 %v3159
  %3173 = vmatprep.subr.bf16.mxu0 0
  %3174 = vmatpush1.bf16.msra.mxu0 %v3158
  %3175 = vmatprep.subr.bf16.mxu0 0
  %3176 = vmatpush1.bf16.msra.mxu0 %v3157
  %3177 = vmatprep.subr.bf16.mxu0 0
  %3178 = vmatpush1.bf16.msra.mxu0 %v3156
  %3179 = vmatprep.subr.bf16.mxu0 0
  %3180 = vmatpush1.bf16.msra.mxu0 %v3155
  %3181 = vmatprep.subr.bf16.mxu0 0
  %3182 = vmatpush1.bf16.msra.mxu0 %v3154
  %3183 = vmatprep.subr.bf16.mxu0 0
  %3184 = vmatpush1.bf16.msra.mxu0 %v3153
  %3185 = vmatprep.subr.bf16.mxu0 0
  %3186 = vmatpush2.bf16.msra.mxu0 0
  %3187 = vmatprep.subr.bf16.mxu0 0
  %3188 = vmatpush2.bf16.msra.mxu0 0
  %3189 = vmatprep.subr.bf16.mxu0 0
  %3190 = vmatpush2.bf16.msra.mxu0 0
  %3191 = vmatprep.subr.bf16.mxu0 0
  %3192 = vmatpush2.bf16.msra.mxu0 0
  %3193 = vmatprep.subr.bf16.mxu0 0
  %3194 = vmatpush2.bf16.msra.mxu0 0
  %3195 = vmatprep.subr.bf16.mxu0 0
  %3196 = vmatpush2.bf16.msra.mxu0 0
  %3197 = vmatprep.subr.bf16.mxu0 0
  %3198 = vmatpush2.bf16.msra.mxu0 0
  %3199 = vmatprep.subr.bf16.mxu0 0
  %3200 = vmatpush2.bf16.msra.mxu0 0
  %3201 = vmatprep.mubr.bf16.mxu0 0
  %3202 = vmatmul.mubr.bf16.gmra.mxu0 %v3097
  %v3203 = vpop.f32.mrf.mxu0
  %v3204 = vadd.f32 %v3119, %v3203
  %v3205 = vpop.f32.mrf.mxu0
  %v3206 = vpop.f32.mrf.mxu0
  %v3207 = vpop.f32.mrf.mxu0
  %3208 = vdwg.mxu0
  %3209 = vst [vmem:[%s9] sm:$0xff] %v3204
  // Predicated region
  $region38: #{lstm_forward_pallas.1} parent=0 // pred_check
    _
  $region39: #{lstm_forward_pallas.1} parent=0 // pred_check_branch
    %3211 = sbr.rel (0) target = $region41
  $region40: #{lstm_forward_pallas.1} parent=0 // pred_region
    _
  $region41: #{lstm_forward_pallas.1} parent=0 // pred_fallthru
    _
  // Predicated region
  $region42: #{lstm_forward_pallas.1} parent=0 // pred_check
    _
  $region43: #{lstm_forward_pallas.1} parent=0 // pred_check_branch
    %3213 = sbr.rel (0) target = $region45
  $region44: #{lstm_forward_pallas.1} parent=0 // pred_region
    _
  $region45: #{lstm_forward_pallas.1} parent=0 // pred_fallthru
    _

</llo_original>
